<compile_context>
chip_gen: v7x
topology: tpu7x:2x2x1
jax: 0.10.0
libtpu: 0.0.40
codegen_flags: <defaults>
</compile_context>

<pallas_src>
import functools

import jax
import jax.numpy as jnp
from jax.experimental import pallas as pl
from jax.experimental.pallas import tpu as pltpu


def _expand_norm_kernel(x_ref, w_ref, g_ref, b_ref, o_ref, *, dim, eps, th, w_tokens):
    # x_ref: (th*W, dim)        input tokens for th image-rows
    # w_ref: (4, dim, 4*dim)    per-p1 slabs of the expand weight (resident)
    # g_ref, b_ref: (1, 4*dim)  LayerNorm affine, pre-tiled along p2
    # o_ref: (th, 4, W, 4*dim)  output rows for this row block
    x = x_ref[...]                                            # native dtype -> MXU
    gamma4 = g_ref[...].astype(jnp.float32)                   # (1, 4*dim)
    beta4 = b_ref[...].astype(jnp.float32)                    # (1, 4*dim)
    lane_aligned = (dim % 128 == 0)

    for p1 in range(4):                                       # static unroll
        # (T, dim) @ (dim, 4*dim) on the MXU, f32 accumulation.
        y = jnp.dot(x, w_ref[p1], preferred_element_type=jnp.float32)

        if lane_aligned:
            # dim is lane-aligned: normalize each chunk and store it straight
            # into its lane slice (no (T, 4*dim) concat temporary).
            for p2 in range(4):
                c = y[:, p2 * dim:(p2 + 1) * dim]
                mu = jnp.mean(c, axis=-1, keepdims=True)
                d = c - mu
                var = jnp.mean(d * d, axis=-1, keepdims=True)
                yn = (d * jax.lax.rsqrt(var + eps)
                      * gamma4[:, p2 * dim:(p2 + 1) * dim]
                      + beta4[:, p2 * dim:(p2 + 1) * dim])
                o_ref[:, p1:p1 + 1, :, p2 * dim:(p2 + 1) * dim] = (
                    yn.reshape(th, 1, w_tokens, dim).astype(o_ref.dtype))
        else:
            # dim < 128: build the (T, 4*dim) slab, apply affine once, store
            # one lane-dense block (avoids masked sub-128 stores).
            parts = []
            for p2 in range(4):
                c = y[:, p2 * dim:(p2 + 1) * dim]
                mu = jnp.mean(c, axis=-1, keepdims=True)
                d = c - mu
                var = jnp.mean(d * d, axis=-1, keepdims=True)
                parts.append(d * jax.lax.rsqrt(var + eps))
            yn = jnp.concatenate(parts, axis=-1) * gamma4 + beta4
            o_ref[:, p1:p1 + 1, :, :] = (
                yn.reshape(th, 1, w_tokens, 4 * dim).astype(o_ref.dtype))


def _pick_block_rows(n_rows, w_tokens, dim, in_itemsize, out_itemsize, w_itemsize,
                     block_tokens, vmem_budget_bytes):
    """Largest divisor `th` of n_rows whose estimated VMEM footprint fits the
    budget and whose x-block sublane count (th*W) is layout-aligned for the
    I/O dtype.  Returns (th, estimated_bytes)."""

    def est_bytes(th):
        t = th * w_tokens
        return (2 * t * dim * in_itemsize            # x block   (double buffered)
                + 2 * t * 16 * dim * out_itemsize    # out block (double buffered)
                + 3 * t * 4 * dim * 4                # f32 temporaries (per-p1 live set)
                + 16 * dim * dim * w_itemsize        # resident weight (single buffered)
                + 4 * 8 * 4 * dim * 4)               # gamma/beta (negligible)

    # bf16/fp16 I/O packs 16 sublanes per vreg; f32 packs 8.
    sub = 16 if min(in_itemsize, out_itemsize) < 4 else 8
    aligned = [th for th in range(1, n_rows + 1)
               if n_rows % th == 0
               and ((th * w_tokens) % sub == 0 or th == n_rows)]
    fitting = [th for th in aligned
               if (block_tokens is None or th * w_tokens <= block_tokens)
               and est_bytes(th) <= vmem_budget_bytes]
    if fitting:
        th = max(fitting)
    else:
        # Nothing fits the budget: take the cheapest legal tile; the caller
        # raises vmem_limit_bytes to cover it instead of failing to compile.
        th = min(aligned, key=est_bytes)
    return th, est_bytes(th)


def _resident_spec(shape):
    """Constant-index-map BlockSpec, single-buffered when supported."""
    nd = len(shape)
    index_map = lambda r, _n=nd: (0,) * _n
    try:
        return pl.BlockSpec(shape, index_map, pipeline_mode=pl.Buffered(1))
    except TypeError:  # older BlockSpec signature without pipeline_mode
        return pl.BlockSpec(shape, index_map)


def _vmem_sizes(vmem_limit_bytes, vmem_budget_bytes):
    """Per-generation VMEM limit/budget (v5e/v6e: 128 MiB, v7x: 64 MiB)."""
    if vmem_limit_bytes is None or vmem_budget_bytes is None:
        cap = 64 * 1024 * 1024
        try:
            info = pltpu.get_tpu_info()
            cap = int(getattr(info, "vmem_capacity_bytes", cap))
        except Exception:
            pass
        if vmem_limit_bytes is None:
            # 96 MiB on 128-MiB parts, 48 MiB on v7x's 64 MiB.
            vmem_limit_bytes = min((cap * 3) // 4, 96 * 1024 * 1024)
        if vmem_budget_bytes is None:
            vmem_budget_bytes = (vmem_limit_bytes * 3) // 4
    return int(vmem_limit_bytes), int(vmem_budget_bytes)


def final_patch_expand_x4(x, w_expand, gamma, beta, *, input_resolution,
                          dim, dim_scale=4, eps=1e-5,
                          block_tokens=None,
                          vmem_budget_bytes=None,
                          vmem_limit_bytes=None):
    """
    x:        (B, H*W, dim)
    w_expand: (dim, 16*dim)   -- nn.Linear(dim, 16*dim, bias=False).weight.T
    gamma:    (dim,)          -- LayerNorm weight
    beta:     (dim,)          -- LayerNorm bias
    returns:  (B, (4H)*(4W), dim)
    """
    H, W = input_resolution
    B, L, C = x.shape
    assert L == H * W, "input feature has wrong size"
    assert C == dim
    assert dim_scale == 4

    n_rows = B * H                               # image rows, W tokens each
    x2 = x.reshape(n_rows * W, dim)

    # Weight as 4 per-p1 slabs: (dim, 16*dim) -> (4, dim, 4*dim).
    w4 = w_expand.reshape(dim, 4, 4 * dim).transpose(1, 0, 2)
    # LayerNorm affine pre-tiled along p2 so it is applied once per p1 slab.
    g4 = jnp.tile(gamma.reshape(1, dim), (1, 4))          # (1, 4*dim)
    b4 = jnp.tile(beta.reshape(1, dim), (1, 4))           # (1, 4*dim)

    vmem_limit_bytes, vmem_budget_bytes = _vmem_sizes(vmem_limit_bytes,
                                                      vmem_budget_bytes)

    in_itemsize = jnp.dtype(x.dtype).itemsize
    w_itemsize = jnp.dtype(w_expand.dtype).itemsize
    th, need_bytes = _pick_block_rows(n_rows, W, dim, in_itemsize, in_itemsize,
                                      w_itemsize, block_tokens, vmem_budget_bytes)
    # Guarantee the chosen (possibly fallback-minimal) tile actually compiles.
    vmem_limit_bytes = max(vmem_limit_bytes, need_bytes + (2 << 20))

    grid = (n_rows // th,)

    kernel = functools.partial(_expand_norm_kernel, dim=dim, eps=eps,
                               th=th, w_tokens=W)

    out = pl.pallas_call(
        kernel,
        out_shape=jax.ShapeDtypeStruct((n_rows, 4, W, 4 * dim), x.dtype),
        grid_spec=pltpu.PrefetchScalarGridSpec(
            num_scalar_prefetch=0,
            grid=grid,
            in_specs=[
                pl.BlockSpec((th * W, dim), lambda r: (r, 0)),
                _resident_spec((4, dim, 4 * dim)),
                _resident_spec((1, 4 * dim)),
                _resident_spec((1, 4 * dim)),
            ],
            out_specs=pl.BlockSpec((th, 4, W, 4 * dim),
                                   lambda r: (r, 0, 0, 0)),
        ),
        compiler_params=pltpu.CompilerParams(
            dimension_semantics=("parallel",),
            vmem_limit_bytes=vmem_limit_bytes,
        ),
    )(x2, w4, g4, b4)

    # (B*H, 4, W, 4*dim) -> (B, (4H)*(4W), dim): pure row-major reshape; the
    # flatten order b, h, p1, w, p2, c equals 'b (h p1) (w p2) c'.
    return out.reshape(B, (4 * H) * (4 * W), dim)


def _reference(x, w_expand, gamma, beta, *, input_resolution, dim, eps=1e-5):
    H, W = input_resolution
    B, L, C = x.shape
    y = jnp.einsum("blc,cd->bld", x, w_expand)             # (B, L, 16*dim)
    p = 4
    y = y.reshape(B, H, W, p, p, dim)
    y = jnp.transpose(y, (0, 1, 3, 2, 4, 5)).reshape(B, (H * p) * (W * p), dim)
    mean = jnp.mean(y, axis=-1, keepdims=True)
    var = jnp.mean((y - mean) ** 2, axis=-1, keepdims=True)
    return (y - mean) * jax.lax.rsqrt(var + eps) * gamma + beta


if __name__ == "__main__":
    B = 2
    H = W = 8
    dim = 32
    key = jax.random.PRNGKey(0)
    kx, kw, kg, kb = jax.random.split(key, 4)

    x = jax.random.normal(kx, (B, H * W, dim), dtype=jnp.float32)
    # nn.Linear(dim, 16*dim, bias=False): weight is (16*dim, dim); we store W^T.
    w_expand = (jax.random.normal(kw, (dim, 16 * dim), dtype=jnp.float32)
                * (1.0 / jnp.sqrt(dim)))
    gamma = 1.0 + 0.1 * jax.random.normal(kg, (dim,), dtype=jnp.float32)
    beta = 0.1 * jax.random.normal(kb, (dim,), dtype=jnp.float32)

    out = final_patch_expand_x4(
        x, w_expand, gamma, beta,
        input_resolution=(H, W), dim=dim, dim_scale=4)
    out = jax.block_until_ready(out)

    ref = _reference(x, w_expand, gamma, beta,
                     input_resolution=(H, W), dim=dim)
    assert out.shape == (B, (4 * H) * (4 * W), dim), out.shape
    assert jnp.allclose(out, ref, atol=1e-4, rtol=1e-4), "mismatch vs reference"

    print("KERNEL_OK")
</pallas_src>

<mosaic_0001>
module attributes {stable_mosaic.version = 11 : i64} {
  func.func @_expand_norm_kernel(%arg0: i32, %arg1: memref<128x32xf32, #tpu.memory_space<vmem>>, %arg2: memref<4x32x128xf32, #tpu.memory_space<vmem>>, %arg3: memref<1x128xf32, #tpu.memory_space<vmem>>, %arg4: memref<1x128xf32, #tpu.memory_space<vmem>>, %arg5: memref<16x4x8x128xf32, #tpu.memory_space<vmem>>) attributes {dimension_semantics = [#tpu.dimension_semantics<parallel>], iteration_bounds = array<i64: 1>, scalar_prefetch = 0 : i64, scratch_operands = 0 : i64, tpu.core_type = #tpu.core_type<tc>, window_params = [{transform_indices = @transform_0, window_bounds = array<i64: 128, 32>}, {pipeline_mode = #tpu.pipeline_mode<synchronous>, transform_indices = @transform_1, window_bounds = array<i64: 4, 32, 128>}, {pipeline_mode = #tpu.pipeline_mode<synchronous>, transform_indices = @transform_2, window_bounds = array<i64: 1, 128>}, {pipeline_mode = #tpu.pipeline_mode<synchronous>, transform_indices = @transform_3, window_bounds = array<i64: 1, 128>}, {transform_indices = @transform_4, window_bounds = array<i64: 16, 4, 8, 128>}]} {
    %c0 = arith.constant 0 : index
    %c0_0 = arith.constant 0 : index
    %0 = vector.load %arg1[%c0, %c0_0] : memref<128x32xf32, #tpu.memory_space<vmem>>, vector<128x32xf32>
    %c0_1 = arith.constant 0 : index
    %c0_2 = arith.constant 0 : index
    %1 = vector.load %arg3[%c0_1, %c0_2] : memref<1x128xf32, #tpu.memory_space<vmem>>, vector<1x128xf32>
    %c0_3 = arith.constant 0 : index
    %c0_4 = arith.constant 0 : index
    %2 = vector.load %arg4[%c0_3, %c0_4] : memref<1x128xf32, #tpu.memory_space<vmem>>, vector<1x128xf32>
    %c0_5 = arith.constant 0 : index
    %c0_6 = arith.constant 0 : index
    %c0_7 = arith.constant 0 : index
    %3 = vector.load %arg2[%c0_5, %c0_6, %c0_7] : memref<4x32x128xf32, #tpu.memory_space<vmem>>, vector<1x32x128xf32>
    %4 = vector.shape_cast %3 : vector<1x32x128xf32> to vector<32x128xf32>
    %cst = arith.constant dense<0.000000e+00> : vector<128x128xf32>
    %5 = tpu.matmul %0, %4, %cst {dimension_numbers = #tpu.dot_dimension_numbers<[1], [0], [0], [1], [0, 0, 1, 1], [], []>} : vector<128x32xf32>, vector<32x128xf32>, vector<128x128xf32> -> vector<128x128xf32>
    %6 = vector.extract_strided_slice %5 {offsets = [0, 0], sizes = [128, 32], strides = [1, 1]} : vector<128x128xf32> to vector<128x32xf32>
    %cst_8 = arith.constant dense<0.000000e+00> : vector<128xf32>
    %7 = vector.multi_reduction <add>, %6, %cst_8 [1] : vector<128x32xf32> to vector<128xf32>
    %8 = vector.shape_cast %7 : vector<128xf32> to vector<128x1xf32>
    %cst_9 = arith.constant 3.200000e+01 : f32
    %9 = vector.broadcast %cst_9 : f32 to vector<128x1xf32>
    %10 = arith.divf %8, %9 : vector<128x1xf32>
    %11 = vector.broadcast %10 : vector<128x1xf32> to vector<128x32xf32>
    %12 = arith.subf %6, %11 : vector<128x32xf32>
    %13 = arith.mulf %12, %12 : vector<128x32xf32>
    %cst_10 = arith.constant dense<0.000000e+00> : vector<128xf32>
    %14 = vector.multi_reduction <add>, %13, %cst_10 [1] : vector<128x32xf32> to vector<128xf32>
    %15 = vector.shape_cast %14 : vector<128xf32> to vector<128x1xf32>
    %cst_11 = arith.constant 3.200000e+01 : f32
    %16 = vector.broadcast %cst_11 : f32 to vector<128x1xf32>
    %17 = arith.divf %15, %16 : vector<128x1xf32>
    %cst_12 = arith.constant 9.99999974E-6 : f32
    %18 = vector.broadcast %cst_12 : f32 to vector<128x1xf32>
    %19 = arith.addf %17, %18 : vector<128x1xf32>
    %20 = math.rsqrt %19 : vector<128x1xf32>
    %21 = vector.broadcast %20 : vector<128x1xf32> to vector<128x32xf32>
    %22 = arith.mulf %12, %21 : vector<128x32xf32>
    %23 = vector.extract_strided_slice %5 {offsets = [0, 32], sizes = [128, 32], strides = [1, 1]} : vector<128x128xf32> to vector<128x32xf32>
    %cst_13 = arith.constant dense<0.000000e+00> : vector<128xf32>
    %24 = vector.multi_reduction <add>, %23, %cst_13 [1] : vector<128x32xf32> to vector<128xf32>
    %25 = vector.shape_cast %24 : vector<128xf32> to vector<128x1xf32>
    %cst_14 = arith.constant 3.200000e+01 : f32
    %26 = vector.broadcast %cst_14 : f32 to vector<128x1xf32>
    %27 = arith.divf %25, %26 : vector<128x1xf32>
    %28 = vector.broadcast %27 : vector<128x1xf32> to vector<128x32xf32>
    %29 = arith.subf %23, %28 : vector<128x32xf32>
    %30 = arith.mulf %29, %29 : vector<128x32xf32>
    %cst_15 = arith.constant dense<0.000000e+00> : vector<128xf32>
    %31 = vector.multi_reduction <add>, %30, %cst_15 [1] : vector<128x32xf32> to vector<128xf32>
    %32 = vector.shape_cast %31 : vector<128xf32> to vector<128x1xf32>
    %cst_16 = arith.constant 3.200000e+01 : f32
    %33 = vector.broadcast %cst_16 : f32 to vector<128x1xf32>
    %34 = arith.divf %32, %33 : vector<128x1xf32>
    %cst_17 = arith.constant 9.99999974E-6 : f32
    %35 = vector.broadcast %cst_17 : f32 to vector<128x1xf32>
    %36 = arith.addf %34, %35 : vector<128x1xf32>
    %37 = math.rsqrt %36 : vector<128x1xf32>
    %38 = vector.broadcast %37 : vector<128x1xf32> to vector<128x32xf32>
    %39 = arith.mulf %29, %38 : vector<128x32xf32>
    %40 = vector.extract_strided_slice %5 {offsets = [0, 64], sizes = [128, 32], strides = [1, 1]} : vector<128x128xf32> to vector<128x32xf32>
    %cst_18 = arith.constant dense<0.000000e+00> : vector<128xf32>
    %41 = vector.multi_reduction <add>, %40, %cst_18 [1] : vector<128x32xf32> to vector<128xf32>
    %42 = vector.shape_cast %41 : vector<128xf32> to vector<128x1xf32>
    %cst_19 = arith.constant 3.200000e+01 : f32
    %43 = vector.broadcast %cst_19 : f32 to vector<128x1xf32>
    %44 = arith.divf %42, %43 : vector<128x1xf32>
    %45 = vector.broadcast %44 : vector<128x1xf32> to vector<128x32xf32>
    %46 = arith.subf %40, %45 : vector<128x32xf32>
    %47 = arith.mulf %46, %46 : vector<128x32xf32>
    %cst_20 = arith.constant dense<0.000000e+00> : vector<128xf32>
    %48 = vector.multi_reduction <add>, %47, %cst_20 [1] : vector<128x32xf32> to vector<128xf32>
    %49 = vector.shape_cast %48 : vector<128xf32> to vector<128x1xf32>
    %cst_21 = arith.constant 3.200000e+01 : f32
    %50 = vector.broadcast %cst_21 : f32 to vector<128x1xf32>
    %51 = arith.divf %49, %50 : vector<128x1xf32>
    %cst_22 = arith.constant 9.99999974E-6 : f32
    %52 = vector.broadcast %cst_22 : f32 to vector<128x1xf32>
    %53 = arith.addf %51, %52 : vector<128x1xf32>
    %54 = math.rsqrt %53 : vector<128x1xf32>
    %55 = vector.broadcast %54 : vector<128x1xf32> to vector<128x32xf32>
    %56 = arith.mulf %46, %55 : vector<128x32xf32>
    %57 = vector.extract_strided_slice %5 {offsets = [0, 96], sizes = [128, 32], strides = [1, 1]} : vector<128x128xf32> to vector<128x32xf32>
    %cst_23 = arith.constant dense<0.000000e+00> : vector<128xf32>
    %58 = vector.multi_reduction <add>, %57, %cst_23 [1] : vector<128x32xf32> to vector<128xf32>
    %59 = vector.shape_cast %58 : vector<128xf32> to vector<128x1xf32>
    %cst_24 = arith.constant 3.200000e+01 : f32
    %60 = vector.broadcast %cst_24 : f32 to vector<128x1xf32>
    %61 = arith.divf %59, %60 : vector<128x1xf32>
    %62 = vector.broadcast %61 : vector<128x1xf32> to vector<128x32xf32>
    %63 = arith.subf %57, %62 : vector<128x32xf32>
    %64 = arith.mulf %63, %63 : vector<128x32xf32>
    %cst_25 = arith.constant dense<0.000000e+00> : vector<128xf32>
    %65 = vector.multi_reduction <add>, %64, %cst_25 [1] : vector<128x32xf32> to vector<128xf32>
    %66 = vector.shape_cast %65 : vector<128xf32> to vector<128x1xf32>
    %cst_26 = arith.constant 3.200000e+01 : f32
    %67 = vector.broadcast %cst_26 : f32 to vector<128x1xf32>
    %68 = arith.divf %66, %67 : vector<128x1xf32>
    %cst_27 = arith.constant 9.99999974E-6 : f32
    %69 = vector.broadcast %cst_27 : f32 to vector<128x1xf32>
    %70 = arith.addf %68, %69 : vector<128x1xf32>
    %71 = math.rsqrt %70 : vector<128x1xf32>
    %72 = vector.broadcast %71 : vector<128x1xf32> to vector<128x32xf32>
    %73 = arith.mulf %63, %72 : vector<128x32xf32>
    %74 = tpu.concatenate %22, %39, %56, %73 in 1 : vector<128x32xf32>, vector<128x32xf32>, vector<128x32xf32>, vector<128x32xf32> -> vector<128x128xf32>
    %75 = vector.broadcast %1 : vector<1x128xf32> to vector<128x128xf32>
    %76 = arith.mulf %74, %75 : vector<128x128xf32>
    %77 = vector.broadcast %2 : vector<1x128xf32> to vector<128x128xf32>
    %78 = arith.addf %76, %77 : vector<128x128xf32>
    %79 = vector.shape_cast %78 : vector<128x128xf32> to vector<16x1x8x128xf32>
    %c0_28 = arith.constant 0 : index
    %c0_29 = arith.constant 0 : index
    %c0_30 = arith.constant 0 : index
    %c0_31 = arith.constant 0 : index
    %80 = vector.load %arg5[%c0_28, %c0_29, %c0_30, %c0_31] : memref<16x4x8x128xf32, #tpu.memory_space<vmem>>, vector<16x1x8x128xf32>
    tpu.vector_store %arg5[%c0_28, %c0_29, %c0_30, %c0_31], %79 {strides = array<i32>} : memref<16x4x8x128xf32, #tpu.memory_space<vmem>>, vector<16x1x8x128xf32>,
    %c1 = arith.constant 1 : index
    %c0_32 = arith.constant 0 : index
    %c0_33 = arith.constant 0 : index
    %81 = vector.load %arg2[%c1, %c0_32, %c0_33] : memref<4x32x128xf32, #tpu.memory_space<vmem>>, vector<1x32x128xf32>
    %82 = vector.shape_cast %81 : vector<1x32x128xf32> to vector<32x128xf32>
    %cst_34 = arith.constant dense<0.000000e+00> : vector<128x128xf32>
    %83 = tpu.matmul %0, %82, %cst_34 {dimension_numbers = #tpu.dot_dimension_numbers<[1], [0], [0], [1], [0, 0, 1, 1], [], []>} : vector<128x32xf32>, vector<32x128xf32>, vector<128x128xf32> -> vector<128x128xf32>
    %84 = vector.extract_strided_slice %83 {offsets = [0, 0], sizes = [128, 32], strides = [1, 1]} : vector<128x128xf32> to vector<128x32xf32>
    %cst_35 = arith.constant dense<0.000000e+00> : vector<128xf32>
    %85 = vector.multi_reduction <add>, %84, %cst_35 [1] : vector<128x32xf32> to vector<128xf32>
    %86 = vector.shape_cast %85 : vector<128xf32> to vector<128x1xf32>
    %cst_36 = arith.constant 3.200000e+01 : f32
    %87 = vector.broadcast %cst_36 : f32 to vector<128x1xf32>
    %88 = arith.divf %86, %87 : vector<128x1xf32>
    %89 = vector.broadcast %88 : vector<128x1xf32> to vector<128x32xf32>
    %90 = arith.subf %84, %89 : vector<128x32xf32>
    %91 = arith.mulf %90, %90 : vector<128x32xf32>
    %cst_37 = arith.constant dense<0.000000e+00> : vector<128xf32>
    %92 = vector.multi_reduction <add>, %91, %cst_37 [1] : vector<128x32xf32> to vector<128xf32>
    %93 = vector.shape_cast %92 : vector<128xf32> to vector<128x1xf32>
    %cst_38 = arith.constant 3.200000e+01 : f32
    %94 = vector.broadcast %cst_38 : f32 to vector<128x1xf32>
    %95 = arith.divf %93, %94 : vector<128x1xf32>
    %cst_39 = arith.constant 9.99999974E-6 : f32
    %96 = vector.broadcast %cst_39 : f32 to vector<128x1xf32>
    %97 = arith.addf %95, %96 : vector<128x1xf32>
    %98 = math.rsqrt %97 : vector<128x1xf32>
    %99 = vector.broadcast %98 : vector<128x1xf32> to vector<128x32xf32>
    %100 = arith.mulf %90, %99 : vector<128x32xf32>
    %101 = vector.extract_strided_slice %83 {offsets = [0, 32], sizes = [128, 32], strides = [1, 1]} : vector<128x128xf32> to vector<128x32xf32>
    %cst_40 = arith.constant dense<0.000000e+00> : vector<128xf32>
    %102 = vector.multi_reduction <add>, %101, %cst_40 [1] : vector<128x32xf32> to vector<128xf32>
    %103 = vector.shape_cast %102 : vector<128xf32> to vector<128x1xf32>
    %cst_41 = arith.constant 3.200000e+01 : f32
    %104 = vector.broadcast %cst_41 : f32 to vector<128x1xf32>
    %105 = arith.divf %103, %104 : vector<128x1xf32>
    %106 = vector.broadcast %105 : vector<128x1xf32> to vector<128x32xf32>
    %107 = arith.subf %101, %106 : vector<128x32xf32>
    %108 = arith.mulf %107, %107 : vector<128x32xf32>
    %cst_42 = arith.constant dense<0.000000e+00> : vector<128xf32>
    %109 = vector.multi_reduction <add>, %108, %cst_42 [1] : vector<128x32xf32> to vector<128xf32>
    %110 = vector.shape_cast %109 : vector<128xf32> to vector<128x1xf32>
    %cst_43 = arith.constant 3.200000e+01 : f32
    %111 = vector.broadcast %cst_43 : f32 to vector<128x1xf32>
    %112 = arith.divf %110, %111 : vector<128x1xf32>
    %cst_44 = arith.constant 9.99999974E-6 : f32
    %113 = vector.broadcast %cst_44 : f32 to vector<128x1xf32>
    %114 = arith.addf %112, %113 : vector<128x1xf32>
    %115 = math.rsqrt %114 : vector<128x1xf32>
    %116 = vector.broadcast %115 : vector<128x1xf32> to vector<128x32xf32>
    %117 = arith.mulf %107, %116 : vector<128x32xf32>
    %118 = vector.extract_strided_slice %83 {offsets = [0, 64], sizes = [128, 32], strides = [1, 1]} : vector<128x128xf32> to vector<128x32xf32>
    %cst_45 = arith.constant dense<0.000000e+00> : vector<128xf32>
    %119 = vector.multi_reduction <add>, %118, %cst_45 [1] : vector<128x32xf32> to vector<128xf32>
    %120 = vector.shape_cast %119 : vector<128xf32> to vector<128x1xf32>
    %cst_46 = arith.constant 3.200000e+01 : f32
    %121 = vector.broadcast %cst_46 : f32 to vector<128x1xf32>
    %122 = arith.divf %120, %121 : vector<128x1xf32>
    %123 = vector.broadcast %122 : vector<128x1xf32> to vector<128x32xf32>
    %124 = arith.subf %118, %123 : vector<128x32xf32>
    %125 = arith.mulf %124, %124 : vector<128x32xf32>
    %cst_47 = arith.constant dense<0.000000e+00> : vector<128xf32>
    %126 = vector.multi_reduction <add>, %125, %cst_47 [1] : vector<128x32xf32> to vector<128xf32>
    %127 = vector.shape_cast %126 : vector<128xf32> to vector<128x1xf32>
    %cst_48 = arith.constant 3.200000e+01 : f32
    %128 = vector.broadcast %cst_48 : f32 to vector<128x1xf32>
    %129 = arith.divf %127, %128 : vector<128x1xf32>
    %cst_49 = arith.constant 9.99999974E-6 : f32
    %130 = vector.broadcast %cst_49 : f32 to vector<128x1xf32>
    %131 = arith.addf %129, %130 : vector<128x1xf32>
    %132 = math.rsqrt %131 : vector<128x1xf32>
    %133 = vector.broadcast %132 : vector<128x1xf32> to vector<128x32xf32>
    %134 = arith.mulf %124, %133 : vector<128x32xf32>
    %135 = vector.extract_strided_slice %83 {offsets = [0, 96], sizes = [128, 32], strides = [1, 1]} : vector<128x128xf32> to vector<128x32xf32>
    %cst_50 = arith.constant dense<0.000000e+00> : vector<128xf32>
    %136 = vector.multi_reduction <add>, %135, %cst_50 [1] : vector<128x32xf32> to vector<128xf32>
    %137 = vector.shape_cast %136 : vector<128xf32> to vector<128x1xf32>
    %cst_51 = arith.constant 3.200000e+01 : f32
    %138 = vector.broadcast %cst_51 : f32 to vector<128x1xf32>
    %139 = arith.divf %137, %138 : vector<128x1xf32>
    %140 = vector.broadcast %139 : vector<128x1xf32> to vector<128x32xf32>
    %141 = arith.subf %135, %140 : vector<128x32xf32>
    %142 = arith.mulf %141, %141 : vector<128x32xf32>
    %cst_52 = arith.constant dense<0.000000e+00> : vector<128xf32>
    %143 = vector.multi_reduction <add>, %142, %cst_52 [1] : vector<128x32xf32> to vector<128xf32>
    %144 = vector.shape_cast %143 : vector<128xf32> to vector<128x1xf32>
    %cst_53 = arith.constant 3.200000e+01 : f32
    %145 = vector.broadcast %cst_53 : f32 to vector<128x1xf32>
    %146 = arith.divf %144, %145 : vector<128x1xf32>
    %cst_54 = arith.constant 9.99999974E-6 : f32
    %147 = vector.broadcast %cst_54 : f32 to vector<128x1xf32>
    %148 = arith.addf %146, %147 : vector<128x1xf32>
    %149 = math.rsqrt %148 : vector<128x1xf32>
    %150 = vector.broadcast %149 : vector<128x1xf32> to vector<128x32xf32>
    %151 = arith.mulf %141, %150 : vector<128x32xf32>
    %152 = tpu.concatenate %100, %117, %134, %151 in 1 : vector<128x32xf32>, vector<128x32xf32>, vector<128x32xf32>, vector<128x32xf32> -> vector<128x128xf32>
    %153 = vector.broadcast %1 : vector<1x128xf32> to vector<128x128xf32>
    %154 = arith.mulf %152, %153 : vector<128x128xf32>
    %155 = vector.broadcast %2 : vector<1x128xf32> to vector<128x128xf32>
    %156 = arith.addf %154, %155 : vector<128x128xf32>
    %157 = vector.shape_cast %156 : vector<128x128xf32> to vector<16x1x8x128xf32>
    %c0_55 = arith.constant 0 : index
    %c1_56 = arith.constant 1 : index
    %c0_57 = arith.constant 0 : index
    %c0_58 = arith.constant 0 : index
    %158 = vector.load %arg5[%c0_55, %c1_56, %c0_57, %c0_58] : memref<16x4x8x128xf32, #tpu.memory_space<vmem>>, vector<16x1x8x128xf32>
    tpu.vector_store %arg5[%c0_55, %c1_56, %c0_57, %c0_58], %157 {strides = array<i32>} : memref<16x4x8x128xf32, #tpu.memory_space<vmem>>, vector<16x1x8x128xf32>,
    %c2 = arith.constant 2 : index
    %c0_59 = arith.constant 0 : index
    %c0_60 = arith.constant 0 : index
    %159 = vector.load %arg2[%c2, %c0_59, %c0_60] : memref<4x32x128xf32, #tpu.memory_space<vmem>>, vector<1x32x128xf32>
    %160 = vector.shape_cast %159 : vector<1x32x128xf32> to vector<32x128xf32>
    %cst_61 = arith.constant dense<0.000000e+00> : vector<128x128xf32>
    %161 = tpu.matmul %0, %160, %cst_61 {dimension_numbers = #tpu.dot_dimension_numbers<[1], [0], [0], [1], [0, 0, 1, 1], [], []>} : vector<128x32xf32>, vector<32x128xf32>, vector<128x128xf32> -> vector<128x128xf32>
    %162 = vector.extract_strided_slice %161 {offsets = [0, 0], sizes = [128, 32], strides = [1, 1]} : vector<128x128xf32> to vector<128x32xf32>
    %cst_62 = arith.constant dense<0.000000e+00> : vector<128xf32>
    %163 = vector.multi_reduction <add>, %162, %cst_62 [1] : vector<128x32xf32> to vector<128xf32>
    %164 = vector.shape_cast %163 : vector<128xf32> to vector<128x1xf32>
    %cst_63 = arith.constant 3.200000e+01 : f32
    %165 = vector.broadcast %cst_63 : f32 to vector<128x1xf32>
    %166 = arith.divf %164, %165 : vector<128x1xf32>
    %167 = vector.broadcast %166 : vector<128x1xf32> to vector<128x32xf32>
    %168 = arith.subf %162, %167 : vector<128x32xf32>
    %169 = arith.mulf %168, %168 : vector<128x32xf32>
    %cst_64 = arith.constant dense<0.000000e+00> : vector<128xf32>
    %170 = vector.multi_reduction <add>, %169, %cst_64 [1] : vector<128x32xf32> to vector<128xf32>
    %171 = vector.shape_cast %170 : vector<128xf32> to vector<128x1xf32>
    %cst_65 = arith.constant 3.200000e+01 : f32
    %172 = vector.broadcast %cst_65 : f32 to vector<128x1xf32>
    %173 = arith.divf %171, %172 : vector<128x1xf32>
    %cst_66 = arith.constant 9.99999974E-6 : f32
    %174 = vector.broadcast %cst_66 : f32 to vector<128x1xf32>
    %175 = arith.addf %173, %174 : vector<128x1xf32>
    %176 = math.rsqrt %175 : vector<128x1xf32>
    %177 = vector.broadcast %176 : vector<128x1xf32> to vector<128x32xf32>
    %178 = arith.mulf %168, %177 : vector<128x32xf32>
    %179 = vector.extract_strided_slice %161 {offsets = [0, 32], sizes = [128, 32], strides = [1, 1]} : vector<128x128xf32> to vector<128x32xf32>
    %cst_67 = arith.constant dense<0.000000e+00> : vector<128xf32>
    %180 = vector.multi_reduction <add>, %179, %cst_67 [1] : vector<128x32xf32> to vector<128xf32>
    %181 = vector.shape_cast %180 : vector<128xf32> to vector<128x1xf32>
    %cst_68 = arith.constant 3.200000e+01 : f32
    %182 = vector.broadcast %cst_68 : f32 to vector<128x1xf32>
    %183 = arith.divf %181, %182 : vector<128x1xf32>
    %184 = vector.broadcast %183 : vector<128x1xf32> to vector<128x32xf32>
    %185 = arith.subf %179, %184 : vector<128x32xf32>
    %186 = arith.mulf %185, %185 : vector<128x32xf32>
    %cst_69 = arith.constant dense<0.000000e+00> : vector<128xf32>
    %187 = vector.multi_reduction <add>, %186, %cst_69 [1] : vector<128x32xf32> to vector<128xf32>
    %188 = vector.shape_cast %187 : vector<128xf32> to vector<128x1xf32>
    %cst_70 = arith.constant 3.200000e+01 : f32
    %189 = vector.broadcast %cst_70 : f32 to vector<128x1xf32>
    %190 = arith.divf %188, %189 : vector<128x1xf32>
    %cst_71 = arith.constant 9.99999974E-6 : f32
    %191 = vector.broadcast %cst_71 : f32 to vector<128x1xf32>
    %192 = arith.addf %190, %191 : vector<128x1xf32>
    %193 = math.rsqrt %192 : vector<128x1xf32>
    %194 = vector.broadcast %193 : vector<128x1xf32> to vector<128x32xf32>
    %195 = arith.mulf %185, %194 : vector<128x32xf32>
    %196 = vector.extract_strided_slice %161 {offsets = [0, 64], sizes = [128, 32], strides = [1, 1]} : vector<128x128xf32> to vector<128x32xf32>
    %cst_72 = arith.constant dense<0.000000e+00> : vector<128xf32>
    %197 = vector.multi_reduction <add>, %196, %cst_72 [1] : vector<128x32xf32> to vector<128xf32>
    %198 = vector.shape_cast %197 : vector<128xf32> to vector<128x1xf32>
    %cst_73 = arith.constant 3.200000e+01 : f32
    %199 = vector.broadcast %cst_73 : f32 to vector<128x1xf32>
    %200 = arith.divf %198, %199 : vector<128x1xf32>
    %201 = vector.broadcast %200 : vector<128x1xf32> to vector<128x32xf32>
    %202 = arith.subf %196, %201 : vector<128x32xf32>
    %203 = arith.mulf %202, %202 : vector<128x32xf32>
    %cst_74 = arith.constant dense<0.000000e+00> : vector<128xf32>
    %204 = vector.multi_reduction <add>, %203, %cst_74 [1] : vector<128x32xf32> to vector<128xf32>
    %205 = vector.shape_cast %204 : vector<128xf32> to vector<128x1xf32>
    %cst_75 = arith.constant 3.200000e+01 : f32
    %206 = vector.broadcast %cst_75 : f32 to vector<128x1xf32>
    %207 = arith.divf %205, %206 : vector<128x1xf32>
    %cst_76 = arith.constant 9.99999974E-6 : f32
    %208 = vector.broadcast %cst_76 : f32 to vector<128x1xf32>
    %209 = arith.addf %207, %208 : vector<128x1xf32>
    %210 = math.rsqrt %209 : vector<128x1xf32>
    %211 = vector.broadcast %210 : vector<128x1xf32> to vector<128x32xf32>
    %212 = arith.mulf %202, %211 : vector<128x32xf32>
    %213 = vector.extract_strided_slice %161 {offsets = [0, 96], sizes = [128, 32], strides = [1, 1]} : vector<128x128xf32> to vector<128x32xf32>
    %cst_77 = arith.constant dense<0.000000e+00> : vector<128xf32>
    %214 = vector.multi_reduction <add>, %213, %cst_77 [1] : vector<128x32xf32> to vector<128xf32>
    %215 = vector.shape_cast %214 : vector<128xf32> to vector<128x1xf32>
    %cst_78 = arith.constant 3.200000e+01 : f32
    %216 = vector.broadcast %cst_78 : f32 to vector<128x1xf32>
    %217 = arith.divf %215, %216 : vector<128x1xf32>
    %218 = vector.broadcast %217 : vector<128x1xf32> to vector<128x32xf32>
    %219 = arith.subf %213, %218 : vector<128x32xf32>
    %220 = arith.mulf %219, %219 : vector<128x32xf32>
    %cst_79 = arith.constant dense<0.000000e+00> : vector<128xf32>
    %221 = vector.multi_reduction <add>, %220, %cst_79 [1] : vector<128x32xf32> to vector<128xf32>
    %222 = vector.shape_cast %221 : vector<128xf32> to vector<128x1xf32>
    %cst_80 = arith.constant 3.200000e+01 : f32
    %223 = vector.broadcast %cst_80 : f32 to vector<128x1xf32>
    %224 = arith.divf %222, %223 : vector<128x1xf32>
    %cst_81 = arith.constant 9.99999974E-6 : f32
    %225 = vector.broadcast %cst_81 : f32 to vector<128x1xf32>
    %226 = arith.addf %224, %225 : vector<128x1xf32>
    %227 = math.rsqrt %226 : vector<128x1xf32>
    %228 = vector.broadcast %227 : vector<128x1xf32> to vector<128x32xf32>
    %229 = arith.mulf %219, %228 : vector<128x32xf32>
    %230 = tpu.concatenate %178, %195, %212, %229 in 1 : vector<128x32xf32>, vector<128x32xf32>, vector<128x32xf32>, vector<128x32xf32> -> vector<128x128xf32>
    %231 = vector.broadcast %1 : vector<1x128xf32> to vector<128x128xf32>
    %232 = arith.mulf %230, %231 : vector<128x128xf32>
    %233 = vector.broadcast %2 : vector<1x128xf32> to vector<128x128xf32>
    %234 = arith.addf %232, %233 : vector<128x128xf32>
    %235 = vector.shape_cast %234 : vector<128x128xf32> to vector<16x1x8x128xf32>
    %c0_82 = arith.constant 0 : index
    %c2_83 = arith.constant 2 : index
    %c0_84 = arith.constant 0 : index
    %c0_85 = arith.constant 0 : index
    %236 = vector.load %arg5[%c0_82, %c2_83, %c0_84, %c0_85] : memref<16x4x8x128xf32, #tpu.memory_space<vmem>>, vector<16x1x8x128xf32>
    tpu.vector_store %arg5[%c0_82, %c2_83, %c0_84, %c0_85], %235 {strides = array<i32>} : memref<16x4x8x128xf32, #tpu.memory_space<vmem>>, vector<16x1x8x128xf32>,
    %c3 = arith.constant 3 : index
    %c0_86 = arith.constant 0 : index
    %c0_87 = arith.constant 0 : index
    %237 = vector.load %arg2[%c3, %c0_86, %c0_87] : memref<4x32x128xf32, #tpu.memory_space<vmem>>, vector<1x32x128xf32>
    %238 = vector.shape_cast %237 : vector<1x32x128xf32> to vector<32x128xf32>
    %cst_88 = arith.constant dense<0.000000e+00> : vector<128x128xf32>
    %239 = tpu.matmul %0, %238, %cst_88 {dimension_numbers = #tpu.dot_dimension_numbers<[1], [0], [0], [1], [0, 0, 1, 1], [], []>} : vector<128x32xf32>, vector<32x128xf32>, vector<128x128xf32> -> vector<128x128xf32>
    %240 = vector.extract_strided_slice %239 {offsets = [0, 0], sizes = [128, 32], strides = [1, 1]} : vector<128x128xf32> to vector<128x32xf32>
    %cst_89 = arith.constant dense<0.000000e+00> : vector<128xf32>
    %241 = vector.multi_reduction <add>, %240, %cst_89 [1] : vector<128x32xf32> to vector<128xf32>
    %242 = vector.shape_cast %241 : vector<128xf32> to vector<128x1xf32>
    %cst_90 = arith.constant 3.200000e+01 : f32
    %243 = vector.broadcast %cst_90 : f32 to vector<128x1xf32>
    %244 = arith.divf %242, %243 : vector<128x1xf32>
    %245 = vector.broadcast %244 : vector<128x1xf32> to vector<128x32xf32>
    %246 = arith.subf %240, %245 : vector<128x32xf32>
    %247 = arith.mulf %246, %246 : vector<128x32xf32>
    %cst_91 = arith.constant dense<0.000000e+00> : vector<128xf32>
    %248 = vector.multi_reduction <add>, %247, %cst_91 [1] : vector<128x32xf32> to vector<128xf32>
    %249 = vector.shape_cast %248 : vector<128xf32> to vector<128x1xf32>
    %cst_92 = arith.constant 3.200000e+01 : f32
    %250 = vector.broadcast %cst_92 : f32 to vector<128x1xf32>
    %251 = arith.divf %249, %250 : vector<128x1xf32>
    %cst_93 = arith.constant 9.99999974E-6 : f32
    %252 = vector.broadcast %cst_93 : f32 to vector<128x1xf32>
    %253 = arith.addf %251, %252 : vector<128x1xf32>
    %254 = math.rsqrt %253 : vector<128x1xf32>
    %255 = vector.broadcast %254 : vector<128x1xf32> to vector<128x32xf32>
    %256 = arith.mulf %246, %255 : vector<128x32xf32>
    %257 = vector.extract_strided_slice %239 {offsets = [0, 32], sizes = [128, 32], strides = [1, 1]} : vector<128x128xf32> to vector<128x32xf32>
    %cst_94 = arith.constant dense<0.000000e+00> : vector<128xf32>
    %258 = vector.multi_reduction <add>, %257, %cst_94 [1] : vector<128x32xf32> to vector<128xf32>
    %259 = vector.shape_cast %258 : vector<128xf32> to vector<128x1xf32>
    %cst_95 = arith.constant 3.200000e+01 : f32
    %260 = vector.broadcast %cst_95 : f32 to vector<128x1xf32>
    %261 = arith.divf %259, %260 : vector<128x1xf32>
    %262 = vector.broadcast %261 : vector<128x1xf32> to vector<128x32xf32>
    %263 = arith.subf %257, %262 : vector<128x32xf32>
    %264 = arith.mulf %263, %263 : vector<128x32xf32>
    %cst_96 = arith.constant dense<0.000000e+00> : vector<128xf32>
    %265 = vector.multi_reduction <add>, %264, %cst_96 [1] : vector<128x32xf32> to vector<128xf32>
    %266 = vector.shape_cast %265 : vector<128xf32> to vector<128x1xf32>
    %cst_97 = arith.constant 3.200000e+01 : f32
    %267 = vector.broadcast %cst_97 : f32 to vector<128x1xf32>
    %268 = arith.divf %266, %267 : vector<128x1xf32>
    %cst_98 = arith.constant 9.99999974E-6 : f32
    %269 = vector.broadcast %cst_98 : f32 to vector<128x1xf32>
    %270 = arith.addf %268, %269 : vector<128x1xf32>
    %271 = math.rsqrt %270 : vector<128x1xf32>
    %272 = vector.broadcast %271 : vector<128x1xf32> to vector<128x32xf32>
    %273 = arith.mulf %263, %272 : vector<128x32xf32>
    %274 = vector.extract_strided_slice %239 {offsets = [0, 64], sizes = [128, 32], strides = [1, 1]} : vector<128x128xf32> to vector<128x32xf32>
    %cst_99 = arith.constant dense<0.000000e+00> : vector<128xf32>
    %275 = vector.multi_reduction <add>, %274, %cst_99 [1] : vector<128x32xf32> to vector<128xf32>
    %276 = vector.shape_cast %275 : vector<128xf32> to vector<128x1xf32>
    %cst_100 = arith.constant 3.200000e+01 : f32
    %277 = vector.broadcast %cst_100 : f32 to vector<128x1xf32>
    %278 = arith.divf %276, %277 : vector<128x1xf32>
    %279 = vector.broadcast %278 : vector<128x1xf32> to vector<128x32xf32>
    %280 = arith.subf %274, %279 : vector<128x32xf32>
    %281 = arith.mulf %280, %280 : vector<128x32xf32>
    %cst_101 = arith.constant dense<0.000000e+00> : vector<128xf32>
    %282 = vector.multi_reduction <add>, %281, %cst_101 [1] : vector<128x32xf32> to vector<128xf32>
    %283 = vector.shape_cast %282 : vector<128xf32> to vector<128x1xf32>
    %cst_102 = arith.constant 3.200000e+01 : f32
    %284 = vector.broadcast %cst_102 : f32 to vector<128x1xf32>
    %285 = arith.divf %283, %284 : vector<128x1xf32>
    %cst_103 = arith.constant 9.99999974E-6 : f32
    %286 = vector.broadcast %cst_103 : f32 to vector<128x1xf32>
    %287 = arith.addf %285, %286 : vector<128x1xf32>
    %288 = math.rsqrt %287 : vector<128x1xf32>
    %289 = vector.broadcast %288 : vector<128x1xf32> to vector<128x32xf32>
    %290 = arith.mulf %280, %289 : vector<128x32xf32>
    %291 = vector.extract_strided_slice %239 {offsets = [0, 96], sizes = [128, 32], strides = [1, 1]} : vector<128x128xf32> to vector<128x32xf32>
    %cst_104 = arith.constant dense<0.000000e+00> : vector<128xf32>
    %292 = vector.multi_reduction <add>, %291, %cst_104 [1] : vector<128x32xf32> to vector<128xf32>
    %293 = vector.shape_cast %292 : vector<128xf32> to vector<128x1xf32>
    %cst_105 = arith.constant 3.200000e+01 : f32
    %294 = vector.broadcast %cst_105 : f32 to vector<128x1xf32>
    %295 = arith.divf %293, %294 : vector<128x1xf32>
    %296 = vector.broadcast %295 : vector<128x1xf32> to vector<128x32xf32>
    %297 = arith.subf %291, %296 : vector<128x32xf32>
    %298 = arith.mulf %297, %297 : vector<128x32xf32>
    %cst_106 = arith.constant dense<0.000000e+00> : vector<128xf32>
    %299 = vector.multi_reduction <add>, %298, %cst_106 [1] : vector<128x32xf32> to vector<128xf32>
    %300 = vector.shape_cast %299 : vector<128xf32> to vector<128x1xf32>
    %cst_107 = arith.constant 3.200000e+01 : f32
    %301 = vector.broadcast %cst_107 : f32 to vector<128x1xf32>
    %302 = arith.divf %300, %301 : vector<128x1xf32>
    %cst_108 = arith.constant 9.99999974E-6 : f32
    %303 = vector.broadcast %cst_108 : f32 to vector<128x1xf32>
    %304 = arith.addf %302, %303 : vector<128x1xf32>
    %305 = math.rsqrt %304 : vector<128x1xf32>
    %306 = vector.broadcast %305 : vector<128x1xf32> to vector<128x32xf32>
    %307 = arith.mulf %297, %306 : vector<128x32xf32>
    %308 = tpu.concatenate %256, %273, %290, %307 in 1 : vector<128x32xf32>, vector<128x32xf32>, vector<128x32xf32>, vector<128x32xf32> -> vector<128x128xf32>
    %309 = vector.broadcast %1 : vector<1x128xf32> to vector<128x128xf32>
    %310 = arith.mulf %308, %309 : vector<128x128xf32>
    %311 = vector.broadcast %2 : vector<1x128xf32> to vector<128x128xf32>
    %312 = arith.addf %310, %311 : vector<128x128xf32>
    %313 = vector.shape_cast %312 : vector<128x128xf32> to vector<16x1x8x128xf32>
    %c0_109 = arith.constant 0 : index
    %c3_110 = arith.constant 3 : index
    %c0_111 = arith.constant 0 : index
    %c0_112 = arith.constant 0 : index
    %314 = vector.load %arg5[%c0_109, %c3_110, %c0_111, %c0_112] : memref<16x4x8x128xf32, #tpu.memory_space<vmem>>, vector<16x1x8x128xf32>
    tpu.vector_store %arg5[%c0_109, %c3_110, %c0_111, %c0_112], %313 {strides = array<i32>} : memref<16x4x8x128xf32, #tpu.memory_space<vmem>>, vector<16x1x8x128xf32>,
    return
  }
  func.func @transform_0(%arg0: i32) -> (i32, i32) {
    %c0_i32 = arith.constant 0 : i32
    %c0_i32_0 = arith.constant 0 : i32
    return %arg0, %c0_i32 : i32, i32
  }
  func.func @transform_1(%arg0: i32) -> (i32, i32, i32) {
    %c0_i32 = arith.constant 0 : i32
    %c0_i32_0 = arith.constant 0 : i32
    %c0_i32_1 = arith.constant 0 : i32
    %c0_i32_2 = arith.constant 0 : i32
    return %c0_i32, %c0_i32_0, %c0_i32_1 : i32, i32, i32
  }
  func.func @transform_2(%arg0: i32) -> (i32, i32) {
    %c0_i32 = arith.constant 0 : i32
    %c0_i32_0 = arith.constant 0 : i32
    %c0_i32_1 = arith.constant 0 : i32
    return %c0_i32, %c0_i32_0 : i32, i32
  }
  func.func @transform_3(%arg0: i32) -> (i32, i32) {
    %c0_i32 = arith.constant 0 : i32
    %c0_i32_0 = arith.constant 0 : i32
    %c0_i32_1 = arith.constant 0 : i32
    return %c0_i32, %c0_i32_0 : i32, i32
  }
  func.func @transform_4(%arg0: i32) -> (i32, i32, i32, i32) {
    %c0_i32 = arith.constant 0 : i32
    %c0_i32_0 = arith.constant 0 : i32
    %c0_i32_1 = arith.constant 0 : i32
    %c0_i32_2 = arith.constant 0 : i32
    return %arg0, %c0_i32, %c0_i32_0, %c0_i32_1 : i32, i32, i32, i32
  }
}

</mosaic_0001>

<llo_original>
// kernel: tpu_custom_call.1
$region0: #{tpu_custom_call.1}
  #allocation0 [shape = 'u32[]', space=smem, size = 0x4, offset = 0x4, fixed_abs, tag = 'smem constant byte address 0x4 - core index']
  #allocation1 [shape = 'u32[144,128]{1,0:T(1,128)}', space=vmem, size = 0x12000, scoped, tag = 'internal scratch']
  %s0 = inlined_call_operand.vmem [shape: f32[128,32], index: 0, kind: input, shape index: {}]
  %s1 = inlined_call_operand.vmem [shape: f32[4,32,128], index: 1, kind: input, shape index: {}]
  %s2 = inlined_call_operand.vmem [shape: f32[1,128], index: 2, kind: input, shape index: {}]
  %s3 = inlined_call_operand.vmem [shape: f32[1,128], index: 3, kind: input, shape index: {}]
  %s4 = inlined_call_operand.hbm [shape: f32[16,4,8,128], index: 4, kind: output, shape index: {}]
  %s5 = sld [smem:[#allocation0]]
  $region26: #{tpu_custom_call.1} parent=0
    _
  %s7 = ssub.s32 1, %s5
  %s8 = scalar_select 0, %s7, %s5
  $region1: #{tpu_custom_call.1} parent=0
    #allocation2 [shape = 'u8[262144]{0}', space=vmem, size = 0x40000, scoped, tag = 'output window, operand 0, single buffered']
    #allocation3 [shape = 's32[1]{0}', space=sflag, size = 0x4, scoped, tag = 'scoped memory for tpu_custom_call.1']
    %9 = vsyncpa [#allocation3], 0
    // Predicated region
    $region2: #{tpu_custom_call.1} parent=1 // pred_check
      _
    $region3: #{tpu_custom_call.1} parent=1 // pred_check_branch
      %11 = sbr.rel (0) target = $region5
    $region4: #{tpu_custom_call.1} parent=1 // pred_region
      _
    $region5: #{tpu_custom_call.1} parent=1 // pred_fallthru
      _
    // Predicated region
    $region6: #{tpu_custom_call.1} parent=1 // pred_check
      _
    $region7: #{tpu_custom_call.1} parent=1 // pred_check_branch
      %13 = sbr.rel (0) target = $region9
    $region8: #{tpu_custom_call.1} parent=1 // pred_region
      _
    $region9: #{tpu_custom_call.1} parent=1 // pred_fallthru
      _
    // Predicated region
    $region10: #{tpu_custom_call.1} parent=1 // pred_check
      _
    $region11: #{tpu_custom_call.1} parent=1 // pred_check_branch
      %15 = sbr.rel (0) target = $region13
    $region12: #{tpu_custom_call.1} parent=1 // pred_region
      _
    $region13: #{tpu_custom_call.1} parent=1 // pred_fallthru
      _
    // Predicated region
    $region14: #{tpu_custom_call.1} parent=1 // pred_check
      _
    $region15: #{tpu_custom_call.1} parent=1 // pred_check_branch
      %17 = sbr.rel (0) target = $region17
    $region16: #{tpu_custom_call.1} parent=1 // pred_region
      _
    $region17: #{tpu_custom_call.1} parent=1 // pred_fallthru
      _
    %v18 = vld [vmem:[%s0] sm:$0xff]
    %v19 = vld [vmem:[%s0 + $0x8] sm:$0xff]
    %v20 = vld [vmem:[%s0 + $0x10] sm:$0xff]
    %v21 = vld [vmem:[%s0 + $0x18] sm:$0xff]
    %v22 = vld [vmem:[%s0 + $0x20] sm:$0xff]
    %v23 = vld [vmem:[%s0 + $0x28] sm:$0xff]
    %v24 = vld [vmem:[%s0 + $0x30] sm:$0xff]
    %v25 = vld [vmem:[%s0 + $0x38] sm:$0xff]
    %v26 = vld [vmem:[%s0 + $0x40] sm:$0xff]
    %v27 = vld [vmem:[%s0 + $0x48] sm:$0xff]
    %v28 = vld [vmem:[%s0 + $0x50] sm:$0xff]
    %v29 = vld [vmem:[%s0 + $0x58] sm:$0xff]
    %v30 = vld [vmem:[%s0 + $0x60] sm:$0xff]
    %v31 = vld [vmem:[%s0 + $0x68] sm:$0xff]
    %v32 = vld [vmem:[%s0 + $0x70] sm:$0xff]
    %v33 = vld [vmem:[%s0 + $0x78] sm:$0xff]
    %v34 = vld [vmem:[%s2] sm:$0x1]
    %v35 = vld [vmem:[%s3] sm:$0x1]
    %v36 = vld [vmem:[%s1] sm:$0xff]
    %v37 = vld [vmem:[%s1 + $0x8] sm:$0xff]
    %v38 = vld [vmem:[%s1 + $0x10] sm:$0xff]
    %v39 = vld [vmem:[%s1 + $0x18] sm:$0xff]
    %vm40 = vcmask 261120
    %v42 = vsel %vm40, %v18, 0
    %v45 = vsel %vm40, %v19, 0
    %v48 = vsel %vm40, %v20, 0
    %v51 = vsel %vm40, %v21, 0
    %v54 = vsel %vm40, %v22, 0
    %v57 = vsel %vm40, %v23, 0
    %v60 = vsel %vm40, %v24, 0
    %v63 = vsel %vm40, %v25, 0
    %v66 = vsel %vm40, %v26, 0
    %v69 = vsel %vm40, %v27, 0
    %v72 = vsel %vm40, %v28, 0
    %v75 = vsel %vm40, %v29, 0
    %v78 = vsel %vm40, %v30, 0
    %v81 = vsel %vm40, %v31, 0
    %v84 = vsel %vm40, %v32, 0
    %v87 = vsel %vm40, %v33, 0
    %89 = vmatprep.subr.mxu0 0.0
    %90 = vmatpush1.msra.mxu0 %v36
    %91 = vmatprep.subr.mxu0 0.0
    %92 = vmatpush1.msra.mxu0 %v37
    %93 = vmatprep.subr.mxu0 0.0
    %94 = vmatpush1.msra.mxu0 %v38
    %95 = vmatprep.subr.mxu0 0.0
    %96 = vmatpush1.msra.mxu0 %v39
    %97 = vmatprep.subr.mxu0 0.0
    %98 = vmatpush1.msra.mxu0 0.0
    %99 = vmatprep.subr.mxu0 0.0
    %100 = vmatpush1.msra.mxu0 0.0
    %101 = vmatprep.subr.mxu0 0.0
    %102 = vmatpush1.msra.mxu0 0.0
    %103 = vmatprep.subr.mxu0 0.0
    %104 = vmatpush1.msra.mxu0 0.0
    %105 = vmatprep.subr.mxu0 0.0
    %106 = vmatpush1.msra.mxu0 0.0
    %107 = vmatprep.subr.mxu0 0.0
    %108 = vmatpush1.msra.mxu0 0.0
    %109 = vmatprep.subr.mxu0 0.0
    %110 = vmatpush1.msra.mxu0 0.0
    %111 = vmatprep.subr.mxu0 0.0
    %112 = vmatpush1.msra.mxu0 0.0
    %113 = vmatprep.subr.mxu0 0.0
    %114 = vmatpush1.msra.mxu0 0.0
    %115 = vmatprep.subr.mxu0 0.0
    %116 = vmatpush1.msra.mxu0 0.0
    %117 = vmatprep.subr.mxu0 0.0
    %118 = vmatpush1.msra.mxu0 0.0
    %119 = vmatprep.subr.mxu0 0.0
    %120 = vmatpush1.msra.mxu0 0.0
    %121 = vmatprep.subr.mxu0 0.0
    %122 = vmatpush1.msra.mxu0 0.0
    %123 = vmatprep.subr.mxu0 0.0
    %124 = vmatpush1.msra.mxu0 0.0
    %125 = vmatprep.subr.mxu0 0.0
    %126 = vmatpush1.msra.mxu0 0.0
    %127 = vmatprep.subr.mxu0 0.0
    %128 = vmatpush1.msra.mxu0 0.0
    %129 = vmatprep.subr.mxu0 0.0
    %130 = vmatpush1.msra.mxu0 0.0
    %131 = vmatprep.subr.mxu0 0.0
    %132 = vmatpush1.msra.mxu0 0.0
    %133 = vmatprep.subr.mxu0 0.0
    %134 = vmatpush1.msra.mxu0 0.0
    %135 = vmatprep.subr.mxu0 0.0
    %136 = vmatpush1.msra.mxu0 0.0
    %137 = vmatprep.subr.mxu0 0.0
    %138 = vmatpush1.msra.mxu0 0.0
    %139 = vmatprep.subr.mxu0 0.0
    %140 = vmatpush1.msra.mxu0 0.0
    %141 = vmatprep.subr.mxu0 0.0
    %142 = vmatpush1.msra.mxu0 0.0
    %143 = vmatprep.subr.mxu0 0.0
    %144 = vmatpush1.msra.mxu0 0.0
    %145 = vmatprep.subr.mxu0 0.0
    %146 = vmatpush1.msra.mxu0 0.0
    %147 = vmatprep.subr.mxu0 0.0
    %148 = vmatpush1.msra.mxu0 0.0
    %149 = vmatprep.subr.mxu0 0.0
    %150 = vmatpush1.msra.mxu0 0.0
    %151 = vmatprep.subr.mxu0 0.0
    %152 = vmatpush1.msra.mxu0 0.0
    %153 = vmatprep.mubr.f32.mxu0 0.0
    %154 = vmatmul.mubr.f32.gmra.mrb[0].mxu0 %v42
    %v155 = vpop.f32.mrb[0].mxu0
    %v156 = vadd.f32 0.0, %v155
    %v157 = vpop.f32.mrb[0].mxu0
    %158 = vmatprep.mubr.f32.mxu0 0.0
    %159 = vmatmul.mubr.f32.gmra.mrb[0].mxu0 %v45
    %v160 = vpop.f32.mrb[0].mxu0
    %v161 = vadd.f32 0.0, %v160
    %v162 = vpop.f32.mrb[0].mxu0
    %163 = vmatprep.mubr.f32.mxu0 0.0
    %164 = vmatmul.mubr.f32.gmra.mrb[0].mxu0 %v48
    %v165 = vpop.f32.mrb[0].mxu0
    %v166 = vadd.f32 0.0, %v165
    %v167 = vpop.f32.mrb[0].mxu0
    %168 = vmatprep.mubr.f32.mxu0 0.0
    %169 = vmatmul.mubr.f32.gmra.mrb[0].mxu0 %v51
    %v170 = vpop.f32.mrb[0].mxu0
    %v171 = vadd.f32 0.0, %v170
    %v172 = vpop.f32.mrb[0].mxu0
    %173 = vmatprep.mubr.f32.mxu0 0.0
    %174 = vmatmul.mubr.f32.gmra.mrb[0].mxu0 %v54
    %v175 = vpop.f32.mrb[0].mxu0
    %v176 = vadd.f32 0.0, %v175
    %v177 = vpop.f32.mrb[0].mxu0
    %178 = vmatprep.mubr.f32.mxu0 0.0
    %179 = vmatmul.mubr.f32.gmra.mrb[0].mxu0 %v57
    %v180 = vpop.f32.mrb[0].mxu0
    %v181 = vadd.f32 0.0, %v180
    %v182 = vpop.f32.mrb[0].mxu0
    %183 = vmatprep.mubr.f32.mxu0 0.0
    %184 = vmatmul.mubr.f32.gmra.mrb[0].mxu0 %v60
    %v185 = vpop.f32.mrb[0].mxu0
    %v186 = vadd.f32 0.0, %v185
    %v187 = vpop.f32.mrb[0].mxu0
    %188 = vmatprep.mubr.f32.mxu0 0.0
    %189 = vmatmul.mubr.f32.gmra.mrb[0].mxu0 %v63
    %v190 = vpop.f32.mrb[0].mxu0
    %v191 = vadd.f32 0.0, %v190
    %v192 = vpop.f32.mrb[0].mxu0
    %193 = vmatprep.mubr.f32.mxu0 0.0
    %194 = vmatmul.mubr.f32.gmra.mrb[0].mxu0 %v66
    %v195 = vpop.f32.mrb[0].mxu0
    %v196 = vadd.f32 0.0, %v195
    %v197 = vpop.f32.mrb[0].mxu0
    %198 = vmatprep.mubr.f32.mxu0 0.0
    %199 = vmatmul.mubr.f32.gmra.mrb[0].mxu0 %v69
    %v200 = vpop.f32.mrb[0].mxu0
    %v201 = vadd.f32 0.0, %v200
    %v202 = vpop.f32.mrb[0].mxu0
    %203 = vmatprep.mubr.f32.mxu0 0.0
    %204 = vmatmul.mubr.f32.gmra.mrb[0].mxu0 %v72
    %v205 = vpop.f32.mrb[0].mxu0
    %v206 = vadd.f32 0.0, %v205
    %v207 = vpop.f32.mrb[0].mxu0
    %208 = vmatprep.mubr.f32.mxu0 0.0
    %209 = vmatmul.mubr.f32.gmra.mrb[0].mxu0 %v75
    %v210 = vpop.f32.mrb[0].mxu0
    %v211 = vadd.f32 0.0, %v210
    %v212 = vpop.f32.mrb[0].mxu0
    %213 = vmatprep.mubr.f32.mxu0 0.0
    %214 = vmatmul.mubr.f32.gmra.mrb[0].mxu0 %v78
    %v215 = vpop.f32.mrb[0].mxu0
    %v216 = vadd.f32 0.0, %v215
    %v217 = vpop.f32.mrb[0].mxu0
    %218 = vmatprep.mubr.f32.mxu0 0.0
    %219 = vmatmul.mubr.f32.gmra.mrb[0].mxu0 %v81
    %v220 = vpop.f32.mrb[0].mxu0
    %v221 = vadd.f32 0.0, %v220
    %v222 = vpop.f32.mrb[0].mxu0
    %223 = vmatprep.mubr.f32.mxu0 0.0
    %224 = vmatmul.mubr.f32.gmra.mrb[0].mxu0 %v84
    %v225 = vpop.f32.mrb[0].mxu0
    %v226 = vadd.f32 0.0, %v225
    %v227 = vpop.f32.mrb[0].mxu0
    %228 = vmatprep.mubr.f32.mxu0 0.0
    %229 = vmatmul.mubr.f32.gmra.mrb[0].mxu0 %v87
    %v230 = vpop.f32.mrb[0].mxu0
    %v231 = vadd.f32 0.0, %v230
    %v232 = vpop.f32.mrb[0].mxu0
    %233 = vdwg.mxu0
    %v234 = vsel %vm40, %v156, 0.0
    %235 = vadd.xlane.f32.xlu0 %v234
    %v236 = vpop.xlane.xlu0 %235
    %v237 = vsel %vm40, %v161, 0.0
    %238 = vadd.xlane.f32.xlu0 %v237
    %v239 = vpop.xlane.xlu0 %238
    %v240 = vsel %vm40, %v166, 0.0
    %241 = vadd.xlane.f32.xlu0 %v240
    %v242 = vpop.xlane.xlu0 %241
    %v243 = vsel %vm40, %v171, 0.0
    %244 = vadd.xlane.f32.xlu0 %v243
    %v245 = vpop.xlane.xlu0 %244
    %v246 = vsel %vm40, %v176, 0.0
    %247 = vadd.xlane.f32.xlu0 %v246
    %v248 = vpop.xlane.xlu0 %247
    %v249 = vsel %vm40, %v181, 0.0
    %250 = vadd.xlane.f32.xlu0 %v249
    %v251 = vpop.xlane.xlu0 %250
    %v252 = vsel %vm40, %v186, 0.0
    %253 = vadd.xlane.f32.xlu0 %v252
    %v254 = vpop.xlane.xlu0 %253
    %v255 = vsel %vm40, %v191, 0.0
    %256 = vadd.xlane.f32.xlu0 %v255
    %v257 = vpop.xlane.xlu0 %256
    %v258 = vsel %vm40, %v196, 0.0
    %259 = vadd.xlane.f32.xlu0 %v258
    %v260 = vpop.xlane.xlu0 %259
    %v261 = vsel %vm40, %v201, 0.0
    %262 = vadd.xlane.f32.xlu0 %v261
    %v263 = vpop.xlane.xlu0 %262
    %v264 = vsel %vm40, %v206, 0.0
    %265 = vadd.xlane.f32.xlu0 %v264
    %v266 = vpop.xlane.xlu0 %265
    %v267 = vsel %vm40, %v211, 0.0
    %268 = vadd.xlane.f32.xlu0 %v267
    %v269 = vpop.xlane.xlu0 %268
    %v270 = vsel %vm40, %v216, 0.0
    %271 = vadd.xlane.f32.xlu0 %v270
    %v272 = vpop.xlane.xlu0 %271
    %v273 = vsel %vm40, %v221, 0.0
    %274 = vadd.xlane.f32.xlu0 %v273
    %v275 = vpop.xlane.xlu0 %274
    %v276 = vsel %vm40, %v226, 0.0
    %277 = vadd.xlane.f32.xlu0 %v276
    %v278 = vpop.xlane.xlu0 %277
    %v279 = vsel %vm40, %v231, 0.0
    %280 = vadd.xlane.f32.xlu0 %v279
    %v281 = vpop.xlane.xlu0 %280
    %v282 = vrcp.pop 32.0
    %v283 = vmul.f32 %v236, %v282
    %v284 = vmul.f32 %v239, %v282
    %v285 = vmul.f32 %v242, %v282
    %v286 = vmul.f32 %v245, %v282
    %v287 = vmul.f32 %v248, %v282
    %v288 = vmul.f32 %v251, %v282
    %v289 = vmul.f32 %v254, %v282
    %v290 = vmul.f32 %v257, %v282
    %v291 = vmul.f32 %v260, %v282
    %v292 = vmul.f32 %v263, %v282
    %v293 = vmul.f32 %v266, %v282
    %v294 = vmul.f32 %v269, %v282
    %v295 = vmul.f32 %v272, %v282
    %v296 = vmul.f32 %v275, %v282
    %v297 = vmul.f32 %v278, %v282
    %v298 = vmul.f32 %v281, %v282
    %v299 = vsub.f32 %v156, %v283
    %v300 = vsub.f32 %v161, %v284
    %v301 = vsub.f32 %v166, %v285
    %v302 = vsub.f32 %v171, %v286
    %v303 = vsub.f32 %v176, %v287
    %v304 = vsub.f32 %v181, %v288
    %v305 = vsub.f32 %v186, %v289
    %v306 = vsub.f32 %v191, %v290
    %v307 = vsub.f32 %v196, %v291
    %v308 = vsub.f32 %v201, %v292
    %v309 = vsub.f32 %v206, %v293
    %v310 = vsub.f32 %v211, %v294
    %v311 = vsub.f32 %v216, %v295
    %v312 = vsub.f32 %v221, %v296
    %v313 = vsub.f32 %v226, %v297
    %v314 = vsub.f32 %v231, %v298
    %v315 = vmul.f32 %v299, %v299
    %v316 = vmul.f32 %v300, %v300
    %v317 = vmul.f32 %v301, %v301
    %v318 = vmul.f32 %v302, %v302
    %v319 = vmul.f32 %v303, %v303
    %v320 = vmul.f32 %v304, %v304
    %v321 = vmul.f32 %v305, %v305
    %v322 = vmul.f32 %v306, %v306
    %v323 = vmul.f32 %v307, %v307
    %v324 = vmul.f32 %v308, %v308
    %v325 = vmul.f32 %v309, %v309
    %v326 = vmul.f32 %v310, %v310
    %v327 = vmul.f32 %v311, %v311
    %v328 = vmul.f32 %v312, %v312
    %v329 = vmul.f32 %v313, %v313
    %v330 = vmul.f32 %v314, %v314
    %v331 = vsel %vm40, %v315, 0.0
    %332 = vadd.xlane.f32.xlu0 %v331
    %v333 = vpop.xlane.xlu0 %332
    %v334 = vsel %vm40, %v316, 0.0
    %335 = vadd.xlane.f32.xlu0 %v334
    %v336 = vpop.xlane.xlu0 %335
    %v337 = vsel %vm40, %v317, 0.0
    %338 = vadd.xlane.f32.xlu0 %v337
    %v339 = vpop.xlane.xlu0 %338
    %v340 = vsel %vm40, %v318, 0.0
    %341 = vadd.xlane.f32.xlu0 %v340
    %v342 = vpop.xlane.xlu0 %341
    %v343 = vsel %vm40, %v319, 0.0
    %344 = vadd.xlane.f32.xlu0 %v343
    %v345 = vpop.xlane.xlu0 %344
    %v346 = vsel %vm40, %v320, 0.0
    %347 = vadd.xlane.f32.xlu0 %v346
    %v348 = vpop.xlane.xlu0 %347
    %v349 = vsel %vm40, %v321, 0.0
    %350 = vadd.xlane.f32.xlu0 %v349
    %v351 = vpop.xlane.xlu0 %350
    %v352 = vsel %vm40, %v322, 0.0
    %353 = vadd.xlane.f32.xlu0 %v352
    %v354 = vpop.xlane.xlu0 %353
    %v355 = vsel %vm40, %v323, 0.0
    %356 = vadd.xlane.f32.xlu0 %v355
    %v357 = vpop.xlane.xlu0 %356
    %v358 = vsel %vm40, %v324, 0.0
    %359 = vadd.xlane.f32.xlu0 %v358
    %v360 = vpop.xlane.xlu0 %359
    %v361 = vsel %vm40, %v325, 0.0
    %362 = vadd.xlane.f32.xlu0 %v361
    %v363 = vpop.xlane.xlu0 %362
    %v364 = vsel %vm40, %v326, 0.0
    %365 = vadd.xlane.f32.xlu0 %v364
    %v366 = vpop.xlane.xlu0 %365
    %v367 = vsel %vm40, %v327, 0.0
    %368 = vadd.xlane.f32.xlu0 %v367
    %v369 = vpop.xlane.xlu0 %368
    %v370 = vsel %vm40, %v328, 0.0
    %371 = vadd.xlane.f32.xlu0 %v370
    %v372 = vpop.xlane.xlu0 %371
    %v373 = vsel %vm40, %v329, 0.0
    %374 = vadd.xlane.f32.xlu0 %v373
    %v375 = vpop.xlane.xlu0 %374
    %v376 = vsel %vm40, %v330, 0.0
    %377 = vadd.xlane.f32.xlu0 %v376
    %v378 = vpop.xlane.xlu0 %377
    %v379 = vmul.f32 %v333, %v282
    %v380 = vmul.f32 %v336, %v282
    %v381 = vmul.f32 %v339, %v282
    %v382 = vmul.f32 %v342, %v282
    %v383 = vmul.f32 %v345, %v282
    %v384 = vmul.f32 %v348, %v282
    %v385 = vmul.f32 %v351, %v282
    %v386 = vmul.f32 %v354, %v282
    %v387 = vmul.f32 %v357, %v282
    %v388 = vmul.f32 %v360, %v282
    %v389 = vmul.f32 %v363, %v282
    %v390 = vmul.f32 %v366, %v282
    %v391 = vmul.f32 %v369, %v282
    %v392 = vmul.f32 %v372, %v282
    %v393 = vmul.f32 %v375, %v282
    %v394 = vmul.f32 %v378, %v282
    %v395 = vadd.f32 %v379, 1e-05
    %v396 = vadd.f32 %v380, 1e-05
    %v397 = vadd.f32 %v381, 1e-05
    %v398 = vadd.f32 %v382, 1e-05
    %v399 = vadd.f32 %v383, 1e-05
    %v400 = vadd.f32 %v384, 1e-05
    %v401 = vadd.f32 %v385, 1e-05
    %v402 = vadd.f32 %v386, 1e-05
    %v403 = vadd.f32 %v387, 1e-05
    %v404 = vadd.f32 %v388, 1e-05
    %v405 = vadd.f32 %v389, 1e-05
    %v406 = vadd.f32 %v390, 1e-05
    %v407 = vadd.f32 %v391, 1e-05
    %v408 = vadd.f32 %v392, 1e-05
    %v409 = vadd.f32 %v393, 1e-05
    %v410 = vadd.f32 %v394, 1e-05
    %v411 = vrsqrt.pop %v395
    %v412 = vrsqrt.pop %v396
    %v413 = vrsqrt.pop %v397
    %v414 = vrsqrt.pop %v398
    %v415 = vrsqrt.pop %v399
    %v416 = vrsqrt.pop %v400
    %v417 = vrsqrt.pop %v401
    %v418 = vrsqrt.pop %v402
    %v419 = vrsqrt.pop %v403
    %v420 = vrsqrt.pop %v404
    %v421 = vrsqrt.pop %v405
    %v422 = vrsqrt.pop %v406
    %v423 = vrsqrt.pop %v407
    %v424 = vrsqrt.pop %v408
    %v425 = vrsqrt.pop %v409
    %v426 = vrsqrt.pop %v410
    %v427 = vmul.f32 %v299, %v411
    %v428 = vmul.f32 %v300, %v412
    %v429 = vmul.f32 %v301, %v413
    %v430 = vmul.f32 %v302, %v414
    %v431 = vmul.f32 %v303, %v415
    %v432 = vmul.f32 %v304, %v416
    %v433 = vmul.f32 %v305, %v417
    %v434 = vmul.f32 %v306, %v418
    %v435 = vmul.f32 %v307, %v419
    %v436 = vmul.f32 %v308, %v420
    %v437 = vmul.f32 %v309, %v421
    %v438 = vmul.f32 %v310, %v422
    %v439 = vmul.f32 %v311, %v423
    %v440 = vmul.f32 %v312, %v424
    %v441 = vmul.f32 %v313, %v425
    %v442 = vmul.f32 %v314, %v426
    %459 = vrot.lane.b32.xlu0 %v156, 96
    %v460 = vpop.permute.xlu0 %459
    %461 = vrot.lane.b32.xlu0 %v161, 96
    %v462 = vpop.permute.xlu0 %461
    %463 = vrot.lane.b32.xlu0 %v166, 96
    %v464 = vpop.permute.xlu0 %463
    %465 = vrot.lane.b32.xlu0 %v171, 96
    %v466 = vpop.permute.xlu0 %465
    %467 = vrot.lane.b32.xlu0 %v176, 96
    %v468 = vpop.permute.xlu0 %467
    %469 = vrot.lane.b32.xlu0 %v181, 96
    %v470 = vpop.permute.xlu0 %469
    %471 = vrot.lane.b32.xlu0 %v186, 96
    %v472 = vpop.permute.xlu0 %471
    %473 = vrot.lane.b32.xlu0 %v191, 96
    %v474 = vpop.permute.xlu0 %473
    %475 = vrot.lane.b32.xlu0 %v196, 96
    %v476 = vpop.permute.xlu0 %475
    %477 = vrot.lane.b32.xlu0 %v201, 96
    %v478 = vpop.permute.xlu0 %477
    %479 = vrot.lane.b32.xlu0 %v206, 96
    %v480 = vpop.permute.xlu0 %479
    %481 = vrot.lane.b32.xlu0 %v211, 96
    %v482 = vpop.permute.xlu0 %481
    %483 = vrot.lane.b32.xlu0 %v216, 96
    %v484 = vpop.permute.xlu0 %483
    %485 = vrot.lane.b32.xlu0 %v221, 96
    %v486 = vpop.permute.xlu0 %485
    %487 = vrot.lane.b32.xlu0 %v226, 96
    %v488 = vpop.permute.xlu0 %487
    %489 = vrot.lane.b32.xlu0 %v231, 96
    %v490 = vpop.permute.xlu0 %489
    %v507 = vsel %vm40, %v460, 0.0
    %508 = vadd.xlane.f32.xlu0 %v507
    %v509 = vpop.xlane.xlu0 %508
    %v510 = vsel %vm40, %v462, 0.0
    %511 = vadd.xlane.f32.xlu0 %v510
    %v512 = vpop.xlane.xlu0 %511
    %v513 = vsel %vm40, %v464, 0.0
    %514 = vadd.xlane.f32.xlu0 %v513
    %v515 = vpop.xlane.xlu0 %514
    %v516 = vsel %vm40, %v466, 0.0
    %517 = vadd.xlane.f32.xlu0 %v516
    %v518 = vpop.xlane.xlu0 %517
    %v519 = vsel %vm40, %v468, 0.0
    %520 = vadd.xlane.f32.xlu0 %v519
    %v521 = vpop.xlane.xlu0 %520
    %v522 = vsel %vm40, %v470, 0.0
    %523 = vadd.xlane.f32.xlu0 %v522
    %v524 = vpop.xlane.xlu0 %523
    %v525 = vsel %vm40, %v472, 0.0
    %526 = vadd.xlane.f32.xlu0 %v525
    %v527 = vpop.xlane.xlu0 %526
    %v528 = vsel %vm40, %v474, 0.0
    %529 = vadd.xlane.f32.xlu0 %v528
    %v530 = vpop.xlane.xlu0 %529
    %v531 = vsel %vm40, %v476, 0.0
    %532 = vadd.xlane.f32.xlu0 %v531
    %v533 = vpop.xlane.xlu0 %532
    %v534 = vsel %vm40, %v478, 0.0
    %535 = vadd.xlane.f32.xlu0 %v534
    %v536 = vpop.xlane.xlu0 %535
    %v537 = vsel %vm40, %v480, 0.0
    %538 = vadd.xlane.f32.xlu0 %v537
    %v539 = vpop.xlane.xlu0 %538
    %v540 = vsel %vm40, %v482, 0.0
    %541 = vadd.xlane.f32.xlu0 %v540
    %v542 = vpop.xlane.xlu0 %541
    %v543 = vsel %vm40, %v484, 0.0
    %544 = vadd.xlane.f32.xlu0 %v543
    %v545 = vpop.xlane.xlu0 %544
    %v546 = vsel %vm40, %v486, 0.0
    %547 = vadd.xlane.f32.xlu0 %v546
    %v548 = vpop.xlane.xlu0 %547
    %v549 = vsel %vm40, %v488, 0.0
    %550 = vadd.xlane.f32.xlu0 %v549
    %v551 = vpop.xlane.xlu0 %550
    %v552 = vsel %vm40, %v490, 0.0
    %553 = vadd.xlane.f32.xlu0 %v552
    %v554 = vpop.xlane.xlu0 %553
    %v555 = vmul.f32 %v509, %v282
    %v556 = vmul.f32 %v512, %v282
    %v557 = vmul.f32 %v515, %v282
    %v558 = vmul.f32 %v518, %v282
    %v559 = vmul.f32 %v521, %v282
    %v560 = vmul.f32 %v524, %v282
    %v561 = vmul.f32 %v527, %v282
    %v562 = vmul.f32 %v530, %v282
    %v563 = vmul.f32 %v533, %v282
    %v564 = vmul.f32 %v536, %v282
    %v565 = vmul.f32 %v539, %v282
    %v566 = vmul.f32 %v542, %v282
    %v567 = vmul.f32 %v545, %v282
    %v568 = vmul.f32 %v548, %v282
    %v569 = vmul.f32 %v551, %v282
    %v570 = vmul.f32 %v554, %v282
    %v571 = vsub.f32 %v156, %v555
    %v572 = vsub.f32 %v161, %v556
    %v573 = vsub.f32 %v166, %v557
    %v574 = vsub.f32 %v171, %v558
    %v575 = vsub.f32 %v176, %v559
    %v576 = vsub.f32 %v181, %v560
    %v577 = vsub.f32 %v186, %v561
    %v578 = vsub.f32 %v191, %v562
    %v579 = vsub.f32 %v196, %v563
    %v580 = vsub.f32 %v201, %v564
    %v581 = vsub.f32 %v206, %v565
    %v582 = vsub.f32 %v211, %v566
    %v583 = vsub.f32 %v216, %v567
    %v584 = vsub.f32 %v221, %v568
    %v585 = vsub.f32 %v226, %v569
    %v586 = vsub.f32 %v231, %v570
    %v587 = vmul.f32 %v571, %v571
    %v588 = vmul.f32 %v572, %v572
    %v589 = vmul.f32 %v573, %v573
    %v590 = vmul.f32 %v574, %v574
    %v591 = vmul.f32 %v575, %v575
    %v592 = vmul.f32 %v576, %v576
    %v593 = vmul.f32 %v577, %v577
    %v594 = vmul.f32 %v578, %v578
    %v595 = vmul.f32 %v579, %v579
    %v596 = vmul.f32 %v580, %v580
    %v597 = vmul.f32 %v581, %v581
    %v598 = vmul.f32 %v582, %v582
    %v599 = vmul.f32 %v583, %v583
    %v600 = vmul.f32 %v584, %v584
    %v601 = vmul.f32 %v585, %v585
    %v602 = vmul.f32 %v586, %v586
    %619 = vrot.lane.b32.xlu0 %v587, 96
    %v620 = vpop.permute.xlu0 %619
    %621 = vrot.lane.b32.xlu0 %v588, 96
    %v622 = vpop.permute.xlu0 %621
    %623 = vrot.lane.b32.xlu0 %v589, 96
    %v624 = vpop.permute.xlu0 %623
    %625 = vrot.lane.b32.xlu0 %v590, 96
    %v626 = vpop.permute.xlu0 %625
    %627 = vrot.lane.b32.xlu0 %v591, 96
    %v628 = vpop.permute.xlu0 %627
    %629 = vrot.lane.b32.xlu0 %v592, 96
    %v630 = vpop.permute.xlu0 %629
    %631 = vrot.lane.b32.xlu0 %v593, 96
    %v632 = vpop.permute.xlu0 %631
    %633 = vrot.lane.b32.xlu0 %v594, 96
    %v634 = vpop.permute.xlu0 %633
    %635 = vrot.lane.b32.xlu0 %v595, 96
    %v636 = vpop.permute.xlu0 %635
    %637 = vrot.lane.b32.xlu0 %v596, 96
    %v638 = vpop.permute.xlu0 %637
    %639 = vrot.lane.b32.xlu0 %v597, 96
    %v640 = vpop.permute.xlu0 %639
    %641 = vrot.lane.b32.xlu0 %v598, 96
    %v642 = vpop.permute.xlu0 %641
    %643 = vrot.lane.b32.xlu0 %v599, 96
    %v644 = vpop.permute.xlu0 %643
    %645 = vrot.lane.b32.xlu0 %v600, 96
    %v646 = vpop.permute.xlu0 %645
    %647 = vrot.lane.b32.xlu0 %v601, 96
    %v648 = vpop.permute.xlu0 %647
    %649 = vrot.lane.b32.xlu0 %v602, 96
    %v650 = vpop.permute.xlu0 %649
    %v667 = vsel %vm40, %v620, 0.0
    %668 = vadd.xlane.f32.xlu0 %v667
    %v669 = vpop.xlane.xlu0 %668
    %v670 = vsel %vm40, %v622, 0.0
    %671 = vadd.xlane.f32.xlu0 %v670
    %v672 = vpop.xlane.xlu0 %671
    %v673 = vsel %vm40, %v624, 0.0
    %674 = vadd.xlane.f32.xlu0 %v673
    %v675 = vpop.xlane.xlu0 %674
    %v676 = vsel %vm40, %v626, 0.0
    %677 = vadd.xlane.f32.xlu0 %v676
    %v678 = vpop.xlane.xlu0 %677
    %v679 = vsel %vm40, %v628, 0.0
    %680 = vadd.xlane.f32.xlu0 %v679
    %v681 = vpop.xlane.xlu0 %680
    %v682 = vsel %vm40, %v630, 0.0
    %683 = vadd.xlane.f32.xlu0 %v682
    %v684 = vpop.xlane.xlu0 %683
    %v685 = vsel %vm40, %v632, 0.0
    %686 = vadd.xlane.f32.xlu0 %v685
    %v687 = vpop.xlane.xlu0 %686
    %v688 = vsel %vm40, %v634, 0.0
    %689 = vadd.xlane.f32.xlu0 %v688
    %v690 = vpop.xlane.xlu0 %689
    %v691 = vsel %vm40, %v636, 0.0
    %692 = vadd.xlane.f32.xlu0 %v691
    %v693 = vpop.xlane.xlu0 %692
    %v694 = vsel %vm40, %v638, 0.0
    %695 = vadd.xlane.f32.xlu0 %v694
    %v696 = vpop.xlane.xlu0 %695
    %v697 = vsel %vm40, %v640, 0.0
    %698 = vadd.xlane.f32.xlu0 %v697
    %v699 = vpop.xlane.xlu0 %698
    %v700 = vsel %vm40, %v642, 0.0
    %701 = vadd.xlane.f32.xlu0 %v700
    %v702 = vpop.xlane.xlu0 %701
    %v703 = vsel %vm40, %v644, 0.0
    %704 = vadd.xlane.f32.xlu0 %v703
    %v705 = vpop.xlane.xlu0 %704
    %v706 = vsel %vm40, %v646, 0.0
    %707 = vadd.xlane.f32.xlu0 %v706
    %v708 = vpop.xlane.xlu0 %707
    %v709 = vsel %vm40, %v648, 0.0
    %710 = vadd.xlane.f32.xlu0 %v709
    %v711 = vpop.xlane.xlu0 %710
    %v712 = vsel %vm40, %v650, 0.0
    %713 = vadd.xlane.f32.xlu0 %v712
    %v714 = vpop.xlane.xlu0 %713
    %v715 = vmul.f32 %v669, %v282
    %v716 = vmul.f32 %v672, %v282
    %v717 = vmul.f32 %v675, %v282
    %v718 = vmul.f32 %v678, %v282
    %v719 = vmul.f32 %v681, %v282
    %v720 = vmul.f32 %v684, %v282
    %v721 = vmul.f32 %v687, %v282
    %v722 = vmul.f32 %v690, %v282
    %v723 = vmul.f32 %v693, %v282
    %v724 = vmul.f32 %v696, %v282
    %v725 = vmul.f32 %v699, %v282
    %v726 = vmul.f32 %v702, %v282
    %v727 = vmul.f32 %v705, %v282
    %v728 = vmul.f32 %v708, %v282
    %v729 = vmul.f32 %v711, %v282
    %v730 = vmul.f32 %v714, %v282
    %v731 = vadd.f32 %v715, 1e-05
    %v732 = vadd.f32 %v716, 1e-05
    %v733 = vadd.f32 %v717, 1e-05
    %v734 = vadd.f32 %v718, 1e-05
    %v735 = vadd.f32 %v719, 1e-05
    %v736 = vadd.f32 %v720, 1e-05
    %v737 = vadd.f32 %v721, 1e-05
    %v738 = vadd.f32 %v722, 1e-05
    %v739 = vadd.f32 %v723, 1e-05
    %v740 = vadd.f32 %v724, 1e-05
    %v741 = vadd.f32 %v725, 1e-05
    %v742 = vadd.f32 %v726, 1e-05
    %v743 = vadd.f32 %v727, 1e-05
    %v744 = vadd.f32 %v728, 1e-05
    %v745 = vadd.f32 %v729, 1e-05
    %v746 = vadd.f32 %v730, 1e-05
    %v747 = vrsqrt.pop %v731
    %v748 = vrsqrt.pop %v732
    %v749 = vrsqrt.pop %v733
    %v750 = vrsqrt.pop %v734
    %v751 = vrsqrt.pop %v735
    %v752 = vrsqrt.pop %v736
    %v753 = vrsqrt.pop %v737
    %v754 = vrsqrt.pop %v738
    %v755 = vrsqrt.pop %v739
    %v756 = vrsqrt.pop %v740
    %v757 = vrsqrt.pop %v741
    %v758 = vrsqrt.pop %v742
    %v759 = vrsqrt.pop %v743
    %v760 = vrsqrt.pop %v744
    %v761 = vrsqrt.pop %v745
    %v762 = vrsqrt.pop %v746
    %v763 = vmul.f32 %v571, %v747
    %v764 = vmul.f32 %v572, %v748
    %v765 = vmul.f32 %v573, %v749
    %v766 = vmul.f32 %v574, %v750
    %v767 = vmul.f32 %v575, %v751
    %v768 = vmul.f32 %v576, %v752
    %v769 = vmul.f32 %v577, %v753
    %v770 = vmul.f32 %v578, %v754
    %v771 = vmul.f32 %v579, %v755
    %v772 = vmul.f32 %v580, %v756
    %v773 = vmul.f32 %v581, %v757
    %v774 = vmul.f32 %v582, %v758
    %v775 = vmul.f32 %v583, %v759
    %v776 = vmul.f32 %v584, %v760
    %v777 = vmul.f32 %v585, %v761
    %v778 = vmul.f32 %v586, %v762
    %779 = vrot.lane.b32.xlu0 %v156, 64
    %v780 = vpop.permute.xlu0 %779
    %781 = vrot.lane.b32.xlu0 %v161, 64
    %v782 = vpop.permute.xlu0 %781
    %783 = vrot.lane.b32.xlu0 %v166, 64
    %v784 = vpop.permute.xlu0 %783
    %785 = vrot.lane.b32.xlu0 %v171, 64
    %v786 = vpop.permute.xlu0 %785
    %787 = vrot.lane.b32.xlu0 %v176, 64
    %v788 = vpop.permute.xlu0 %787
    %789 = vrot.lane.b32.xlu0 %v181, 64
    %v790 = vpop.permute.xlu0 %789
    %791 = vrot.lane.b32.xlu0 %v186, 64
    %v792 = vpop.permute.xlu0 %791
    %793 = vrot.lane.b32.xlu0 %v191, 64
    %v794 = vpop.permute.xlu0 %793
    %795 = vrot.lane.b32.xlu0 %v196, 64
    %v796 = vpop.permute.xlu0 %795
    %797 = vrot.lane.b32.xlu0 %v201, 64
    %v798 = vpop.permute.xlu0 %797
    %799 = vrot.lane.b32.xlu0 %v206, 64
    %v800 = vpop.permute.xlu0 %799
    %801 = vrot.lane.b32.xlu0 %v211, 64
    %v802 = vpop.permute.xlu0 %801
    %803 = vrot.lane.b32.xlu0 %v216, 64
    %v804 = vpop.permute.xlu0 %803
    %805 = vrot.lane.b32.xlu0 %v221, 64
    %v806 = vpop.permute.xlu0 %805
    %807 = vrot.lane.b32.xlu0 %v226, 64
    %v808 = vpop.permute.xlu0 %807
    %809 = vrot.lane.b32.xlu0 %v231, 64
    %v810 = vpop.permute.xlu0 %809
    %v827 = vsel %vm40, %v780, 0.0
    %828 = vadd.xlane.f32.xlu0 %v827
    %v829 = vpop.xlane.xlu0 %828
    %v830 = vsel %vm40, %v782, 0.0
    %831 = vadd.xlane.f32.xlu0 %v830
    %v832 = vpop.xlane.xlu0 %831
    %v833 = vsel %vm40, %v784, 0.0
    %834 = vadd.xlane.f32.xlu0 %v833
    %v835 = vpop.xlane.xlu0 %834
    %v836 = vsel %vm40, %v786, 0.0
    %837 = vadd.xlane.f32.xlu0 %v836
    %v838 = vpop.xlane.xlu0 %837
    %v839 = vsel %vm40, %v788, 0.0
    %840 = vadd.xlane.f32.xlu0 %v839
    %v841 = vpop.xlane.xlu0 %840
    %v842 = vsel %vm40, %v790, 0.0
    %843 = vadd.xlane.f32.xlu0 %v842
    %v844 = vpop.xlane.xlu0 %843
    %v845 = vsel %vm40, %v792, 0.0
    %846 = vadd.xlane.f32.xlu0 %v845
    %v847 = vpop.xlane.xlu0 %846
    %v848 = vsel %vm40, %v794, 0.0
    %849 = vadd.xlane.f32.xlu0 %v848
    %v850 = vpop.xlane.xlu0 %849
    %v851 = vsel %vm40, %v796, 0.0
    %852 = vadd.xlane.f32.xlu0 %v851
    %v853 = vpop.xlane.xlu0 %852
    %v854 = vsel %vm40, %v798, 0.0
    %855 = vadd.xlane.f32.xlu0 %v854
    %v856 = vpop.xlane.xlu0 %855
    %v857 = vsel %vm40, %v800, 0.0
    %858 = vadd.xlane.f32.xlu0 %v857
    %v859 = vpop.xlane.xlu0 %858
    %v860 = vsel %vm40, %v802, 0.0
    %861 = vadd.xlane.f32.xlu0 %v860
    %v862 = vpop.xlane.xlu0 %861
    %v863 = vsel %vm40, %v804, 0.0
    %864 = vadd.xlane.f32.xlu0 %v863
    %v865 = vpop.xlane.xlu0 %864
    %v866 = vsel %vm40, %v806, 0.0
    %867 = vadd.xlane.f32.xlu0 %v866
    %v868 = vpop.xlane.xlu0 %867
    %v869 = vsel %vm40, %v808, 0.0
    %870 = vadd.xlane.f32.xlu0 %v869
    %v871 = vpop.xlane.xlu0 %870
    %v872 = vsel %vm40, %v810, 0.0
    %873 = vadd.xlane.f32.xlu0 %v872
    %v874 = vpop.xlane.xlu0 %873
    %v875 = vmul.f32 %v829, %v282
    %v876 = vmul.f32 %v832, %v282
    %v877 = vmul.f32 %v835, %v282
    %v878 = vmul.f32 %v838, %v282
    %v879 = vmul.f32 %v841, %v282
    %v880 = vmul.f32 %v844, %v282
    %v881 = vmul.f32 %v847, %v282
    %v882 = vmul.f32 %v850, %v282
    %v883 = vmul.f32 %v853, %v282
    %v884 = vmul.f32 %v856, %v282
    %v885 = vmul.f32 %v859, %v282
    %v886 = vmul.f32 %v862, %v282
    %v887 = vmul.f32 %v865, %v282
    %v888 = vmul.f32 %v868, %v282
    %v889 = vmul.f32 %v871, %v282
    %v890 = vmul.f32 %v874, %v282
    %v891 = vsub.f32 %v156, %v875
    %v892 = vsub.f32 %v161, %v876
    %v893 = vsub.f32 %v166, %v877
    %v894 = vsub.f32 %v171, %v878
    %v895 = vsub.f32 %v176, %v879
    %v896 = vsub.f32 %v181, %v880
    %v897 = vsub.f32 %v186, %v881
    %v898 = vsub.f32 %v191, %v882
    %v899 = vsub.f32 %v196, %v883
    %v900 = vsub.f32 %v201, %v884
    %v901 = vsub.f32 %v206, %v885
    %v902 = vsub.f32 %v211, %v886
    %v903 = vsub.f32 %v216, %v887
    %v904 = vsub.f32 %v221, %v888
    %v905 = vsub.f32 %v226, %v889
    %v906 = vsub.f32 %v231, %v890
    %v907 = vmul.f32 %v891, %v891
    %v908 = vmul.f32 %v892, %v892
    %v909 = vmul.f32 %v893, %v893
    %v910 = vmul.f32 %v894, %v894
    %v911 = vmul.f32 %v895, %v895
    %v912 = vmul.f32 %v896, %v896
    %v913 = vmul.f32 %v897, %v897
    %v914 = vmul.f32 %v898, %v898
    %v915 = vmul.f32 %v899, %v899
    %v916 = vmul.f32 %v900, %v900
    %v917 = vmul.f32 %v901, %v901
    %v918 = vmul.f32 %v902, %v902
    %v919 = vmul.f32 %v903, %v903
    %v920 = vmul.f32 %v904, %v904
    %v921 = vmul.f32 %v905, %v905
    %v922 = vmul.f32 %v906, %v906
    %939 = vrot.lane.b32.xlu0 %v907, 64
    %v940 = vpop.permute.xlu0 %939
    %941 = vrot.lane.b32.xlu0 %v908, 64
    %v942 = vpop.permute.xlu0 %941
    %943 = vrot.lane.b32.xlu0 %v909, 64
    %v944 = vpop.permute.xlu0 %943
    %945 = vrot.lane.b32.xlu0 %v910, 64
    %v946 = vpop.permute.xlu0 %945
    %947 = vrot.lane.b32.xlu0 %v911, 64
    %v948 = vpop.permute.xlu0 %947
    %949 = vrot.lane.b32.xlu0 %v912, 64
    %v950 = vpop.permute.xlu0 %949
    %951 = vrot.lane.b32.xlu0 %v913, 64
    %v952 = vpop.permute.xlu0 %951
    %953 = vrot.lane.b32.xlu0 %v914, 64
    %v954 = vpop.permute.xlu0 %953
    %955 = vrot.lane.b32.xlu0 %v915, 64
    %v956 = vpop.permute.xlu0 %955
    %957 = vrot.lane.b32.xlu0 %v916, 64
    %v958 = vpop.permute.xlu0 %957
    %959 = vrot.lane.b32.xlu0 %v917, 64
    %v960 = vpop.permute.xlu0 %959
    %961 = vrot.lane.b32.xlu0 %v918, 64
    %v962 = vpop.permute.xlu0 %961
    %963 = vrot.lane.b32.xlu0 %v919, 64
    %v964 = vpop.permute.xlu0 %963
    %965 = vrot.lane.b32.xlu0 %v920, 64
    %v966 = vpop.permute.xlu0 %965
    %967 = vrot.lane.b32.xlu0 %v921, 64
    %v968 = vpop.permute.xlu0 %967
    %969 = vrot.lane.b32.xlu0 %v922, 64
    %v970 = vpop.permute.xlu0 %969
    %v987 = vsel %vm40, %v940, 0.0
    %988 = vadd.xlane.f32.xlu0 %v987
    %v989 = vpop.xlane.xlu0 %988
    %v990 = vsel %vm40, %v942, 0.0
    %991 = vadd.xlane.f32.xlu0 %v990
    %v992 = vpop.xlane.xlu0 %991
    %v993 = vsel %vm40, %v944, 0.0
    %994 = vadd.xlane.f32.xlu0 %v993
    %v995 = vpop.xlane.xlu0 %994
    %v996 = vsel %vm40, %v946, 0.0
    %997 = vadd.xlane.f32.xlu0 %v996
    %v998 = vpop.xlane.xlu0 %997
    %v999 = vsel %vm40, %v948, 0.0
    %1000 = vadd.xlane.f32.xlu0 %v999
    %v1001 = vpop.xlane.xlu0 %1000
    %v1002 = vsel %vm40, %v950, 0.0
    %1003 = vadd.xlane.f32.xlu0 %v1002
    %v1004 = vpop.xlane.xlu0 %1003
    %v1005 = vsel %vm40, %v952, 0.0
    %1006 = vadd.xlane.f32.xlu0 %v1005
    %v1007 = vpop.xlane.xlu0 %1006
    %v1008 = vsel %vm40, %v954, 0.0
    %1009 = vadd.xlane.f32.xlu0 %v1008
    %v1010 = vpop.xlane.xlu0 %1009
    %v1011 = vsel %vm40, %v956, 0.0
    %1012 = vadd.xlane.f32.xlu0 %v1011
    %v1013 = vpop.xlane.xlu0 %1012
    %v1014 = vsel %vm40, %v958, 0.0
    %1015 = vadd.xlane.f32.xlu0 %v1014
    %v1016 = vpop.xlane.xlu0 %1015
    %v1017 = vsel %vm40, %v960, 0.0
    %1018 = vadd.xlane.f32.xlu0 %v1017
    %v1019 = vpop.xlane.xlu0 %1018
    %v1020 = vsel %vm40, %v962, 0.0
    %1021 = vadd.xlane.f32.xlu0 %v1020
    %v1022 = vpop.xlane.xlu0 %1021
    %v1023 = vsel %vm40, %v964, 0.0
    %1024 = vadd.xlane.f32.xlu0 %v1023
    %v1025 = vpop.xlane.xlu0 %1024
    %v1026 = vsel %vm40, %v966, 0.0
    %1027 = vadd.xlane.f32.xlu0 %v1026
    %v1028 = vpop.xlane.xlu0 %1027
    %v1029 = vsel %vm40, %v968, 0.0
    %1030 = vadd.xlane.f32.xlu0 %v1029
    %v1031 = vpop.xlane.xlu0 %1030
    %v1032 = vsel %vm40, %v970, 0.0
    %1033 = vadd.xlane.f32.xlu0 %v1032
    %v1034 = vpop.xlane.xlu0 %1033
    %v1035 = vmul.f32 %v989, %v282
    %v1036 = vmul.f32 %v992, %v282
    %v1037 = vmul.f32 %v995, %v282
    %v1038 = vmul.f32 %v998, %v282
    %v1039 = vmul.f32 %v1001, %v282
    %v1040 = vmul.f32 %v1004, %v282
    %v1041 = vmul.f32 %v1007, %v282
    %v1042 = vmul.f32 %v1010, %v282
    %v1043 = vmul.f32 %v1013, %v282
    %v1044 = vmul.f32 %v1016, %v282
    %v1045 = vmul.f32 %v1019, %v282
    %v1046 = vmul.f32 %v1022, %v282
    %v1047 = vmul.f32 %v1025, %v282
    %v1048 = vmul.f32 %v1028, %v282
    %v1049 = vmul.f32 %v1031, %v282
    %v1050 = vmul.f32 %v1034, %v282
    %v1051 = vadd.f32 %v1035, 1e-05
    %v1052 = vadd.f32 %v1036, 1e-05
    %v1053 = vadd.f32 %v1037, 1e-05
    %v1054 = vadd.f32 %v1038, 1e-05
    %v1055 = vadd.f32 %v1039, 1e-05
    %v1056 = vadd.f32 %v1040, 1e-05
    %v1057 = vadd.f32 %v1041, 1e-05
    %v1058 = vadd.f32 %v1042, 1e-05
    %v1059 = vadd.f32 %v1043, 1e-05
    %v1060 = vadd.f32 %v1044, 1e-05
    %v1061 = vadd.f32 %v1045, 1e-05
    %v1062 = vadd.f32 %v1046, 1e-05
    %v1063 = vadd.f32 %v1047, 1e-05
    %v1064 = vadd.f32 %v1048, 1e-05
    %v1065 = vadd.f32 %v1049, 1e-05
    %v1066 = vadd.f32 %v1050, 1e-05
    %v1067 = vrsqrt.pop %v1051
    %v1068 = vrsqrt.pop %v1052
    %v1069 = vrsqrt.pop %v1053
    %v1070 = vrsqrt.pop %v1054
    %v1071 = vrsqrt.pop %v1055
    %v1072 = vrsqrt.pop %v1056
    %v1073 = vrsqrt.pop %v1057
    %v1074 = vrsqrt.pop %v1058
    %v1075 = vrsqrt.pop %v1059
    %v1076 = vrsqrt.pop %v1060
    %v1077 = vrsqrt.pop %v1061
    %v1078 = vrsqrt.pop %v1062
    %v1079 = vrsqrt.pop %v1063
    %v1080 = vrsqrt.pop %v1064
    %v1081 = vrsqrt.pop %v1065
    %v1082 = vrsqrt.pop %v1066
    %v1083 = vmul.f32 %v891, %v1067
    %v1084 = vmul.f32 %v892, %v1068
    %v1085 = vmul.f32 %v893, %v1069
    %v1086 = vmul.f32 %v894, %v1070
    %v1087 = vmul.f32 %v895, %v1071
    %v1088 = vmul.f32 %v896, %v1072
    %v1089 = vmul.f32 %v897, %v1073
    %v1090 = vmul.f32 %v898, %v1074
    %v1091 = vmul.f32 %v899, %v1075
    %v1092 = vmul.f32 %v900, %v1076
    %v1093 = vmul.f32 %v901, %v1077
    %v1094 = vmul.f32 %v902, %v1078
    %v1095 = vmul.f32 %v903, %v1079
    %v1096 = vmul.f32 %v904, %v1080
    %v1097 = vmul.f32 %v905, %v1081
    %v1098 = vmul.f32 %v906, %v1082
    %1099 = vrot.lane.b32.xlu0 %v156, 32
    %v1100 = vpop.permute.xlu0 %1099
    %1101 = vrot.lane.b32.xlu0 %v161, 32
    %v1102 = vpop.permute.xlu0 %1101
    %1103 = vrot.lane.b32.xlu0 %v166, 32
    %v1104 = vpop.permute.xlu0 %1103
    %1105 = vrot.lane.b32.xlu0 %v171, 32
    %v1106 = vpop.permute.xlu0 %1105
    %1107 = vrot.lane.b32.xlu0 %v176, 32
    %v1108 = vpop.permute.xlu0 %1107
    %1109 = vrot.lane.b32.xlu0 %v181, 32
    %v1110 = vpop.permute.xlu0 %1109
    %1111 = vrot.lane.b32.xlu0 %v186, 32
    %v1112 = vpop.permute.xlu0 %1111
    %1113 = vrot.lane.b32.xlu0 %v191, 32
    %v1114 = vpop.permute.xlu0 %1113
    %1115 = vrot.lane.b32.xlu0 %v196, 32
    %v1116 = vpop.permute.xlu0 %1115
    %1117 = vrot.lane.b32.xlu0 %v201, 32
    %v1118 = vpop.permute.xlu0 %1117
    %1119 = vrot.lane.b32.xlu0 %v206, 32
    %v1120 = vpop.permute.xlu0 %1119
    %1121 = vrot.lane.b32.xlu0 %v211, 32
    %v1122 = vpop.permute.xlu0 %1121
    %1123 = vrot.lane.b32.xlu0 %v216, 32
    %v1124 = vpop.permute.xlu0 %1123
    %1125 = vrot.lane.b32.xlu0 %v221, 32
    %v1126 = vpop.permute.xlu0 %1125
    %1127 = vrot.lane.b32.xlu0 %v226, 32
    %v1128 = vpop.permute.xlu0 %1127
    %1129 = vrot.lane.b32.xlu0 %v231, 32
    %v1130 = vpop.permute.xlu0 %1129
    %v1147 = vsel %vm40, %v1100, 0.0
    %1148 = vadd.xlane.f32.xlu0 %v1147
    %v1149 = vpop.xlane.xlu0 %1148
    %v1150 = vsel %vm40, %v1102, 0.0
    %1151 = vadd.xlane.f32.xlu0 %v1150
    %v1152 = vpop.xlane.xlu0 %1151
    %v1153 = vsel %vm40, %v1104, 0.0
    %1154 = vadd.xlane.f32.xlu0 %v1153
    %v1155 = vpop.xlane.xlu0 %1154
    %v1156 = vsel %vm40, %v1106, 0.0
    %1157 = vadd.xlane.f32.xlu0 %v1156
    %v1158 = vpop.xlane.xlu0 %1157
    %v1159 = vsel %vm40, %v1108, 0.0
    %1160 = vadd.xlane.f32.xlu0 %v1159
    %v1161 = vpop.xlane.xlu0 %1160
    %v1162 = vsel %vm40, %v1110, 0.0
    %1163 = vadd.xlane.f32.xlu0 %v1162
    %v1164 = vpop.xlane.xlu0 %1163
    %v1165 = vsel %vm40, %v1112, 0.0
    %1166 = vadd.xlane.f32.xlu0 %v1165
    %v1167 = vpop.xlane.xlu0 %1166
    %v1168 = vsel %vm40, %v1114, 0.0
    %1169 = vadd.xlane.f32.xlu0 %v1168
    %v1170 = vpop.xlane.xlu0 %1169
    %v1171 = vsel %vm40, %v1116, 0.0
    %1172 = vadd.xlane.f32.xlu0 %v1171
    %v1173 = vpop.xlane.xlu0 %1172
    %v1174 = vsel %vm40, %v1118, 0.0
    %1175 = vadd.xlane.f32.xlu0 %v1174
    %v1176 = vpop.xlane.xlu0 %1175
    %v1177 = vsel %vm40, %v1120, 0.0
    %1178 = vadd.xlane.f32.xlu0 %v1177
    %v1179 = vpop.xlane.xlu0 %1178
    %v1180 = vsel %vm40, %v1122, 0.0
    %1181 = vadd.xlane.f32.xlu0 %v1180
    %v1182 = vpop.xlane.xlu0 %1181
    %v1183 = vsel %vm40, %v1124, 0.0
    %1184 = vadd.xlane.f32.xlu0 %v1183
    %v1185 = vpop.xlane.xlu0 %1184
    %v1186 = vsel %vm40, %v1126, 0.0
    %1187 = vadd.xlane.f32.xlu0 %v1186
    %v1188 = vpop.xlane.xlu0 %1187
    %v1189 = vsel %vm40, %v1128, 0.0
    %1190 = vadd.xlane.f32.xlu0 %v1189
    %v1191 = vpop.xlane.xlu0 %1190
    %v1192 = vsel %vm40, %v1130, 0.0
    %1193 = vadd.xlane.f32.xlu0 %v1192
    %v1194 = vpop.xlane.xlu0 %1193
    %v1195 = vmul.f32 %v1149, %v282
    %v1196 = vmul.f32 %v1152, %v282
    %v1197 = vmul.f32 %v1155, %v282
    %v1198 = vmul.f32 %v1158, %v282
    %v1199 = vmul.f32 %v1161, %v282
    %v1200 = vmul.f32 %v1164, %v282
    %v1201 = vmul.f32 %v1167, %v282
    %v1202 = vmul.f32 %v1170, %v282
    %v1203 = vmul.f32 %v1173, %v282
    %v1204 = vmul.f32 %v1176, %v282
    %v1205 = vmul.f32 %v1179, %v282
    %v1206 = vmul.f32 %v1182, %v282
    %v1207 = vmul.f32 %v1185, %v282
    %v1208 = vmul.f32 %v1188, %v282
    %v1209 = vmul.f32 %v1191, %v282
    %v1210 = vmul.f32 %v1194, %v282
    %v1211 = vsub.f32 %v156, %v1195
    %v1212 = vsub.f32 %v161, %v1196
    %v1213 = vsub.f32 %v166, %v1197
    %v1214 = vsub.f32 %v171, %v1198
    %v1215 = vsub.f32 %v176, %v1199
    %v1216 = vsub.f32 %v181, %v1200
    %v1217 = vsub.f32 %v186, %v1201
    %v1218 = vsub.f32 %v191, %v1202
    %v1219 = vsub.f32 %v196, %v1203
    %v1220 = vsub.f32 %v201, %v1204
    %v1221 = vsub.f32 %v206, %v1205
    %v1222 = vsub.f32 %v211, %v1206
    %v1223 = vsub.f32 %v216, %v1207
    %v1224 = vsub.f32 %v221, %v1208
    %v1225 = vsub.f32 %v226, %v1209
    %v1226 = vsub.f32 %v231, %v1210
    %v1227 = vmul.f32 %v1211, %v1211
    %v1228 = vmul.f32 %v1212, %v1212
    %v1229 = vmul.f32 %v1213, %v1213
    %v1230 = vmul.f32 %v1214, %v1214
    %v1231 = vmul.f32 %v1215, %v1215
    %v1232 = vmul.f32 %v1216, %v1216
    %v1233 = vmul.f32 %v1217, %v1217
    %v1234 = vmul.f32 %v1218, %v1218
    %v1235 = vmul.f32 %v1219, %v1219
    %v1236 = vmul.f32 %v1220, %v1220
    %v1237 = vmul.f32 %v1221, %v1221
    %v1238 = vmul.f32 %v1222, %v1222
    %v1239 = vmul.f32 %v1223, %v1223
    %v1240 = vmul.f32 %v1224, %v1224
    %v1241 = vmul.f32 %v1225, %v1225
    %v1242 = vmul.f32 %v1226, %v1226
    %1259 = vrot.lane.b32.xlu0 %v1227, 32
    %v1260 = vpop.permute.xlu0 %1259
    %1261 = vrot.lane.b32.xlu0 %v1228, 32
    %v1262 = vpop.permute.xlu0 %1261
    %1263 = vrot.lane.b32.xlu0 %v1229, 32
    %v1264 = vpop.permute.xlu0 %1263
    %1265 = vrot.lane.b32.xlu0 %v1230, 32
    %v1266 = vpop.permute.xlu0 %1265
    %1267 = vrot.lane.b32.xlu0 %v1231, 32
    %v1268 = vpop.permute.xlu0 %1267
    %1269 = vrot.lane.b32.xlu0 %v1232, 32
    %v1270 = vpop.permute.xlu0 %1269
    %1271 = vrot.lane.b32.xlu0 %v1233, 32
    %v1272 = vpop.permute.xlu0 %1271
    %1273 = vrot.lane.b32.xlu0 %v1234, 32
    %v1274 = vpop.permute.xlu0 %1273
    %1275 = vrot.lane.b32.xlu0 %v1235, 32
    %v1276 = vpop.permute.xlu0 %1275
    %1277 = vrot.lane.b32.xlu0 %v1236, 32
    %v1278 = vpop.permute.xlu0 %1277
    %1279 = vrot.lane.b32.xlu0 %v1237, 32
    %v1280 = vpop.permute.xlu0 %1279
    %1281 = vrot.lane.b32.xlu0 %v1238, 32
    %v1282 = vpop.permute.xlu0 %1281
    %1283 = vrot.lane.b32.xlu0 %v1239, 32
    %v1284 = vpop.permute.xlu0 %1283
    %1285 = vrot.lane.b32.xlu0 %v1240, 32
    %v1286 = vpop.permute.xlu0 %1285
    %1287 = vrot.lane.b32.xlu0 %v1241, 32
    %v1288 = vpop.permute.xlu0 %1287
    %1289 = vrot.lane.b32.xlu0 %v1242, 32
    %v1290 = vpop.permute.xlu0 %1289
    %v1307 = vsel %vm40, %v1260, 0.0
    %1308 = vadd.xlane.f32.xlu0 %v1307
    %v1309 = vpop.xlane.xlu0 %1308
    %v1310 = vsel %vm40, %v1262, 0.0
    %1311 = vadd.xlane.f32.xlu0 %v1310
    %v1312 = vpop.xlane.xlu0 %1311
    %v1313 = vsel %vm40, %v1264, 0.0
    %1314 = vadd.xlane.f32.xlu0 %v1313
    %v1315 = vpop.xlane.xlu0 %1314
    %v1316 = vsel %vm40, %v1266, 0.0
    %1317 = vadd.xlane.f32.xlu0 %v1316
    %v1318 = vpop.xlane.xlu0 %1317
    %v1319 = vsel %vm40, %v1268, 0.0
    %1320 = vadd.xlane.f32.xlu0 %v1319
    %v1321 = vpop.xlane.xlu0 %1320
    %v1322 = vsel %vm40, %v1270, 0.0
    %1323 = vadd.xlane.f32.xlu0 %v1322
    %v1324 = vpop.xlane.xlu0 %1323
    %v1325 = vsel %vm40, %v1272, 0.0
    %1326 = vadd.xlane.f32.xlu0 %v1325
    %v1327 = vpop.xlane.xlu0 %1326
    %v1328 = vsel %vm40, %v1274, 0.0
    %1329 = vadd.xlane.f32.xlu0 %v1328
    %v1330 = vpop.xlane.xlu0 %1329
    %v1331 = vsel %vm40, %v1276, 0.0
    %1332 = vadd.xlane.f32.xlu0 %v1331
    %v1333 = vpop.xlane.xlu0 %1332
    %v1334 = vsel %vm40, %v1278, 0.0
    %1335 = vadd.xlane.f32.xlu0 %v1334
    %v1336 = vpop.xlane.xlu0 %1335
    %v1337 = vsel %vm40, %v1280, 0.0
    %1338 = vadd.xlane.f32.xlu0 %v1337
    %v1339 = vpop.xlane.xlu0 %1338
    %v1340 = vsel %vm40, %v1282, 0.0
    %1341 = vadd.xlane.f32.xlu0 %v1340
    %v1342 = vpop.xlane.xlu0 %1341
    %v1343 = vsel %vm40, %v1284, 0.0
    %1344 = vadd.xlane.f32.xlu0 %v1343
    %v1345 = vpop.xlane.xlu0 %1344
    %v1346 = vsel %vm40, %v1286, 0.0
    %1347 = vadd.xlane.f32.xlu0 %v1346
    %v1348 = vpop.xlane.xlu0 %1347
    %v1349 = vsel %vm40, %v1288, 0.0
    %1350 = vadd.xlane.f32.xlu0 %v1349
    %v1351 = vpop.xlane.xlu0 %1350
    %v1352 = vsel %vm40, %v1290, 0.0
    %1353 = vadd.xlane.f32.xlu0 %v1352
    %v1354 = vpop.xlane.xlu0 %1353
    %v1355 = vmul.f32 %v1309, %v282
    %v1356 = vmul.f32 %v1312, %v282
    %v1357 = vmul.f32 %v1315, %v282
    %v1358 = vmul.f32 %v1318, %v282
    %v1359 = vmul.f32 %v1321, %v282
    %v1360 = vmul.f32 %v1324, %v282
    %v1361 = vmul.f32 %v1327, %v282
    %v1362 = vmul.f32 %v1330, %v282
    %v1363 = vmul.f32 %v1333, %v282
    %v1364 = vmul.f32 %v1336, %v282
    %v1365 = vmul.f32 %v1339, %v282
    %v1366 = vmul.f32 %v1342, %v282
    %v1367 = vmul.f32 %v1345, %v282
    %v1368 = vmul.f32 %v1348, %v282
    %v1369 = vmul.f32 %v1351, %v282
    %v1370 = vmul.f32 %v1354, %v282
    %v1371 = vadd.f32 %v1355, 1e-05
    %v1372 = vadd.f32 %v1356, 1e-05
    %v1373 = vadd.f32 %v1357, 1e-05
    %v1374 = vadd.f32 %v1358, 1e-05
    %v1375 = vadd.f32 %v1359, 1e-05
    %v1376 = vadd.f32 %v1360, 1e-05
    %v1377 = vadd.f32 %v1361, 1e-05
    %v1378 = vadd.f32 %v1362, 1e-05
    %v1379 = vadd.f32 %v1363, 1e-05
    %v1380 = vadd.f32 %v1364, 1e-05
    %v1381 = vadd.f32 %v1365, 1e-05
    %v1382 = vadd.f32 %v1366, 1e-05
    %v1383 = vadd.f32 %v1367, 1e-05
    %v1384 = vadd.f32 %v1368, 1e-05
    %v1385 = vadd.f32 %v1369, 1e-05
    %v1386 = vadd.f32 %v1370, 1e-05
    %v1387 = vrsqrt.pop %v1371
    %v1388 = vrsqrt.pop %v1372
    %v1389 = vrsqrt.pop %v1373
    %v1390 = vrsqrt.pop %v1374
    %v1391 = vrsqrt.pop %v1375
    %v1392 = vrsqrt.pop %v1376
    %v1393 = vrsqrt.pop %v1377
    %v1394 = vrsqrt.pop %v1378
    %v1395 = vrsqrt.pop %v1379
    %v1396 = vrsqrt.pop %v1380
    %v1397 = vrsqrt.pop %v1381
    %v1398 = vrsqrt.pop %v1382
    %v1399 = vrsqrt.pop %v1383
    %v1400 = vrsqrt.pop %v1384
    %v1401 = vrsqrt.pop %v1385
    %v1402 = vrsqrt.pop %v1386
    %v1403 = vmul.f32 %v1211, %v1387
    %v1404 = vmul.f32 %v1212, %v1388
    %v1405 = vmul.f32 %v1213, %v1389
    %v1406 = vmul.f32 %v1214, %v1390
    %v1407 = vmul.f32 %v1215, %v1391
    %v1408 = vmul.f32 %v1216, %v1392
    %v1409 = vmul.f32 %v1217, %v1393
    %v1410 = vmul.f32 %v1218, %v1394
    %v1411 = vmul.f32 %v1219, %v1395
    %v1412 = vmul.f32 %v1220, %v1396
    %v1413 = vmul.f32 %v1221, %v1397
    %v1414 = vmul.f32 %v1222, %v1398
    %v1415 = vmul.f32 %v1223, %v1399
    %v1416 = vmul.f32 %v1224, %v1400
    %v1417 = vmul.f32 %v1225, %v1401
    %v1418 = vmul.f32 %v1226, %v1402
    %v1419 = vsel %vm40, %v427, %v763
    %v1420 = vsel %vm40, %v428, %v764
    %v1421 = vsel %vm40, %v429, %v765
    %v1422 = vsel %vm40, %v430, %v766
    %v1423 = vsel %vm40, %v431, %v767
    %v1424 = vsel %vm40, %v432, %v768
    %v1425 = vsel %vm40, %v433, %v769
    %v1426 = vsel %vm40, %v434, %v770
    %v1427 = vsel %vm40, %v435, %v771
    %v1428 = vsel %vm40, %v436, %v772
    %v1429 = vsel %vm40, %v437, %v773
    %v1430 = vsel %vm40, %v438, %v774
    %v1431 = vsel %vm40, %v439, %v775
    %v1432 = vsel %vm40, %v440, %v776
    %v1433 = vsel %vm40, %v441, %v777
    %v1434 = vsel %vm40, %v442, %v778
    %vm1435 = vcmask 523264
    %v1436 = vsel %vm1435, %v1419, %v1083
    %v1437 = vsel %vm1435, %v1420, %v1084
    %v1438 = vsel %vm1435, %v1421, %v1085
    %v1439 = vsel %vm1435, %v1422, %v1086
    %v1440 = vsel %vm1435, %v1423, %v1087
    %v1441 = vsel %vm1435, %v1424, %v1088
    %v1442 = vsel %vm1435, %v1425, %v1089
    %v1443 = vsel %vm1435, %v1426, %v1090
    %v1444 = vsel %vm1435, %v1427, %v1091
    %v1445 = vsel %vm1435, %v1428, %v1092
    %v1446 = vsel %vm1435, %v1429, %v1093
    %v1447 = vsel %vm1435, %v1430, %v1094
    %v1448 = vsel %vm1435, %v1431, %v1095
    %v1449 = vsel %vm1435, %v1432, %v1096
    %v1450 = vsel %vm1435, %v1433, %v1097
    %v1451 = vsel %vm1435, %v1434, %v1098
    %vm1452 = vcmask 785408
    %v1453 = vsel %vm1452, %v1436, %v1403
    %v1454 = vsel %vm1452, %v1437, %v1404
    %v1455 = vsel %vm1452, %v1438, %v1405
    %v1456 = vsel %vm1452, %v1439, %v1406
    %v1457 = vsel %vm1452, %v1440, %v1407
    %v1458 = vsel %vm1452, %v1441, %v1408
    %v1459 = vsel %vm1452, %v1442, %v1409
    %v1460 = vsel %vm1452, %v1443, %v1410
    %v1461 = vsel %vm1452, %v1444, %v1411
    %v1462 = vsel %vm1452, %v1445, %v1412
    %v1463 = vsel %vm1452, %v1446, %v1413
    %v1464 = vsel %vm1452, %v1447, %v1414
    %v1465 = vsel %vm1452, %v1448, %v1415
    %v1466 = vsel %vm1452, %v1449, %v1416
    %v1467 = vsel %vm1452, %v1450, %v1417
    %v1468 = vsel %vm1452, %v1451, %v1418
    %v1470 = vlaneseq
    %v1471 = vshrl.u32 %v1470, 7
    %v1472 = vsub.s32 0, %v1471
    %v1473 = vrot.slane %v34, %v1472
    %v1475 = vmul.f32 %v1453, %v1473
    %v1476 = vmul.f32 %v1454, %v1473
    %v1477 = vmul.f32 %v1455, %v1473
    %v1478 = vmul.f32 %v1456, %v1473
    %v1479 = vmul.f32 %v1457, %v1473
    %v1480 = vmul.f32 %v1458, %v1473
    %v1481 = vmul.f32 %v1459, %v1473
    %v1482 = vmul.f32 %v1460, %v1473
    %v1483 = vmul.f32 %v1461, %v1473
    %v1484 = vmul.f32 %v1462, %v1473
    %v1485 = vmul.f32 %v1463, %v1473
    %v1486 = vmul.f32 %v1464, %v1473
    %v1487 = vmul.f32 %v1465, %v1473
    %v1488 = vmul.f32 %v1466, %v1473
    %v1489 = vmul.f32 %v1467, %v1473
    %v1490 = vmul.f32 %v1468, %v1473
    %v1492 = vlaneseq
    %v1493 = vshrl.u32 %v1492, 7
    %v1494 = vsub.s32 0, %v1493
    %v1495 = vrot.slane %v35, %v1494
    %v1497 = vadd.f32 %v1475, %v1495
    %v1498 = vadd.f32 %v1476, %v1495
    %v1499 = vadd.f32 %v1477, %v1495
    %v1500 = vadd.f32 %v1478, %v1495
    %v1501 = vadd.f32 %v1479, %v1495
    %v1502 = vadd.f32 %v1480, %v1495
    %v1503 = vadd.f32 %v1481, %v1495
    %v1504 = vadd.f32 %v1482, %v1495
    %v1505 = vadd.f32 %v1483, %v1495
    %v1506 = vadd.f32 %v1484, %v1495
    %v1507 = vadd.f32 %v1485, %v1495
    %v1508 = vadd.f32 %v1486, %v1495
    %v1509 = vadd.f32 %v1487, %v1495
    %v1510 = vadd.f32 %v1488, %v1495
    %v1511 = vadd.f32 %v1489, %v1495
    %v1512 = vadd.f32 %v1490, %v1495
    %1513 = vst [vmem:[#allocation2] sm:$0xff] %v1497
    %1514 = vst [vmem:[#allocation2 + $0x20] sm:$0xff] %v1498
    %1515 = vst [vmem:[#allocation2 + $0x40] sm:$0xff] %v1499
    %1516 = vst [vmem:[#allocation2 + $0x60] sm:$0xff] %v1500
    %1517 = vst [vmem:[#allocation2 + $0x80] sm:$0xff] %v1501
    %1518 = vst [vmem:[#allocation2 + $0xa0] sm:$0xff] %v1502
    %1519 = vst [vmem:[#allocation2 + $0xc0] sm:$0xff] %v1503
    %1520 = vst [vmem:[#allocation2 + $0xe0] sm:$0xff] %v1504
    %1521 = vst [vmem:[#allocation2 + $0x100] sm:$0xff] %v1505
    %1522 = vst [vmem:[#allocation2 + $0x120] sm:$0xff] %v1506
    %1523 = vst [vmem:[#allocation2 + $0x140] sm:$0xff] %v1507
    %1524 = vst [vmem:[#allocation2 + $0x160] sm:$0xff] %v1508
    %1525 = vst [vmem:[#allocation2 + $0x180] sm:$0xff] %v1509
    %1526 = vst [vmem:[#allocation2 + $0x1a0] sm:$0xff] %v1510
    %1527 = vst [vmem:[#allocation2 + $0x1c0] sm:$0xff] %v1511
    %1528 = vst [vmem:[#allocation2 + $0x1e0] sm:$0xff] %v1512
    %s1529 = scalar_lea.vmem %s1, 32
    %v1530 = vld [vmem:[%s1529] sm:$0xff]
    %v1531 = vld [vmem:[%s1529 + $0x8] sm:$0xff]
    %v1532 = vld [vmem:[%s1529 + $0x10] sm:$0xff]
    %v1533 = vld [vmem:[%s1529 + $0x18] sm:$0xff]
    %1534 = vmatprep.subr.mxu0 0.0
    %1535 = vmatpush1.msra.mxu0 %v1530
    %1536 = vmatprep.subr.mxu0 0.0
    %1537 = vmatpush1.msra.mxu0 %v1531
    %1538 = vmatprep.subr.mxu0 0.0
    %1539 = vmatpush1.msra.mxu0 %v1532
    %1540 = vmatprep.subr.mxu0 0.0
    %1541 = vmatpush1.msra.mxu0 %v1533
    %1542 = vmatprep.subr.mxu0 0.0
    %1543 = vmatpush1.msra.mxu0 0.0
    %1544 = vmatprep.subr.mxu0 0.0
    %1545 = vmatpush1.msra.mxu0 0.0
    %1546 = vmatprep.subr.mxu0 0.0
    %1547 = vmatpush1.msra.mxu0 0.0
    %1548 = vmatprep.subr.mxu0 0.0
    %1549 = vmatpush1.msra.mxu0 0.0
    %1550 = vmatprep.subr.mxu0 0.0
    %1551 = vmatpush1.msra.mxu0 0.0
    %1552 = vmatprep.subr.mxu0 0.0
    %1553 = vmatpush1.msra.mxu0 0.0
    %1554 = vmatprep.subr.mxu0 0.0
    %1555 = vmatpush1.msra.mxu0 0.0
    %1556 = vmatprep.subr.mxu0 0.0
    %1557 = vmatpush1.msra.mxu0 0.0
    %1558 = vmatprep.subr.mxu0 0.0
    %1559 = vmatpush1.msra.mxu0 0.0
    %1560 = vmatprep.subr.mxu0 0.0
    %1561 = vmatpush1.msra.mxu0 0.0
    %1562 = vmatprep.subr.mxu0 0.0
    %1563 = vmatpush1.msra.mxu0 0.0
    %1564 = vmatprep.subr.mxu0 0.0
    %1565 = vmatpush1.msra.mxu0 0.0
    %1566 = vmatprep.subr.mxu0 0.0
    %1567 = vmatpush1.msra.mxu0 0.0
    %1568 = vmatprep.subr.mxu0 0.0
    %1569 = vmatpush1.msra.mxu0 0.0
    %1570 = vmatprep.subr.mxu0 0.0
    %1571 = vmatpush1.msra.mxu0 0.0
    %1572 = vmatprep.subr.mxu0 0.0
    %1573 = vmatpush1.msra.mxu0 0.0
    %1574 = vmatprep.subr.mxu0 0.0
    %1575 = vmatpush1.msra.mxu0 0.0
    %1576 = vmatprep.subr.mxu0 0.0
    %1577 = vmatpush1.msra.mxu0 0.0
    %1578 = vmatprep.subr.mxu0 0.0
    %1579 = vmatpush1.msra.mxu0 0.0
    %1580 = vmatprep.subr.mxu0 0.0
    %1581 = vmatpush1.msra.mxu0 0.0
    %1582 = vmatprep.subr.mxu0 0.0
    %1583 = vmatpush1.msra.mxu0 0.0
    %1584 = vmatprep.subr.mxu0 0.0
    %1585 = vmatpush1.msra.mxu0 0.0
    %1586 = vmatprep.subr.mxu0 0.0
    %1587 = vmatpush1.msra.mxu0 0.0
    %1588 = vmatprep.subr.mxu0 0.0
    %1589 = vmatpush1.msra.mxu0 0.0
    %1590 = vmatprep.subr.mxu0 0.0
    %1591 = vmatpush1.msra.mxu0 0.0
    %1592 = vmatprep.subr.mxu0 0.0
    %1593 = vmatpush1.msra.mxu0 0.0
    %1594 = vmatprep.subr.mxu0 0.0
    %1595 = vmatpush1.msra.mxu0 0.0
    %1596 = vmatprep.subr.mxu0 0.0
    %1597 = vmatpush1.msra.mxu0 0.0
    %1598 = vmatprep.mubr.f32.mxu0 0.0
    %1599 = vmatmul.mubr.f32.gmra.mrb[0].mxu0 %v42
    %v1600 = vpop.f32.mrb[0].mxu0
    %v1601 = vadd.f32 0.0, %v1600
    %v1602 = vpop.f32.mrb[0].mxu0
    %1603 = vmatprep.mubr.f32.mxu0 0.0
    %1604 = vmatmul.mubr.f32.gmra.mrb[0].mxu0 %v45
    %v1605 = vpop.f32.mrb[0].mxu0
    %v1606 = vadd.f32 0.0, %v1605
    %v1607 = vpop.f32.mrb[0].mxu0
    %1608 = vmatprep.mubr.f32.mxu0 0.0
    %1609 = vmatmul.mubr.f32.gmra.mrb[0].mxu0 %v48
    %v1610 = vpop.f32.mrb[0].mxu0
    %v1611 = vadd.f32 0.0, %v1610
    %v1612 = vpop.f32.mrb[0].mxu0
    %1613 = vmatprep.mubr.f32.mxu0 0.0
    %1614 = vmatmul.mubr.f32.gmra.mrb[0].mxu0 %v51
    %v1615 = vpop.f32.mrb[0].mxu0
    %v1616 = vadd.f32 0.0, %v1615
    %v1617 = vpop.f32.mrb[0].mxu0
    %1618 = vmatprep.mubr.f32.mxu0 0.0
    %1619 = vmatmul.mubr.f32.gmra.mrb[0].mxu0 %v54
    %v1620 = vpop.f32.mrb[0].mxu0
    %v1621 = vadd.f32 0.0, %v1620
    %v1622 = vpop.f32.mrb[0].mxu0
    %1623 = vmatprep.mubr.f32.mxu0 0.0
    %1624 = vmatmul.mubr.f32.gmra.mrb[0].mxu0 %v57
    %v1625 = vpop.f32.mrb[0].mxu0
    %v1626 = vadd.f32 0.0, %v1625
    %v1627 = vpop.f32.mrb[0].mxu0
    %1628 = vmatprep.mubr.f32.mxu0 0.0
    %1629 = vmatmul.mubr.f32.gmra.mrb[0].mxu0 %v60
    %v1630 = vpop.f32.mrb[0].mxu0
    %v1631 = vadd.f32 0.0, %v1630
    %v1632 = vpop.f32.mrb[0].mxu0
    %1633 = vmatprep.mubr.f32.mxu0 0.0
    %1634 = vmatmul.mubr.f32.gmra.mrb[0].mxu0 %v63
    %v1635 = vpop.f32.mrb[0].mxu0
    %v1636 = vadd.f32 0.0, %v1635
    %v1637 = vpop.f32.mrb[0].mxu0
    %1638 = vmatprep.mubr.f32.mxu0 0.0
    %1639 = vmatmul.mubr.f32.gmra.mrb[0].mxu0 %v66
    %v1640 = vpop.f32.mrb[0].mxu0
    %v1641 = vadd.f32 0.0, %v1640
    %v1642 = vpop.f32.mrb[0].mxu0
    %1643 = vmatprep.mubr.f32.mxu0 0.0
    %1644 = vmatmul.mubr.f32.gmra.mrb[0].mxu0 %v69
    %v1645 = vpop.f32.mrb[0].mxu0
    %v1646 = vadd.f32 0.0, %v1645
    %v1647 = vpop.f32.mrb[0].mxu0
    %1648 = vmatprep.mubr.f32.mxu0 0.0
    %1649 = vmatmul.mubr.f32.gmra.mrb[0].mxu0 %v72
    %v1650 = vpop.f32.mrb[0].mxu0
    %v1651 = vadd.f32 0.0, %v1650
    %v1652 = vpop.f32.mrb[0].mxu0
    %1653 = vmatprep.mubr.f32.mxu0 0.0
    %1654 = vmatmul.mubr.f32.gmra.mrb[0].mxu0 %v75
    %v1655 = vpop.f32.mrb[0].mxu0
    %v1656 = vadd.f32 0.0, %v1655
    %v1657 = vpop.f32.mrb[0].mxu0
    %1658 = vmatprep.mubr.f32.mxu0 0.0
    %1659 = vmatmul.mubr.f32.gmra.mrb[0].mxu0 %v78
    %v1660 = vpop.f32.mrb[0].mxu0
    %v1661 = vadd.f32 0.0, %v1660
    %v1662 = vpop.f32.mrb[0].mxu0
    %1663 = vmatprep.mubr.f32.mxu0 0.0
    %1664 = vmatmul.mubr.f32.gmra.mrb[0].mxu0 %v81
    %v1665 = vpop.f32.mrb[0].mxu0
    %v1666 = vadd.f32 0.0, %v1665
    %v1667 = vpop.f32.mrb[0].mxu0
    %1668 = vmatprep.mubr.f32.mxu0 0.0
    %1669 = vmatmul.mubr.f32.gmra.mrb[0].mxu0 %v84
    %v1670 = vpop.f32.mrb[0].mxu0
    %v1671 = vadd.f32 0.0, %v1670
    %v1672 = vpop.f32.mrb[0].mxu0
    %1673 = vmatprep.mubr.f32.mxu0 0.0
    %1674 = vmatmul.mubr.f32.gmra.mrb[0].mxu0 %v87
    %v1675 = vpop.f32.mrb[0].mxu0
    %v1676 = vadd.f32 0.0, %v1675
    %v1677 = vpop.f32.mrb[0].mxu0
    %1678 = vdwg.mxu0
    %v1679 = vsel %vm40, %v1601, 0.0
    %1680 = vadd.xlane.f32.xlu0 %v1679
    %v1681 = vpop.xlane.xlu0 %1680
    %v1682 = vsel %vm40, %v1606, 0.0
    %1683 = vadd.xlane.f32.xlu0 %v1682
    %v1684 = vpop.xlane.xlu0 %1683
    %v1685 = vsel %vm40, %v1611, 0.0
    %1686 = vadd.xlane.f32.xlu0 %v1685
    %v1687 = vpop.xlane.xlu0 %1686
    %v1688 = vsel %vm40, %v1616, 0.0
    %1689 = vadd.xlane.f32.xlu0 %v1688
    %v1690 = vpop.xlane.xlu0 %1689
    %v1691 = vsel %vm40, %v1621, 0.0
    %1692 = vadd.xlane.f32.xlu0 %v1691
    %v1693 = vpop.xlane.xlu0 %1692
    %v1694 = vsel %vm40, %v1626, 0.0
    %1695 = vadd.xlane.f32.xlu0 %v1694
    %v1696 = vpop.xlane.xlu0 %1695
    %v1697 = vsel %vm40, %v1631, 0.0
    %1698 = vadd.xlane.f32.xlu0 %v1697
    %v1699 = vpop.xlane.xlu0 %1698
    %v1700 = vsel %vm40, %v1636, 0.0
    %1701 = vadd.xlane.f32.xlu0 %v1700
    %v1702 = vpop.xlane.xlu0 %1701
    %v1703 = vsel %vm40, %v1641, 0.0
    %1704 = vadd.xlane.f32.xlu0 %v1703
    %v1705 = vpop.xlane.xlu0 %1704
    %v1706 = vsel %vm40, %v1646, 0.0
    %1707 = vadd.xlane.f32.xlu0 %v1706
    %v1708 = vpop.xlane.xlu0 %1707
    %v1709 = vsel %vm40, %v1651, 0.0
    %1710 = vadd.xlane.f32.xlu0 %v1709
    %v1711 = vpop.xlane.xlu0 %1710
    %v1712 = vsel %vm40, %v1656, 0.0
    %1713 = vadd.xlane.f32.xlu0 %v1712
    %v1714 = vpop.xlane.xlu0 %1713
    %v1715 = vsel %vm40, %v1661, 0.0
    %1716 = vadd.xlane.f32.xlu0 %v1715
    %v1717 = vpop.xlane.xlu0 %1716
    %v1718 = vsel %vm40, %v1666, 0.0
    %1719 = vadd.xlane.f32.xlu0 %v1718
    %v1720 = vpop.xlane.xlu0 %1719
    %v1721 = vsel %vm40, %v1671, 0.0
    %1722 = vadd.xlane.f32.xlu0 %v1721
    %v1723 = vpop.xlane.xlu0 %1722
    %v1724 = vsel %vm40, %v1676, 0.0
    %1725 = vadd.xlane.f32.xlu0 %v1724
    %v1726 = vpop.xlane.xlu0 %1725
    %v1727 = vmul.f32 %v1681, %v282
    %v1728 = vmul.f32 %v1684, %v282
    %v1729 = vmul.f32 %v1687, %v282
    %v1730 = vmul.f32 %v1690, %v282
    %v1731 = vmul.f32 %v1693, %v282
    %v1732 = vmul.f32 %v1696, %v282
    %v1733 = vmul.f32 %v1699, %v282
    %v1734 = vmul.f32 %v1702, %v282
    %v1735 = vmul.f32 %v1705, %v282
    %v1736 = vmul.f32 %v1708, %v282
    %v1737 = vmul.f32 %v1711, %v282
    %v1738 = vmul.f32 %v1714, %v282
    %v1739 = vmul.f32 %v1717, %v282
    %v1740 = vmul.f32 %v1720, %v282
    %v1741 = vmul.f32 %v1723, %v282
    %v1742 = vmul.f32 %v1726, %v282
    %v1743 = vsub.f32 %v1601, %v1727
    %v1744 = vsub.f32 %v1606, %v1728
    %v1745 = vsub.f32 %v1611, %v1729
    %v1746 = vsub.f32 %v1616, %v1730
    %v1747 = vsub.f32 %v1621, %v1731
    %v1748 = vsub.f32 %v1626, %v1732
    %v1749 = vsub.f32 %v1631, %v1733
    %v1750 = vsub.f32 %v1636, %v1734
    %v1751 = vsub.f32 %v1641, %v1735
    %v1752 = vsub.f32 %v1646, %v1736
    %v1753 = vsub.f32 %v1651, %v1737
    %v1754 = vsub.f32 %v1656, %v1738
    %v1755 = vsub.f32 %v1661, %v1739
    %v1756 = vsub.f32 %v1666, %v1740
    %v1757 = vsub.f32 %v1671, %v1741
    %v1758 = vsub.f32 %v1676, %v1742
    %v1759 = vmul.f32 %v1743, %v1743
    %v1760 = vmul.f32 %v1744, %v1744
    %v1761 = vmul.f32 %v1745, %v1745
    %v1762 = vmul.f32 %v1746, %v1746
    %v1763 = vmul.f32 %v1747, %v1747
    %v1764 = vmul.f32 %v1748, %v1748
    %v1765 = vmul.f32 %v1749, %v1749
    %v1766 = vmul.f32 %v1750, %v1750
    %v1767 = vmul.f32 %v1751, %v1751
    %v1768 = vmul.f32 %v1752, %v1752
    %v1769 = vmul.f32 %v1753, %v1753
    %v1770 = vmul.f32 %v1754, %v1754
    %v1771 = vmul.f32 %v1755, %v1755
    %v1772 = vmul.f32 %v1756, %v1756
    %v1773 = vmul.f32 %v1757, %v1757
    %v1774 = vmul.f32 %v1758, %v1758
    %v1775 = vsel %vm40, %v1759, 0.0
    %1776 = vadd.xlane.f32.xlu0 %v1775
    %v1777 = vpop.xlane.xlu0 %1776
    %v1778 = vsel %vm40, %v1760, 0.0
    %1779 = vadd.xlane.f32.xlu0 %v1778
    %v1780 = vpop.xlane.xlu0 %1779
    %v1781 = vsel %vm40, %v1761, 0.0
    %1782 = vadd.xlane.f32.xlu0 %v1781
    %v1783 = vpop.xlane.xlu0 %1782
    %v1784 = vsel %vm40, %v1762, 0.0
    %1785 = vadd.xlane.f32.xlu0 %v1784
    %v1786 = vpop.xlane.xlu0 %1785
    %v1787 = vsel %vm40, %v1763, 0.0
    %1788 = vadd.xlane.f32.xlu0 %v1787
    %v1789 = vpop.xlane.xlu0 %1788
    %v1790 = vsel %vm40, %v1764, 0.0
    %1791 = vadd.xlane.f32.xlu0 %v1790
    %v1792 = vpop.xlane.xlu0 %1791
    %v1793 = vsel %vm40, %v1765, 0.0
    %1794 = vadd.xlane.f32.xlu0 %v1793
    %v1795 = vpop.xlane.xlu0 %1794
    %v1796 = vsel %vm40, %v1766, 0.0
    %1797 = vadd.xlane.f32.xlu0 %v1796
    %v1798 = vpop.xlane.xlu0 %1797
    %v1799 = vsel %vm40, %v1767, 0.0
    %1800 = vadd.xlane.f32.xlu0 %v1799
    %v1801 = vpop.xlane.xlu0 %1800
    %v1802 = vsel %vm40, %v1768, 0.0
    %1803 = vadd.xlane.f32.xlu0 %v1802
    %v1804 = vpop.xlane.xlu0 %1803
    %v1805 = vsel %vm40, %v1769, 0.0
    %1806 = vadd.xlane.f32.xlu0 %v1805
    %v1807 = vpop.xlane.xlu0 %1806
    %v1808 = vsel %vm40, %v1770, 0.0
    %1809 = vadd.xlane.f32.xlu0 %v1808
    %v1810 = vpop.xlane.xlu0 %1809
    %v1811 = vsel %vm40, %v1771, 0.0
    %1812 = vadd.xlane.f32.xlu0 %v1811
    %v1813 = vpop.xlane.xlu0 %1812
    %v1814 = vsel %vm40, %v1772, 0.0
    %1815 = vadd.xlane.f32.xlu0 %v1814
    %v1816 = vpop.xlane.xlu0 %1815
    %v1817 = vsel %vm40, %v1773, 0.0
    %1818 = vadd.xlane.f32.xlu0 %v1817
    %v1819 = vpop.xlane.xlu0 %1818
    %v1820 = vsel %vm40, %v1774, 0.0
    %1821 = vadd.xlane.f32.xlu0 %v1820
    %v1822 = vpop.xlane.xlu0 %1821
    %v1823 = vmul.f32 %v1777, %v282
    %v1824 = vmul.f32 %v1780, %v282
    %v1825 = vmul.f32 %v1783, %v282
    %v1826 = vmul.f32 %v1786, %v282
    %v1827 = vmul.f32 %v1789, %v282
    %v1828 = vmul.f32 %v1792, %v282
    %v1829 = vmul.f32 %v1795, %v282
    %v1830 = vmul.f32 %v1798, %v282
    %v1831 = vmul.f32 %v1801, %v282
    %v1832 = vmul.f32 %v1804, %v282
    %v1833 = vmul.f32 %v1807, %v282
    %v1834 = vmul.f32 %v1810, %v282
    %v1835 = vmul.f32 %v1813, %v282
    %v1836 = vmul.f32 %v1816, %v282
    %v1837 = vmul.f32 %v1819, %v282
    %v1838 = vmul.f32 %v1822, %v282
    %v1839 = vadd.f32 %v1823, 1e-05
    %v1840 = vadd.f32 %v1824, 1e-05
    %v1841 = vadd.f32 %v1825, 1e-05
    %v1842 = vadd.f32 %v1826, 1e-05
    %v1843 = vadd.f32 %v1827, 1e-05
    %v1844 = vadd.f32 %v1828, 1e-05
    %v1845 = vadd.f32 %v1829, 1e-05
    %v1846 = vadd.f32 %v1830, 1e-05
    %v1847 = vadd.f32 %v1831, 1e-05
    %v1848 = vadd.f32 %v1832, 1e-05
    %v1849 = vadd.f32 %v1833, 1e-05
    %v1850 = vadd.f32 %v1834, 1e-05
    %v1851 = vadd.f32 %v1835, 1e-05
    %v1852 = vadd.f32 %v1836, 1e-05
    %v1853 = vadd.f32 %v1837, 1e-05
    %v1854 = vadd.f32 %v1838, 1e-05
    %v1855 = vrsqrt.pop %v1839
    %v1856 = vrsqrt.pop %v1840
    %v1857 = vrsqrt.pop %v1841
    %v1858 = vrsqrt.pop %v1842
    %v1859 = vrsqrt.pop %v1843
    %v1860 = vrsqrt.pop %v1844
    %v1861 = vrsqrt.pop %v1845
    %v1862 = vrsqrt.pop %v1846
    %v1863 = vrsqrt.pop %v1847
    %v1864 = vrsqrt.pop %v1848
    %v1865 = vrsqrt.pop %v1849
    %v1866 = vrsqrt.pop %v1850
    %v1867 = vrsqrt.pop %v1851
    %v1868 = vrsqrt.pop %v1852
    %v1869 = vrsqrt.pop %v1853
    %v1870 = vrsqrt.pop %v1854
    %v1871 = vmul.f32 %v1743, %v1855
    %v1872 = vmul.f32 %v1744, %v1856
    %v1873 = vmul.f32 %v1745, %v1857
    %v1874 = vmul.f32 %v1746, %v1858
    %v1875 = vmul.f32 %v1747, %v1859
    %v1876 = vmul.f32 %v1748, %v1860
    %v1877 = vmul.f32 %v1749, %v1861
    %v1878 = vmul.f32 %v1750, %v1862
    %v1879 = vmul.f32 %v1751, %v1863
    %v1880 = vmul.f32 %v1752, %v1864
    %v1881 = vmul.f32 %v1753, %v1865
    %v1882 = vmul.f32 %v1754, %v1866
    %v1883 = vmul.f32 %v1755, %v1867
    %v1884 = vmul.f32 %v1756, %v1868
    %v1885 = vmul.f32 %v1757, %v1869
    %v1886 = vmul.f32 %v1758, %v1870
    %1903 = vrot.lane.b32.xlu0 %v1601, 96
    %v1904 = vpop.permute.xlu0 %1903
    %1905 = vrot.lane.b32.xlu0 %v1606, 96
    %v1906 = vpop.permute.xlu0 %1905
    %1907 = vrot.lane.b32.xlu0 %v1611, 96
    %v1908 = vpop.permute.xlu0 %1907
    %1909 = vrot.lane.b32.xlu0 %v1616, 96
    %v1910 = vpop.permute.xlu0 %1909
    %1911 = vrot.lane.b32.xlu0 %v1621, 96
    %v1912 = vpop.permute.xlu0 %1911
    %1913 = vrot.lane.b32.xlu0 %v1626, 96
    %v1914 = vpop.permute.xlu0 %1913
    %1915 = vrot.lane.b32.xlu0 %v1631, 96
    %v1916 = vpop.permute.xlu0 %1915
    %1917 = vrot.lane.b32.xlu0 %v1636, 96
    %v1918 = vpop.permute.xlu0 %1917
    %1919 = vrot.lane.b32.xlu0 %v1641, 96
    %v1920 = vpop.permute.xlu0 %1919
    %1921 = vrot.lane.b32.xlu0 %v1646, 96
    %v1922 = vpop.permute.xlu0 %1921
    %1923 = vrot.lane.b32.xlu0 %v1651, 96
    %v1924 = vpop.permute.xlu0 %1923
    %1925 = vrot.lane.b32.xlu0 %v1656, 96
    %v1926 = vpop.permute.xlu0 %1925
    %1927 = vrot.lane.b32.xlu0 %v1661, 96
    %v1928 = vpop.permute.xlu0 %1927
    %1929 = vrot.lane.b32.xlu0 %v1666, 96
    %v1930 = vpop.permute.xlu0 %1929
    %1931 = vrot.lane.b32.xlu0 %v1671, 96
    %v1932 = vpop.permute.xlu0 %1931
    %1933 = vrot.lane.b32.xlu0 %v1676, 96
    %v1934 = vpop.permute.xlu0 %1933
    %v1951 = vsel %vm40, %v1904, 0.0
    %1952 = vadd.xlane.f32.xlu0 %v1951
    %v1953 = vpop.xlane.xlu0 %1952
    %v1954 = vsel %vm40, %v1906, 0.0
    %1955 = vadd.xlane.f32.xlu0 %v1954
    %v1956 = vpop.xlane.xlu0 %1955
    %v1957 = vsel %vm40, %v1908, 0.0
    %1958 = vadd.xlane.f32.xlu0 %v1957
    %v1959 = vpop.xlane.xlu0 %1958
    %v1960 = vsel %vm40, %v1910, 0.0
    %1961 = vadd.xlane.f32.xlu0 %v1960
    %v1962 = vpop.xlane.xlu0 %1961
    %v1963 = vsel %vm40, %v1912, 0.0
    %1964 = vadd.xlane.f32.xlu0 %v1963
    %v1965 = vpop.xlane.xlu0 %1964
    %v1966 = vsel %vm40, %v1914, 0.0
    %1967 = vadd.xlane.f32.xlu0 %v1966
    %v1968 = vpop.xlane.xlu0 %1967
    %v1969 = vsel %vm40, %v1916, 0.0
    %1970 = vadd.xlane.f32.xlu0 %v1969
    %v1971 = vpop.xlane.xlu0 %1970
    %v1972 = vsel %vm40, %v1918, 0.0
    %1973 = vadd.xlane.f32.xlu0 %v1972
    %v1974 = vpop.xlane.xlu0 %1973
    %v1975 = vsel %vm40, %v1920, 0.0
    %1976 = vadd.xlane.f32.xlu0 %v1975
    %v1977 = vpop.xlane.xlu0 %1976
    %v1978 = vsel %vm40, %v1922, 0.0
    %1979 = vadd.xlane.f32.xlu0 %v1978
    %v1980 = vpop.xlane.xlu0 %1979
    %v1981 = vsel %vm40, %v1924, 0.0
    %1982 = vadd.xlane.f32.xlu0 %v1981
    %v1983 = vpop.xlane.xlu0 %1982
    %v1984 = vsel %vm40, %v1926, 0.0
    %1985 = vadd.xlane.f32.xlu0 %v1984
    %v1986 = vpop.xlane.xlu0 %1985
    %v1987 = vsel %vm40, %v1928, 0.0
    %1988 = vadd.xlane.f32.xlu0 %v1987
    %v1989 = vpop.xlane.xlu0 %1988
    %v1990 = vsel %vm40, %v1930, 0.0
    %1991 = vadd.xlane.f32.xlu0 %v1990
    %v1992 = vpop.xlane.xlu0 %1991
    %v1993 = vsel %vm40, %v1932, 0.0
    %1994 = vadd.xlane.f32.xlu0 %v1993
    %v1995 = vpop.xlane.xlu0 %1994
    %v1996 = vsel %vm40, %v1934, 0.0
    %1997 = vadd.xlane.f32.xlu0 %v1996
    %v1998 = vpop.xlane.xlu0 %1997
    %v1999 = vmul.f32 %v1953, %v282
    %v2000 = vmul.f32 %v1956, %v282
    %v2001 = vmul.f32 %v1959, %v282
    %v2002 = vmul.f32 %v1962, %v282
    %v2003 = vmul.f32 %v1965, %v282
    %v2004 = vmul.f32 %v1968, %v282
    %v2005 = vmul.f32 %v1971, %v282
    %v2006 = vmul.f32 %v1974, %v282
    %v2007 = vmul.f32 %v1977, %v282
    %v2008 = vmul.f32 %v1980, %v282
    %v2009 = vmul.f32 %v1983, %v282
    %v2010 = vmul.f32 %v1986, %v282
    %v2011 = vmul.f32 %v1989, %v282
    %v2012 = vmul.f32 %v1992, %v282
    %v2013 = vmul.f32 %v1995, %v282
    %v2014 = vmul.f32 %v1998, %v282
    %v2015 = vsub.f32 %v1601, %v1999
    %v2016 = vsub.f32 %v1606, %v2000
    %v2017 = vsub.f32 %v1611, %v2001
    %v2018 = vsub.f32 %v1616, %v2002
    %v2019 = vsub.f32 %v1621, %v2003
    %v2020 = vsub.f32 %v1626, %v2004
    %v2021 = vsub.f32 %v1631, %v2005
    %v2022 = vsub.f32 %v1636, %v2006
    %v2023 = vsub.f32 %v1641, %v2007
    %v2024 = vsub.f32 %v1646, %v2008
    %v2025 = vsub.f32 %v1651, %v2009
    %v2026 = vsub.f32 %v1656, %v2010
    %v2027 = vsub.f32 %v1661, %v2011
    %v2028 = vsub.f32 %v1666, %v2012
    %v2029 = vsub.f32 %v1671, %v2013
    %v2030 = vsub.f32 %v1676, %v2014
    %v2031 = vmul.f32 %v2015, %v2015
    %v2032 = vmul.f32 %v2016, %v2016
    %v2033 = vmul.f32 %v2017, %v2017
    %v2034 = vmul.f32 %v2018, %v2018
    %v2035 = vmul.f32 %v2019, %v2019
    %v2036 = vmul.f32 %v2020, %v2020
    %v2037 = vmul.f32 %v2021, %v2021
    %v2038 = vmul.f32 %v2022, %v2022
    %v2039 = vmul.f32 %v2023, %v2023
    %v2040 = vmul.f32 %v2024, %v2024
    %v2041 = vmul.f32 %v2025, %v2025
    %v2042 = vmul.f32 %v2026, %v2026
    %v2043 = vmul.f32 %v2027, %v2027
    %v2044 = vmul.f32 %v2028, %v2028
    %v2045 = vmul.f32 %v2029, %v2029
    %v2046 = vmul.f32 %v2030, %v2030
    %2063 = vrot.lane.b32.xlu0 %v2031, 96
    %v2064 = vpop.permute.xlu0 %2063
    %2065 = vrot.lane.b32.xlu0 %v2032, 96
    %v2066 = vpop.permute.xlu0 %2065
    %2067 = vrot.lane.b32.xlu0 %v2033, 96
    %v2068 = vpop.permute.xlu0 %2067
    %2069 = vrot.lane.b32.xlu0 %v2034, 96
    %v2070 = vpop.permute.xlu0 %2069
    %2071 = vrot.lane.b32.xlu0 %v2035, 96
    %v2072 = vpop.permute.xlu0 %2071
    %2073 = vrot.lane.b32.xlu0 %v2036, 96
    %v2074 = vpop.permute.xlu0 %2073
    %2075 = vrot.lane.b32.xlu0 %v2037, 96
    %v2076 = vpop.permute.xlu0 %2075
    %2077 = vrot.lane.b32.xlu0 %v2038, 96
    %v2078 = vpop.permute.xlu0 %2077
    %2079 = vrot.lane.b32.xlu0 %v2039, 96
    %v2080 = vpop.permute.xlu0 %2079
    %2081 = vrot.lane.b32.xlu0 %v2040, 96
    %v2082 = vpop.permute.xlu0 %2081
    %2083 = vrot.lane.b32.xlu0 %v2041, 96
    %v2084 = vpop.permute.xlu0 %2083
    %2085 = vrot.lane.b32.xlu0 %v2042, 96
    %v2086 = vpop.permute.xlu0 %2085
    %2087 = vrot.lane.b32.xlu0 %v2043, 96
    %v2088 = vpop.permute.xlu0 %2087
    %2089 = vrot.lane.b32.xlu0 %v2044, 96
    %v2090 = vpop.permute.xlu0 %2089
    %2091 = vrot.lane.b32.xlu0 %v2045, 96
    %v2092 = vpop.permute.xlu0 %2091
    %2093 = vrot.lane.b32.xlu0 %v2046, 96
    %v2094 = vpop.permute.xlu0 %2093
    %v2111 = vsel %vm40, %v2064, 0.0
    %2112 = vadd.xlane.f32.xlu0 %v2111
    %v2113 = vpop.xlane.xlu0 %2112
    %v2114 = vsel %vm40, %v2066, 0.0
    %2115 = vadd.xlane.f32.xlu0 %v2114
    %v2116 = vpop.xlane.xlu0 %2115
    %v2117 = vsel %vm40, %v2068, 0.0
    %2118 = vadd.xlane.f32.xlu0 %v2117
    %v2119 = vpop.xlane.xlu0 %2118
    %v2120 = vsel %vm40, %v2070, 0.0
    %2121 = vadd.xlane.f32.xlu0 %v2120
    %v2122 = vpop.xlane.xlu0 %2121
    %v2123 = vsel %vm40, %v2072, 0.0
    %2124 = vadd.xlane.f32.xlu0 %v2123
    %v2125 = vpop.xlane.xlu0 %2124
    %v2126 = vsel %vm40, %v2074, 0.0
    %2127 = vadd.xlane.f32.xlu0 %v2126
    %v2128 = vpop.xlane.xlu0 %2127
    %v2129 = vsel %vm40, %v2076, 0.0
    %2130 = vadd.xlane.f32.xlu0 %v2129
    %v2131 = vpop.xlane.xlu0 %2130
    %v2132 = vsel %vm40, %v2078, 0.0
    %2133 = vadd.xlane.f32.xlu0 %v2132
    %v2134 = vpop.xlane.xlu0 %2133
    %v2135 = vsel %vm40, %v2080, 0.0
    %2136 = vadd.xlane.f32.xlu0 %v2135
    %v2137 = vpop.xlane.xlu0 %2136
    %v2138 = vsel %vm40, %v2082, 0.0
    %2139 = vadd.xlane.f32.xlu0 %v2138
    %v2140 = vpop.xlane.xlu0 %2139
    %v2141 = vsel %vm40, %v2084, 0.0
    %2142 = vadd.xlane.f32.xlu0 %v2141
    %v2143 = vpop.xlane.xlu0 %2142
    %v2144 = vsel %vm40, %v2086, 0.0
    %2145 = vadd.xlane.f32.xlu0 %v2144
    %v2146 = vpop.xlane.xlu0 %2145
    %v2147 = vsel %vm40, %v2088, 0.0
    %2148 = vadd.xlane.f32.xlu0 %v2147
    %v2149 = vpop.xlane.xlu0 %2148
    %v2150 = vsel %vm40, %v2090, 0.0
    %2151 = vadd.xlane.f32.xlu0 %v2150
    %v2152 = vpop.xlane.xlu0 %2151
    %v2153 = vsel %vm40, %v2092, 0.0
    %2154 = vadd.xlane.f32.xlu0 %v2153
    %v2155 = vpop.xlane.xlu0 %2154
    %v2156 = vsel %vm40, %v2094, 0.0
    %2157 = vadd.xlane.f32.xlu0 %v2156
    %v2158 = vpop.xlane.xlu0 %2157
    %v2159 = vmul.f32 %v2113, %v282
    %v2160 = vmul.f32 %v2116, %v282
    %v2161 = vmul.f32 %v2119, %v282
    %v2162 = vmul.f32 %v2122, %v282
    %v2163 = vmul.f32 %v2125, %v282
    %v2164 = vmul.f32 %v2128, %v282
    %v2165 = vmul.f32 %v2131, %v282
    %v2166 = vmul.f32 %v2134, %v282
    %v2167 = vmul.f32 %v2137, %v282
    %v2168 = vmul.f32 %v2140, %v282
    %v2169 = vmul.f32 %v2143, %v282
    %v2170 = vmul.f32 %v2146, %v282
    %v2171 = vmul.f32 %v2149, %v282
    %v2172 = vmul.f32 %v2152, %v282
    %v2173 = vmul.f32 %v2155, %v282
    %v2174 = vmul.f32 %v2158, %v282
    %v2175 = vadd.f32 %v2159, 1e-05
    %v2176 = vadd.f32 %v2160, 1e-05
    %v2177 = vadd.f32 %v2161, 1e-05
    %v2178 = vadd.f32 %v2162, 1e-05
    %v2179 = vadd.f32 %v2163, 1e-05
    %v2180 = vadd.f32 %v2164, 1e-05
    %v2181 = vadd.f32 %v2165, 1e-05
    %v2182 = vadd.f32 %v2166, 1e-05
    %v2183 = vadd.f32 %v2167, 1e-05
    %v2184 = vadd.f32 %v2168, 1e-05
    %v2185 = vadd.f32 %v2169, 1e-05
    %v2186 = vadd.f32 %v2170, 1e-05
    %v2187 = vadd.f32 %v2171, 1e-05
    %v2188 = vadd.f32 %v2172, 1e-05
    %v2189 = vadd.f32 %v2173, 1e-05
    %v2190 = vadd.f32 %v2174, 1e-05
    %v2191 = vrsqrt.pop %v2175
    %v2192 = vrsqrt.pop %v2176
    %v2193 = vrsqrt.pop %v2177
    %v2194 = vrsqrt.pop %v2178
    %v2195 = vrsqrt.pop %v2179
    %v2196 = vrsqrt.pop %v2180
    %v2197 = vrsqrt.pop %v2181
    %v2198 = vrsqrt.pop %v2182
    %v2199 = vrsqrt.pop %v2183
    %v2200 = vrsqrt.pop %v2184
    %v2201 = vrsqrt.pop %v2185
    %v2202 = vrsqrt.pop %v2186
    %v2203 = vrsqrt.pop %v2187
    %v2204 = vrsqrt.pop %v2188
    %v2205 = vrsqrt.pop %v2189
    %v2206 = vrsqrt.pop %v2190
    %v2207 = vmul.f32 %v2015, %v2191
    %v2208 = vmul.f32 %v2016, %v2192
    %v2209 = vmul.f32 %v2017, %v2193
    %v2210 = vmul.f32 %v2018, %v2194
    %v2211 = vmul.f32 %v2019, %v2195
    %v2212 = vmul.f32 %v2020, %v2196
    %v2213 = vmul.f32 %v2021, %v2197
    %v2214 = vmul.f32 %v2022, %v2198
    %v2215 = vmul.f32 %v2023, %v2199
    %v2216 = vmul.f32 %v2024, %v2200
    %v2217 = vmul.f32 %v2025, %v2201
    %v2218 = vmul.f32 %v2026, %v2202
    %v2219 = vmul.f32 %v2027, %v2203
    %v2220 = vmul.f32 %v2028, %v2204
    %v2221 = vmul.f32 %v2029, %v2205
    %v2222 = vmul.f32 %v2030, %v2206
    %2223 = vrot.lane.b32.xlu0 %v1601, 64
    %v2224 = vpop.permute.xlu0 %2223
    %2225 = vrot.lane.b32.xlu0 %v1606, 64
    %v2226 = vpop.permute.xlu0 %2225
    %2227 = vrot.lane.b32.xlu0 %v1611, 64
    %v2228 = vpop.permute.xlu0 %2227
    %2229 = vrot.lane.b32.xlu0 %v1616, 64
    %v2230 = vpop.permute.xlu0 %2229
    %2231 = vrot.lane.b32.xlu0 %v1621, 64
    %v2232 = vpop.permute.xlu0 %2231
    %2233 = vrot.lane.b32.xlu0 %v1626, 64
    %v2234 = vpop.permute.xlu0 %2233
    %2235 = vrot.lane.b32.xlu0 %v1631, 64
    %v2236 = vpop.permute.xlu0 %2235
    %2237 = vrot.lane.b32.xlu0 %v1636, 64
    %v2238 = vpop.permute.xlu0 %2237
    %2239 = vrot.lane.b32.xlu0 %v1641, 64
    %v2240 = vpop.permute.xlu0 %2239
    %2241 = vrot.lane.b32.xlu0 %v1646, 64
    %v2242 = vpop.permute.xlu0 %2241
    %2243 = vrot.lane.b32.xlu0 %v1651, 64
    %v2244 = vpop.permute.xlu0 %2243
    %2245 = vrot.lane.b32.xlu0 %v1656, 64
    %v2246 = vpop.permute.xlu0 %2245
    %2247 = vrot.lane.b32.xlu0 %v1661, 64
    %v2248 = vpop.permute.xlu0 %2247
    %2249 = vrot.lane.b32.xlu0 %v1666, 64
    %v2250 = vpop.permute.xlu0 %2249
    %2251 = vrot.lane.b32.xlu0 %v1671, 64
    %v2252 = vpop.permute.xlu0 %2251
    %2253 = vrot.lane.b32.xlu0 %v1676, 64
    %v2254 = vpop.permute.xlu0 %2253
    %v2271 = vsel %vm40, %v2224, 0.0
    %2272 = vadd.xlane.f32.xlu0 %v2271
    %v2273 = vpop.xlane.xlu0 %2272
    %v2274 = vsel %vm40, %v2226, 0.0
    %2275 = vadd.xlane.f32.xlu0 %v2274
    %v2276 = vpop.xlane.xlu0 %2275
    %v2277 = vsel %vm40, %v2228, 0.0
    %2278 = vadd.xlane.f32.xlu0 %v2277
    %v2279 = vpop.xlane.xlu0 %2278
    %v2280 = vsel %vm40, %v2230, 0.0
    %2281 = vadd.xlane.f32.xlu0 %v2280
    %v2282 = vpop.xlane.xlu0 %2281
    %v2283 = vsel %vm40, %v2232, 0.0
    %2284 = vadd.xlane.f32.xlu0 %v2283
    %v2285 = vpop.xlane.xlu0 %2284
    %v2286 = vsel %vm40, %v2234, 0.0
    %2287 = vadd.xlane.f32.xlu0 %v2286
    %v2288 = vpop.xlane.xlu0 %2287
    %v2289 = vsel %vm40, %v2236, 0.0
    %2290 = vadd.xlane.f32.xlu0 %v2289
    %v2291 = vpop.xlane.xlu0 %2290
    %v2292 = vsel %vm40, %v2238, 0.0
    %2293 = vadd.xlane.f32.xlu0 %v2292
    %v2294 = vpop.xlane.xlu0 %2293
    %v2295 = vsel %vm40, %v2240, 0.0
    %2296 = vadd.xlane.f32.xlu0 %v2295
    %v2297 = vpop.xlane.xlu0 %2296
    %v2298 = vsel %vm40, %v2242, 0.0
    %2299 = vadd.xlane.f32.xlu0 %v2298
    %v2300 = vpop.xlane.xlu0 %2299
    %v2301 = vsel %vm40, %v2244, 0.0
    %2302 = vadd.xlane.f32.xlu0 %v2301
    %v2303 = vpop.xlane.xlu0 %2302
    %v2304 = vsel %vm40, %v2246, 0.0
    %2305 = vadd.xlane.f32.xlu0 %v2304
    %v2306 = vpop.xlane.xlu0 %2305
    %v2307 = vsel %vm40, %v2248, 0.0
    %2308 = vadd.xlane.f32.xlu0 %v2307
    %v2309 = vpop.xlane.xlu0 %2308
    %v2310 = vsel %vm40, %v2250, 0.0
    %2311 = vadd.xlane.f32.xlu0 %v2310
    %v2312 = vpop.xlane.xlu0 %2311
    %v2313 = vsel %vm40, %v2252, 0.0
    %2314 = vadd.xlane.f32.xlu0 %v2313
    %v2315 = vpop.xlane.xlu0 %2314
    %v2316 = vsel %vm40, %v2254, 0.0
    %2317 = vadd.xlane.f32.xlu0 %v2316
    %v2318 = vpop.xlane.xlu0 %2317
    %v2319 = vmul.f32 %v2273, %v282
    %v2320 = vmul.f32 %v2276, %v282
    %v2321 = vmul.f32 %v2279, %v282
    %v2322 = vmul.f32 %v2282, %v282
    %v2323 = vmul.f32 %v2285, %v282
    %v2324 = vmul.f32 %v2288, %v282
    %v2325 = vmul.f32 %v2291, %v282
    %v2326 = vmul.f32 %v2294, %v282
    %v2327 = vmul.f32 %v2297, %v282
    %v2328 = vmul.f32 %v2300, %v282
    %v2329 = vmul.f32 %v2303, %v282
    %v2330 = vmul.f32 %v2306, %v282
    %v2331 = vmul.f32 %v2309, %v282
    %v2332 = vmul.f32 %v2312, %v282
    %v2333 = vmul.f32 %v2315, %v282
    %v2334 = vmul.f32 %v2318, %v282
    %v2335 = vsub.f32 %v1601, %v2319
    %v2336 = vsub.f32 %v1606, %v2320
    %v2337 = vsub.f32 %v1611, %v2321
    %v2338 = vsub.f32 %v1616, %v2322
    %v2339 = vsub.f32 %v1621, %v2323
    %v2340 = vsub.f32 %v1626, %v2324
    %v2341 = vsub.f32 %v1631, %v2325
    %v2342 = vsub.f32 %v1636, %v2326
    %v2343 = vsub.f32 %v1641, %v2327
    %v2344 = vsub.f32 %v1646, %v2328
    %v2345 = vsub.f32 %v1651, %v2329
    %v2346 = vsub.f32 %v1656, %v2330
    %v2347 = vsub.f32 %v1661, %v2331
    %v2348 = vsub.f32 %v1666, %v2332
    %v2349 = vsub.f32 %v1671, %v2333
    %v2350 = vsub.f32 %v1676, %v2334
    %v2351 = vmul.f32 %v2335, %v2335
    %v2352 = vmul.f32 %v2336, %v2336
    %v2353 = vmul.f32 %v2337, %v2337
    %v2354 = vmul.f32 %v2338, %v2338
    %v2355 = vmul.f32 %v2339, %v2339
    %v2356 = vmul.f32 %v2340, %v2340
    %v2357 = vmul.f32 %v2341, %v2341
    %v2358 = vmul.f32 %v2342, %v2342
    %v2359 = vmul.f32 %v2343, %v2343
    %v2360 = vmul.f32 %v2344, %v2344
    %v2361 = vmul.f32 %v2345, %v2345
    %v2362 = vmul.f32 %v2346, %v2346
    %v2363 = vmul.f32 %v2347, %v2347
    %v2364 = vmul.f32 %v2348, %v2348
    %v2365 = vmul.f32 %v2349, %v2349
    %v2366 = vmul.f32 %v2350, %v2350
    %2383 = vrot.lane.b32.xlu0 %v2351, 64
    %v2384 = vpop.permute.xlu0 %2383
    %2385 = vrot.lane.b32.xlu0 %v2352, 64
    %v2386 = vpop.permute.xlu0 %2385
    %2387 = vrot.lane.b32.xlu0 %v2353, 64
    %v2388 = vpop.permute.xlu0 %2387
    %2389 = vrot.lane.b32.xlu0 %v2354, 64
    %v2390 = vpop.permute.xlu0 %2389
    %2391 = vrot.lane.b32.xlu0 %v2355, 64
    %v2392 = vpop.permute.xlu0 %2391
    %2393 = vrot.lane.b32.xlu0 %v2356, 64
    %v2394 = vpop.permute.xlu0 %2393
    %2395 = vrot.lane.b32.xlu0 %v2357, 64
    %v2396 = vpop.permute.xlu0 %2395
    %2397 = vrot.lane.b32.xlu0 %v2358, 64
    %v2398 = vpop.permute.xlu0 %2397
    %2399 = vrot.lane.b32.xlu0 %v2359, 64
    %v2400 = vpop.permute.xlu0 %2399
    %2401 = vrot.lane.b32.xlu0 %v2360, 64
    %v2402 = vpop.permute.xlu0 %2401
    %2403 = vrot.lane.b32.xlu0 %v2361, 64
    %v2404 = vpop.permute.xlu0 %2403
    %2405 = vrot.lane.b32.xlu0 %v2362, 64
    %v2406 = vpop.permute.xlu0 %2405
    %2407 = vrot.lane.b32.xlu0 %v2363, 64
    %v2408 = vpop.permute.xlu0 %2407
    %2409 = vrot.lane.b32.xlu0 %v2364, 64
    %v2410 = vpop.permute.xlu0 %2409
    %2411 = vrot.lane.b32.xlu0 %v2365, 64
    %v2412 = vpop.permute.xlu0 %2411
    %2413 = vrot.lane.b32.xlu0 %v2366, 64
    %v2414 = vpop.permute.xlu0 %2413
    %v2431 = vsel %vm40, %v2384, 0.0
    %2432 = vadd.xlane.f32.xlu0 %v2431
    %v2433 = vpop.xlane.xlu0 %2432
    %v2434 = vsel %vm40, %v2386, 0.0
    %2435 = vadd.xlane.f32.xlu0 %v2434
    %v2436 = vpop.xlane.xlu0 %2435
    %v2437 = vsel %vm40, %v2388, 0.0
    %2438 = vadd.xlane.f32.xlu0 %v2437
    %v2439 = vpop.xlane.xlu0 %2438
    %v2440 = vsel %vm40, %v2390, 0.0
    %2441 = vadd.xlane.f32.xlu0 %v2440
    %v2442 = vpop.xlane.xlu0 %2441
    %v2443 = vsel %vm40, %v2392, 0.0
    %2444 = vadd.xlane.f32.xlu0 %v2443
    %v2445 = vpop.xlane.xlu0 %2444
    %v2446 = vsel %vm40, %v2394, 0.0
    %2447 = vadd.xlane.f32.xlu0 %v2446
    %v2448 = vpop.xlane.xlu0 %2447
    %v2449 = vsel %vm40, %v2396, 0.0
    %2450 = vadd.xlane.f32.xlu0 %v2449
    %v2451 = vpop.xlane.xlu0 %2450
    %v2452 = vsel %vm40, %v2398, 0.0
    %2453 = vadd.xlane.f32.xlu0 %v2452
    %v2454 = vpop.xlane.xlu0 %2453
    %v2455 = vsel %vm40, %v2400, 0.0
    %2456 = vadd.xlane.f32.xlu0 %v2455
    %v2457 = vpop.xlane.xlu0 %2456
    %v2458 = vsel %vm40, %v2402, 0.0
    %2459 = vadd.xlane.f32.xlu0 %v2458
    %v2460 = vpop.xlane.xlu0 %2459
    %v2461 = vsel %vm40, %v2404, 0.0
    %2462 = vadd.xlane.f32.xlu0 %v2461
    %v2463 = vpop.xlane.xlu0 %2462
    %v2464 = vsel %vm40, %v2406, 0.0
    %2465 = vadd.xlane.f32.xlu0 %v2464
    %v2466 = vpop.xlane.xlu0 %2465
    %v2467 = vsel %vm40, %v2408, 0.0
    %2468 = vadd.xlane.f32.xlu0 %v2467
    %v2469 = vpop.xlane.xlu0 %2468
    %v2470 = vsel %vm40, %v2410, 0.0
    %2471 = vadd.xlane.f32.xlu0 %v2470
    %v2472 = vpop.xlane.xlu0 %2471
    %v2473 = vsel %vm40, %v2412, 0.0
    %2474 = vadd.xlane.f32.xlu0 %v2473
    %v2475 = vpop.xlane.xlu0 %2474
    %v2476 = vsel %vm40, %v2414, 0.0
    %2477 = vadd.xlane.f32.xlu0 %v2476
    %v2478 = vpop.xlane.xlu0 %2477
    %v2479 = vmul.f32 %v2433, %v282
    %v2480 = vmul.f32 %v2436, %v282
    %v2481 = vmul.f32 %v2439, %v282
    %v2482 = vmul.f32 %v2442, %v282
    %v2483 = vmul.f32 %v2445, %v282
    %v2484 = vmul.f32 %v2448, %v282
    %v2485 = vmul.f32 %v2451, %v282
    %v2486 = vmul.f32 %v2454, %v282
    %v2487 = vmul.f32 %v2457, %v282
    %v2488 = vmul.f32 %v2460, %v282
    %v2489 = vmul.f32 %v2463, %v282
    %v2490 = vmul.f32 %v2466, %v282
    %v2491 = vmul.f32 %v2469, %v282
    %v2492 = vmul.f32 %v2472, %v282
    %v2493 = vmul.f32 %v2475, %v282
    %v2494 = vmul.f32 %v2478, %v282
    %v2495 = vadd.f32 %v2479, 1e-05
    %v2496 = vadd.f32 %v2480, 1e-05
    %v2497 = vadd.f32 %v2481, 1e-05
    %v2498 = vadd.f32 %v2482, 1e-05
    %v2499 = vadd.f32 %v2483, 1e-05
    %v2500 = vadd.f32 %v2484, 1e-05
    %v2501 = vadd.f32 %v2485, 1e-05
    %v2502 = vadd.f32 %v2486, 1e-05
    %v2503 = vadd.f32 %v2487, 1e-05
    %v2504 = vadd.f32 %v2488, 1e-05
    %v2505 = vadd.f32 %v2489, 1e-05
    %v2506 = vadd.f32 %v2490, 1e-05
    %v2507 = vadd.f32 %v2491, 1e-05
    %v2508 = vadd.f32 %v2492, 1e-05
    %v2509 = vadd.f32 %v2493, 1e-05
    %v2510 = vadd.f32 %v2494, 1e-05
    %v2511 = vrsqrt.pop %v2495
    %v2512 = vrsqrt.pop %v2496
    %v2513 = vrsqrt.pop %v2497
    %v2514 = vrsqrt.pop %v2498
    %v2515 = vrsqrt.pop %v2499
    %v2516 = vrsqrt.pop %v2500
    %v2517 = vrsqrt.pop %v2501
    %v2518 = vrsqrt.pop %v2502
    %v2519 = vrsqrt.pop %v2503
    %v2520 = vrsqrt.pop %v2504
    %v2521 = vrsqrt.pop %v2505
    %v2522 = vrsqrt.pop %v2506
    %v2523 = vrsqrt.pop %v2507
    %v2524 = vrsqrt.pop %v2508
    %v2525 = vrsqrt.pop %v2509
    %v2526 = vrsqrt.pop %v2510
    %v2527 = vmul.f32 %v2335, %v2511
    %v2528 = vmul.f32 %v2336, %v2512
    %v2529 = vmul.f32 %v2337, %v2513
    %v2530 = vmul.f32 %v2338, %v2514
    %v2531 = vmul.f32 %v2339, %v2515
    %v2532 = vmul.f32 %v2340, %v2516
    %v2533 = vmul.f32 %v2341, %v2517
    %v2534 = vmul.f32 %v2342, %v2518
    %v2535 = vmul.f32 %v2343, %v2519
    %v2536 = vmul.f32 %v2344, %v2520
    %v2537 = vmul.f32 %v2345, %v2521
    %v2538 = vmul.f32 %v2346, %v2522
    %v2539 = vmul.f32 %v2347, %v2523
    %v2540 = vmul.f32 %v2348, %v2524
    %v2541 = vmul.f32 %v2349, %v2525
    %v2542 = vmul.f32 %v2350, %v2526
    %2543 = vrot.lane.b32.xlu0 %v1601, 32
    %v2544 = vpop.permute.xlu0 %2543
    %2545 = vrot.lane.b32.xlu0 %v1606, 32
    %v2546 = vpop.permute.xlu0 %2545
    %2547 = vrot.lane.b32.xlu0 %v1611, 32
    %v2548 = vpop.permute.xlu0 %2547
    %2549 = vrot.lane.b32.xlu0 %v1616, 32
    %v2550 = vpop.permute.xlu0 %2549
    %2551 = vrot.lane.b32.xlu0 %v1621, 32
    %v2552 = vpop.permute.xlu0 %2551
    %2553 = vrot.lane.b32.xlu0 %v1626, 32
    %v2554 = vpop.permute.xlu0 %2553
    %2555 = vrot.lane.b32.xlu0 %v1631, 32
    %v2556 = vpop.permute.xlu0 %2555
    %2557 = vrot.lane.b32.xlu0 %v1636, 32
    %v2558 = vpop.permute.xlu0 %2557
    %2559 = vrot.lane.b32.xlu0 %v1641, 32
    %v2560 = vpop.permute.xlu0 %2559
    %2561 = vrot.lane.b32.xlu0 %v1646, 32
    %v2562 = vpop.permute.xlu0 %2561
    %2563 = vrot.lane.b32.xlu0 %v1651, 32
    %v2564 = vpop.permute.xlu0 %2563
    %2565 = vrot.lane.b32.xlu0 %v1656, 32
    %v2566 = vpop.permute.xlu0 %2565
    %2567 = vrot.lane.b32.xlu0 %v1661, 32
    %v2568 = vpop.permute.xlu0 %2567
    %2569 = vrot.lane.b32.xlu0 %v1666, 32
    %v2570 = vpop.permute.xlu0 %2569
    %2571 = vrot.lane.b32.xlu0 %v1671, 32
    %v2572 = vpop.permute.xlu0 %2571
    %2573 = vrot.lane.b32.xlu0 %v1676, 32
    %v2574 = vpop.permute.xlu0 %2573
    %v2591 = vsel %vm40, %v2544, 0.0
    %2592 = vadd.xlane.f32.xlu0 %v2591
    %v2593 = vpop.xlane.xlu0 %2592
    %v2594 = vsel %vm40, %v2546, 0.0
    %2595 = vadd.xlane.f32.xlu0 %v2594
    %v2596 = vpop.xlane.xlu0 %2595
    %v2597 = vsel %vm40, %v2548, 0.0
    %2598 = vadd.xlane.f32.xlu0 %v2597
    %v2599 = vpop.xlane.xlu0 %2598
    %v2600 = vsel %vm40, %v2550, 0.0
    %2601 = vadd.xlane.f32.xlu0 %v2600
    %v2602 = vpop.xlane.xlu0 %2601
    %v2603 = vsel %vm40, %v2552, 0.0
    %2604 = vadd.xlane.f32.xlu0 %v2603
    %v2605 = vpop.xlane.xlu0 %2604
    %v2606 = vsel %vm40, %v2554, 0.0
    %2607 = vadd.xlane.f32.xlu0 %v2606
    %v2608 = vpop.xlane.xlu0 %2607
    %v2609 = vsel %vm40, %v2556, 0.0
    %2610 = vadd.xlane.f32.xlu0 %v2609
    %v2611 = vpop.xlane.xlu0 %2610
    %v2612 = vsel %vm40, %v2558, 0.0
    %2613 = vadd.xlane.f32.xlu0 %v2612
    %v2614 = vpop.xlane.xlu0 %2613
    %v2615 = vsel %vm40, %v2560, 0.0
    %2616 = vadd.xlane.f32.xlu0 %v2615
    %v2617 = vpop.xlane.xlu0 %2616
    %v2618 = vsel %vm40, %v2562, 0.0
    %2619 = vadd.xlane.f32.xlu0 %v2618
    %v2620 = vpop.xlane.xlu0 %2619
    %v2621 = vsel %vm40, %v2564, 0.0
    %2622 = vadd.xlane.f32.xlu0 %v2621
    %v2623 = vpop.xlane.xlu0 %2622
    %v2624 = vsel %vm40, %v2566, 0.0
    %2625 = vadd.xlane.f32.xlu0 %v2624
    %v2626 = vpop.xlane.xlu0 %2625
    %v2627 = vsel %vm40, %v2568, 0.0
    %2628 = vadd.xlane.f32.xlu0 %v2627
    %v2629 = vpop.xlane.xlu0 %2628
    %v2630 = vsel %vm40, %v2570, 0.0
    %2631 = vadd.xlane.f32.xlu0 %v2630
    %v2632 = vpop.xlane.xlu0 %2631
    %v2633 = vsel %vm40, %v2572, 0.0
    %2634 = vadd.xlane.f32.xlu0 %v2633
    %v2635 = vpop.xlane.xlu0 %2634
    %v2636 = vsel %vm40, %v2574, 0.0
    %2637 = vadd.xlane.f32.xlu0 %v2636
    %v2638 = vpop.xlane.xlu0 %2637
    %v2639 = vmul.f32 %v2593, %v282
    %v2640 = vmul.f32 %v2596, %v282
    %v2641 = vmul.f32 %v2599, %v282
    %v2642 = vmul.f32 %v2602, %v282
    %v2643 = vmul.f32 %v2605, %v282
    %v2644 = vmul.f32 %v2608, %v282
    %v2645 = vmul.f32 %v2611, %v282
    %v2646 = vmul.f32 %v2614, %v282
    %v2647 = vmul.f32 %v2617, %v282
    %v2648 = vmul.f32 %v2620, %v282
    %v2649 = vmul.f32 %v2623, %v282
    %v2650 = vmul.f32 %v2626, %v282
    %v2651 = vmul.f32 %v2629, %v282
    %v2652 = vmul.f32 %v2632, %v282
    %v2653 = vmul.f32 %v2635, %v282
    %v2654 = vmul.f32 %v2638, %v282
    %v2655 = vsub.f32 %v1601, %v2639
    %v2656 = vsub.f32 %v1606, %v2640
    %v2657 = vsub.f32 %v1611, %v2641
    %v2658 = vsub.f32 %v1616, %v2642
    %v2659 = vsub.f32 %v1621, %v2643
    %v2660 = vsub.f32 %v1626, %v2644
    %v2661 = vsub.f32 %v1631, %v2645
    %v2662 = vsub.f32 %v1636, %v2646
    %v2663 = vsub.f32 %v1641, %v2647
    %v2664 = vsub.f32 %v1646, %v2648
    %v2665 = vsub.f32 %v1651, %v2649
    %v2666 = vsub.f32 %v1656, %v2650
    %v2667 = vsub.f32 %v1661, %v2651
    %v2668 = vsub.f32 %v1666, %v2652
    %v2669 = vsub.f32 %v1671, %v2653
    %v2670 = vsub.f32 %v1676, %v2654
    %v2671 = vmul.f32 %v2655, %v2655
    %v2672 = vmul.f32 %v2656, %v2656
    %v2673 = vmul.f32 %v2657, %v2657
    %v2674 = vmul.f32 %v2658, %v2658
    %v2675 = vmul.f32 %v2659, %v2659
    %v2676 = vmul.f32 %v2660, %v2660
    %v2677 = vmul.f32 %v2661, %v2661
    %v2678 = vmul.f32 %v2662, %v2662
    %v2679 = vmul.f32 %v2663, %v2663
    %v2680 = vmul.f32 %v2664, %v2664
    %v2681 = vmul.f32 %v2665, %v2665
    %v2682 = vmul.f32 %v2666, %v2666
    %v2683 = vmul.f32 %v2667, %v2667
    %v2684 = vmul.f32 %v2668, %v2668
    %v2685 = vmul.f32 %v2669, %v2669
    %v2686 = vmul.f32 %v2670, %v2670
    %2703 = vrot.lane.b32.xlu0 %v2671, 32
    %v2704 = vpop.permute.xlu0 %2703
    %2705 = vrot.lane.b32.xlu0 %v2672, 32
    %v2706 = vpop.permute.xlu0 %2705
    %2707 = vrot.lane.b32.xlu0 %v2673, 32
    %v2708 = vpop.permute.xlu0 %2707
    %2709 = vrot.lane.b32.xlu0 %v2674, 32
    %v2710 = vpop.permute.xlu0 %2709
    %2711 = vrot.lane.b32.xlu0 %v2675, 32
    %v2712 = vpop.permute.xlu0 %2711
    %2713 = vrot.lane.b32.xlu0 %v2676, 32
    %v2714 = vpop.permute.xlu0 %2713
    %2715 = vrot.lane.b32.xlu0 %v2677, 32
    %v2716 = vpop.permute.xlu0 %2715
    %2717 = vrot.lane.b32.xlu0 %v2678, 32
    %v2718 = vpop.permute.xlu0 %2717
    %2719 = vrot.lane.b32.xlu0 %v2679, 32
    %v2720 = vpop.permute.xlu0 %2719
    %2721 = vrot.lane.b32.xlu0 %v2680, 32
    %v2722 = vpop.permute.xlu0 %2721
    %2723 = vrot.lane.b32.xlu0 %v2681, 32
    %v2724 = vpop.permute.xlu0 %2723
    %2725 = vrot.lane.b32.xlu0 %v2682, 32
    %v2726 = vpop.permute.xlu0 %2725
    %2727 = vrot.lane.b32.xlu0 %v2683, 32
    %v2728 = vpop.permute.xlu0 %2727
    %2729 = vrot.lane.b32.xlu0 %v2684, 32
    %v2730 = vpop.permute.xlu0 %2729
    %2731 = vrot.lane.b32.xlu0 %v2685, 32
    %v2732 = vpop.permute.xlu0 %2731
    %2733 = vrot.lane.b32.xlu0 %v2686, 32
    %v2734 = vpop.permute.xlu0 %2733
    %v2751 = vsel %vm40, %v2704, 0.0
    %2752 = vadd.xlane.f32.xlu0 %v2751
    %v2753 = vpop.xlane.xlu0 %2752
    %v2754 = vsel %vm40, %v2706, 0.0
    %2755 = vadd.xlane.f32.xlu0 %v2754
    %v2756 = vpop.xlane.xlu0 %2755
    %v2757 = vsel %vm40, %v2708, 0.0
    %2758 = vadd.xlane.f32.xlu0 %v2757
    %v2759 = vpop.xlane.xlu0 %2758
    %v2760 = vsel %vm40, %v2710, 0.0
    %2761 = vadd.xlane.f32.xlu0 %v2760
    %v2762 = vpop.xlane.xlu0 %2761
    %v2763 = vsel %vm40, %v2712, 0.0
    %2764 = vadd.xlane.f32.xlu0 %v2763
    %v2765 = vpop.xlane.xlu0 %2764
    %v2766 = vsel %vm40, %v2714, 0.0
    %2767 = vadd.xlane.f32.xlu0 %v2766
    %v2768 = vpop.xlane.xlu0 %2767
    %v2769 = vsel %vm40, %v2716, 0.0
    %2770 = vadd.xlane.f32.xlu0 %v2769
    %v2771 = vpop.xlane.xlu0 %2770
    %v2772 = vsel %vm40, %v2718, 0.0
    %2773 = vadd.xlane.f32.xlu0 %v2772
    %v2774 = vpop.xlane.xlu0 %2773
    %v2775 = vsel %vm40, %v2720, 0.0
    %2776 = vadd.xlane.f32.xlu0 %v2775
    %v2777 = vpop.xlane.xlu0 %2776
    %v2778 = vsel %vm40, %v2722, 0.0
    %2779 = vadd.xlane.f32.xlu0 %v2778
    %v2780 = vpop.xlane.xlu0 %2779
    %v2781 = vsel %vm40, %v2724, 0.0
    %2782 = vadd.xlane.f32.xlu0 %v2781
    %v2783 = vpop.xlane.xlu0 %2782
    %v2784 = vsel %vm40, %v2726, 0.0
    %2785 = vadd.xlane.f32.xlu0 %v2784
    %v2786 = vpop.xlane.xlu0 %2785
    %v2787 = vsel %vm40, %v2728, 0.0
    %2788 = vadd.xlane.f32.xlu0 %v2787
    %v2789 = vpop.xlane.xlu0 %2788
    %v2790 = vsel %vm40, %v2730, 0.0
    %2791 = vadd.xlane.f32.xlu0 %v2790
    %v2792 = vpop.xlane.xlu0 %2791
    %v2793 = vsel %vm40, %v2732, 0.0
    %2794 = vadd.xlane.f32.xlu0 %v2793
    %v2795 = vpop.xlane.xlu0 %2794
    %v2796 = vsel %vm40, %v2734, 0.0
    %2797 = vadd.xlane.f32.xlu0 %v2796
    %v2798 = vpop.xlane.xlu0 %2797
    %v2799 = vmul.f32 %v2753, %v282
    %v2800 = vmul.f32 %v2756, %v282
    %v2801 = vmul.f32 %v2759, %v282
    %v2802 = vmul.f32 %v2762, %v282
    %v2803 = vmul.f32 %v2765, %v282
    %v2804 = vmul.f32 %v2768, %v282
    %v2805 = vmul.f32 %v2771, %v282
    %v2806 = vmul.f32 %v2774, %v282
    %v2807 = vmul.f32 %v2777, %v282
    %v2808 = vmul.f32 %v2780, %v282
    %v2809 = vmul.f32 %v2783, %v282
    %v2810 = vmul.f32 %v2786, %v282
    %v2811 = vmul.f32 %v2789, %v282
    %v2812 = vmul.f32 %v2792, %v282
    %v2813 = vmul.f32 %v2795, %v282
    %v2814 = vmul.f32 %v2798, %v282
    %v2815 = vadd.f32 %v2799, 1e-05
    %v2816 = vadd.f32 %v2800, 1e-05
    %v2817 = vadd.f32 %v2801, 1e-05
    %v2818 = vadd.f32 %v2802, 1e-05
    %v2819 = vadd.f32 %v2803, 1e-05
    %v2820 = vadd.f32 %v2804, 1e-05
    %v2821 = vadd.f32 %v2805, 1e-05
    %v2822 = vadd.f32 %v2806, 1e-05
    %v2823 = vadd.f32 %v2807, 1e-05
    %v2824 = vadd.f32 %v2808, 1e-05
    %v2825 = vadd.f32 %v2809, 1e-05
    %v2826 = vadd.f32 %v2810, 1e-05
    %v2827 = vadd.f32 %v2811, 1e-05
    %v2828 = vadd.f32 %v2812, 1e-05
    %v2829 = vadd.f32 %v2813, 1e-05
    %v2830 = vadd.f32 %v2814, 1e-05
    %v2831 = vrsqrt.pop %v2815
    %v2832 = vrsqrt.pop %v2816
    %v2833 = vrsqrt.pop %v2817
    %v2834 = vrsqrt.pop %v2818
    %v2835 = vrsqrt.pop %v2819
    %v2836 = vrsqrt.pop %v2820
    %v2837 = vrsqrt.pop %v2821
    %v2838 = vrsqrt.pop %v2822
    %v2839 = vrsqrt.pop %v2823
    %v2840 = vrsqrt.pop %v2824
    %v2841 = vrsqrt.pop %v2825
    %v2842 = vrsqrt.pop %v2826
    %v2843 = vrsqrt.pop %v2827
    %v2844 = vrsqrt.pop %v2828
    %v2845 = vrsqrt.pop %v2829
    %v2846 = vrsqrt.pop %v2830
    %v2847 = vmul.f32 %v2655, %v2831
    %v2848 = vmul.f32 %v2656, %v2832
    %v2849 = vmul.f32 %v2657, %v2833
    %v2850 = vmul.f32 %v2658, %v2834
    %v2851 = vmul.f32 %v2659, %v2835
    %v2852 = vmul.f32 %v2660, %v2836
    %v2853 = vmul.f32 %v2661, %v2837
    %v2854 = vmul.f32 %v2662, %v2838
    %v2855 = vmul.f32 %v2663, %v2839
    %v2856 = vmul.f32 %v2664, %v2840
    %v2857 = vmul.f32 %v2665, %v2841
    %v2858 = vmul.f32 %v2666, %v2842
    %v2859 = vmul.f32 %v2667, %v2843
    %v2860 = vmul.f32 %v2668, %v2844
    %v2861 = vmul.f32 %v2669, %v2845
    %v2862 = vmul.f32 %v2670, %v2846
    %v2863 = vsel %vm40, %v1871, %v2207
    %v2864 = vsel %vm40, %v1872, %v2208
    %v2865 = vsel %vm40, %v1873, %v2209
    %v2866 = vsel %vm40, %v1874, %v2210
    %v2867 = vsel %vm40, %v1875, %v2211
    %v2868 = vsel %vm40, %v1876, %v2212
    %v2869 = vsel %vm40, %v1877, %v2213
    %v2870 = vsel %vm40, %v1878, %v2214
    %v2871 = vsel %vm40, %v1879, %v2215
    %v2872 = vsel %vm40, %v1880, %v2216
    %v2873 = vsel %vm40, %v1881, %v2217
    %v2874 = vsel %vm40, %v1882, %v2218
    %v2875 = vsel %vm40, %v1883, %v2219
    %v2876 = vsel %vm40, %v1884, %v2220
    %v2877 = vsel %vm40, %v1885, %v2221
    %v2878 = vsel %vm40, %v1886, %v2222
    %v2879 = vsel %vm1435, %v2863, %v2527
    %v2880 = vsel %vm1435, %v2864, %v2528
    %v2881 = vsel %vm1435, %v2865, %v2529
    %v2882 = vsel %vm1435, %v2866, %v2530
    %v2883 = vsel %vm1435, %v2867, %v2531
    %v2884 = vsel %vm1435, %v2868, %v2532
    %v2885 = vsel %vm1435, %v2869, %v2533
    %v2886 = vsel %vm1435, %v2870, %v2534
    %v2887 = vsel %vm1435, %v2871, %v2535
    %v2888 = vsel %vm1435, %v2872, %v2536
    %v2889 = vsel %vm1435, %v2873, %v2537
    %v2890 = vsel %vm1435, %v2874, %v2538
    %v2891 = vsel %vm1435, %v2875, %v2539
    %v2892 = vsel %vm1435, %v2876, %v2540
    %v2893 = vsel %vm1435, %v2877, %v2541
    %v2894 = vsel %vm1435, %v2878, %v2542
    %v2895 = vsel %vm1452, %v2879, %v2847
    %v2896 = vsel %vm1452, %v2880, %v2848
    %v2897 = vsel %vm1452, %v2881, %v2849
    %v2898 = vsel %vm1452, %v2882, %v2850
    %v2899 = vsel %vm1452, %v2883, %v2851
    %v2900 = vsel %vm1452, %v2884, %v2852
    %v2901 = vsel %vm1452, %v2885, %v2853
    %v2902 = vsel %vm1452, %v2886, %v2854
    %v2903 = vsel %vm1452, %v2887, %v2855
    %v2904 = vsel %vm1452, %v2888, %v2856
    %v2905 = vsel %vm1452, %v2889, %v2857
    %v2906 = vsel %vm1452, %v2890, %v2858
    %v2907 = vsel %vm1452, %v2891, %v2859
    %v2908 = vsel %vm1452, %v2892, %v2860
    %v2909 = vsel %vm1452, %v2893, %v2861
    %v2910 = vsel %vm1452, %v2894, %v2862
    %v2911 = vmul.f32 %v2895, %v1473
    %v2912 = vmul.f32 %v2896, %v1473
    %v2913 = vmul.f32 %v2897, %v1473
    %v2914 = vmul.f32 %v2898, %v1473
    %v2915 = vmul.f32 %v2899, %v1473
    %v2916 = vmul.f32 %v2900, %v1473
    %v2917 = vmul.f32 %v2901, %v1473
    %v2918 = vmul.f32 %v2902, %v1473
    %v2919 = vmul.f32 %v2903, %v1473
    %v2920 = vmul.f32 %v2904, %v1473
    %v2921 = vmul.f32 %v2905, %v1473
    %v2922 = vmul.f32 %v2906, %v1473
    %v2923 = vmul.f32 %v2907, %v1473
    %v2924 = vmul.f32 %v2908, %v1473
    %v2925 = vmul.f32 %v2909, %v1473
    %v2926 = vmul.f32 %v2910, %v1473
    %v2927 = vadd.f32 %v2911, %v1495
    %v2928 = vadd.f32 %v2912, %v1495
    %v2929 = vadd.f32 %v2913, %v1495
    %v2930 = vadd.f32 %v2914, %v1495
    %v2931 = vadd.f32 %v2915, %v1495
    %v2932 = vadd.f32 %v2916, %v1495
    %v2933 = vadd.f32 %v2917, %v1495
    %v2934 = vadd.f32 %v2918, %v1495
    %v2935 = vadd.f32 %v2919, %v1495
    %v2936 = vadd.f32 %v2920, %v1495
    %v2937 = vadd.f32 %v2921, %v1495
    %v2938 = vadd.f32 %v2922, %v1495
    %v2939 = vadd.f32 %v2923, %v1495
    %v2940 = vadd.f32 %v2924, %v1495
    %v2941 = vadd.f32 %v2925, %v1495
    %v2942 = vadd.f32 %v2926, %v1495
    %s2943 = scalar_lea.vmem [#allocation2], 8
    %2944 = vst [vmem:[%s2943] sm:$0xff] %v2927
    %2945 = vst [vmem:[%s2943 + $0x20] sm:$0xff] %v2928
    %2946 = vst [vmem:[%s2943 + $0x40] sm:$0xff] %v2929
    %2947 = vst [vmem:[%s2943 + $0x60] sm:$0xff] %v2930
    %2948 = vst [vmem:[%s2943 + $0x80] sm:$0xff] %v2931
    %2949 = vst [vmem:[%s2943 + $0xa0] sm:$0xff] %v2932
    %2950 = vst [vmem:[%s2943 + $0xc0] sm:$0xff] %v2933
    %2951 = vst [vmem:[%s2943 + $0xe0] sm:$0xff] %v2934
    %2952 = vst [vmem:[%s2943 + $0x100] sm:$0xff] %v2935
    %2953 = vst [vmem:[%s2943 + $0x120] sm:$0xff] %v2936
    %2954 = vst [vmem:[%s2943 + $0x140] sm:$0xff] %v2937
    %2955 = vst [vmem:[%s2943 + $0x160] sm:$0xff] %v2938
    %2956 = vst [vmem:[%s2943 + $0x180] sm:$0xff] %v2939
    %2957 = vst [vmem:[%s2943 + $0x1a0] sm:$0xff] %v2940
    %2958 = vst [vmem:[%s2943 + $0x1c0] sm:$0xff] %v2941
    %2959 = vst [vmem:[%s2943 + $0x1e0] sm:$0xff] %v2942
    %s2960 = scalar_lea.vmem %s1, 64
    %v2961 = vld [vmem:[%s2960] sm:$0xff]
    %v2962 = vld [vmem:[%s2960 + $0x8] sm:$0xff]
    %v2963 = vld [vmem:[%s2960 + $0x10] sm:$0xff]
    %v2964 = vld [vmem:[%s2960 + $0x18] sm:$0xff]
    %2965 = vmatprep.subr.mxu0 0.0
    %2966 = vmatpush1.msra.mxu0 %v2961
    %2967 = vmatprep.subr.mxu0 0.0
    %2968 = vmatpush1.msra.mxu0 %v2962
    %2969 = vmatprep.subr.mxu0 0.0
    %2970 = vmatpush1.msra.mxu0 %v2963
    %2971 = vmatprep.subr.mxu0 0.0
    %2972 = vmatpush1.msra.mxu0 %v2964
    %2973 = vmatprep.subr.mxu0 0.0
    %2974 = vmatpush1.msra.mxu0 0.0
    %2975 = vmatprep.subr.mxu0 0.0
    %2976 = vmatpush1.msra.mxu0 0.0
    %2977 = vmatprep.subr.mxu0 0.0
    %2978 = vmatpush1.msra.mxu0 0.0
    %2979 = vmatprep.subr.mxu0 0.0
    %2980 = vmatpush1.msra.mxu0 0.0
    %2981 = vmatprep.subr.mxu0 0.0
    %2982 = vmatpush1.msra.mxu0 0.0
    %2983 = vmatprep.subr.mxu0 0.0
    %2984 = vmatpush1.msra.mxu0 0.0
    %2985 = vmatprep.subr.mxu0 0.0
    %2986 = vmatpush1.msra.mxu0 0.0
    %2987 = vmatprep.subr.mxu0 0.0
    %2988 = vmatpush1.msra.mxu0 0.0
    %2989 = vmatprep.subr.mxu0 0.0
    %2990 = vmatpush1.msra.mxu0 0.0
    %2991 = vmatprep.subr.mxu0 0.0
    %2992 = vmatpush1.msra.mxu0 0.0
    %2993 = vmatprep.subr.mxu0 0.0
    %2994 = vmatpush1.msra.mxu0 0.0
    %2995 = vmatprep.subr.mxu0 0.0
    %2996 = vmatpush1.msra.mxu0 0.0
    %2997 = vmatprep.subr.mxu0 0.0
    %2998 = vmatpush1.msra.mxu0 0.0
    %2999 = vmatprep.subr.mxu0 0.0
    %3000 = vmatpush1.msra.mxu0 0.0
    %3001 = vmatprep.subr.mxu0 0.0
    %3002 = vmatpush1.msra.mxu0 0.0
    %3003 = vmatprep.subr.mxu0 0.0
    %3004 = vmatpush1.msra.mxu0 0.0
    %3005 = vmatprep.subr.mxu0 0.0
    %3006 = vmatpush1.msra.mxu0 0.0
    %3007 = vmatprep.subr.mxu0 0.0
    %3008 = vmatpush1.msra.mxu0 0.0
    %3009 = vmatprep.subr.mxu0 0.0
    %3010 = vmatpush1.msra.mxu0 0.0
    %3011 = vmatprep.subr.mxu0 0.0
    %3012 = vmatpush1.msra.mxu0 0.0
    %3013 = vmatprep.subr.mxu0 0.0
    %3014 = vmatpush1.msra.mxu0 0.0
    %3015 = vmatprep.subr.mxu0 0.0
    %3016 = vmatpush1.msra.mxu0 0.0
    %3017 = vmatprep.subr.mxu0 0.0
    %3018 = vmatpush1.msra.mxu0 0.0
    %3019 = vmatprep.subr.mxu0 0.0
    %3020 = vmatpush1.msra.mxu0 0.0
    %3021 = vmatprep.subr.mxu0 0.0
    %3022 = vmatpush1.msra.mxu0 0.0
    %3023 = vmatprep.subr.mxu0 0.0
    %3024 = vmatpush1.msra.mxu0 0.0
    %3025 = vmatprep.subr.mxu0 0.0
    %3026 = vmatpush1.msra.mxu0 0.0
    %3027 = vmatprep.subr.mxu0 0.0
    %3028 = vmatpush1.msra.mxu0 0.0
    %3029 = vmatprep.mubr.f32.mxu0 0.0
    %3030 = vmatmul.mubr.f32.gmra.mrb[0].mxu0 %v42
    %v3031 = vpop.f32.mrb[0].mxu0
    %v3032 = vadd.f32 0.0, %v3031
    %v3033 = vpop.f32.mrb[0].mxu0
    %3034 = vmatprep.mubr.f32.mxu0 0.0
    %3035 = vmatmul.mubr.f32.gmra.mrb[0].mxu0 %v45
    %v3036 = vpop.f32.mrb[0].mxu0
    %v3037 = vadd.f32 0.0, %v3036
    %v3038 = vpop.f32.mrb[0].mxu0
    %3039 = vmatprep.mubr.f32.mxu0 0.0
    %3040 = vmatmul.mubr.f32.gmra.mrb[0].mxu0 %v48
    %v3041 = vpop.f32.mrb[0].mxu0
    %v3042 = vadd.f32 0.0, %v3041
    %v3043 = vpop.f32.mrb[0].mxu0
    %3044 = vmatprep.mubr.f32.mxu0 0.0
    %3045 = vmatmul.mubr.f32.gmra.mrb[0].mxu0 %v51
    %v3046 = vpop.f32.mrb[0].mxu0
    %v3047 = vadd.f32 0.0, %v3046
    %v3048 = vpop.f32.mrb[0].mxu0
    %3049 = vmatprep.mubr.f32.mxu0 0.0
    %3050 = vmatmul.mubr.f32.gmra.mrb[0].mxu0 %v54
    %v3051 = vpop.f32.mrb[0].mxu0
    %v3052 = vadd.f32 0.0, %v3051
    %v3053 = vpop.f32.mrb[0].mxu0
    %3054 = vmatprep.mubr.f32.mxu0 0.0
    %3055 = vmatmul.mubr.f32.gmra.mrb[0].mxu0 %v57
    %v3056 = vpop.f32.mrb[0].mxu0
    %v3057 = vadd.f32 0.0, %v3056
    %v3058 = vpop.f32.mrb[0].mxu0
    %3059 = vmatprep.mubr.f32.mxu0 0.0
    %3060 = vmatmul.mubr.f32.gmra.mrb[0].mxu0 %v60
    %v3061 = vpop.f32.mrb[0].mxu0
    %v3062 = vadd.f32 0.0, %v3061
    %v3063 = vpop.f32.mrb[0].mxu0
    %3064 = vmatprep.mubr.f32.mxu0 0.0
    %3065 = vmatmul.mubr.f32.gmra.mrb[0].mxu0 %v63
    %v3066 = vpop.f32.mrb[0].mxu0
    %v3067 = vadd.f32 0.0, %v3066
    %v3068 = vpop.f32.mrb[0].mxu0
    %3069 = vmatprep.mubr.f32.mxu0 0.0
    %3070 = vmatmul.mubr.f32.gmra.mrb[0].mxu0 %v66
    %v3071 = vpop.f32.mrb[0].mxu0
    %v3072 = vadd.f32 0.0, %v3071
    %v3073 = vpop.f32.mrb[0].mxu0
    %3074 = vmatprep.mubr.f32.mxu0 0.0
    %3075 = vmatmul.mubr.f32.gmra.mrb[0].mxu0 %v69
    %v3076 = vpop.f32.mrb[0].mxu0
    %v3077 = vadd.f32 0.0, %v3076
    %v3078 = vpop.f32.mrb[0].mxu0
    %3079 = vmatprep.mubr.f32.mxu0 0.0
    %3080 = vmatmul.mubr.f32.gmra.mrb[0].mxu0 %v72
    %v3081 = vpop.f32.mrb[0].mxu0
    %v3082 = vadd.f32 0.0, %v3081
    %v3083 = vpop.f32.mrb[0].mxu0
    %3084 = vmatprep.mubr.f32.mxu0 0.0
    %3085 = vmatmul.mubr.f32.gmra.mrb[0].mxu0 %v75
    %v3086 = vpop.f32.mrb[0].mxu0
    %v3087 = vadd.f32 0.0, %v3086
    %v3088 = vpop.f32.mrb[0].mxu0
    %3089 = vmatprep.mubr.f32.mxu0 0.0
    %3090 = vmatmul.mubr.f32.gmra.mrb[0].mxu0 %v78
    %v3091 = vpop.f32.mrb[0].mxu0
    %v3092 = vadd.f32 0.0, %v3091
    %v3093 = vpop.f32.mrb[0].mxu0
    %3094 = vmatprep.mubr.f32.mxu0 0.0
    %3095 = vmatmul.mubr.f32.gmra.mrb[0].mxu0 %v81
    %v3096 = vpop.f32.mrb[0].mxu0
    %v3097 = vadd.f32 0.0, %v3096
    %v3098 = vpop.f32.mrb[0].mxu0
    %3099 = vmatprep.mubr.f32.mxu0 0.0
    %3100 = vmatmul.mubr.f32.gmra.mrb[0].mxu0 %v84
    %v3101 = vpop.f32.mrb[0].mxu0
    %v3102 = vadd.f32 0.0, %v3101
    %v3103 = vpop.f32.mrb[0].mxu0
    %3104 = vmatprep.mubr.f32.mxu0 0.0
    %3105 = vmatmul.mubr.f32.gmra.mrb[0].mxu0 %v87
    %v3106 = vpop.f32.mrb[0].mxu0
    %v3107 = vadd.f32 0.0, %v3106
    %v3108 = vpop.f32.mrb[0].mxu0
    %3109 = vdwg.mxu0
    %v3110 = vsel %vm40, %v3032, 0.0
    %3111 = vadd.xlane.f32.xlu0 %v3110
    %v3112 = vpop.xlane.xlu0 %3111
    %v3113 = vsel %vm40, %v3037, 0.0
    %3114 = vadd.xlane.f32.xlu0 %v3113
    %v3115 = vpop.xlane.xlu0 %3114
    %v3116 = vsel %vm40, %v3042, 0.0
    %3117 = vadd.xlane.f32.xlu0 %v3116
    %v3118 = vpop.xlane.xlu0 %3117
    %v3119 = vsel %vm40, %v3047, 0.0
    %3120 = vadd.xlane.f32.xlu0 %v3119
    %v3121 = vpop.xlane.xlu0 %3120
    %v3122 = vsel %vm40, %v3052, 0.0
    %3123 = vadd.xlane.f32.xlu0 %v3122
    %v3124 = vpop.xlane.xlu0 %3123
    %v3125 = vsel %vm40, %v3057, 0.0
    %3126 = vadd.xlane.f32.xlu0 %v3125
    %v3127 = vpop.xlane.xlu0 %3126
    %v3128 = vsel %vm40, %v3062, 0.0
    %3129 = vadd.xlane.f32.xlu0 %v3128
    %v3130 = vpop.xlane.xlu0 %3129
    %v3131 = vsel %vm40, %v3067, 0.0
    %3132 = vadd.xlane.f32.xlu0 %v3131
    %v3133 = vpop.xlane.xlu0 %3132
    %v3134 = vsel %vm40, %v3072, 0.0
    %3135 = vadd.xlane.f32.xlu0 %v3134
    %v3136 = vpop.xlane.xlu0 %3135
    %v3137 = vsel %vm40, %v3077, 0.0
    %3138 = vadd.xlane.f32.xlu0 %v3137
    %v3139 = vpop.xlane.xlu0 %3138
    %v3140 = vsel %vm40, %v3082, 0.0
    %3141 = vadd.xlane.f32.xlu0 %v3140
    %v3142 = vpop.xlane.xlu0 %3141
    %v3143 = vsel %vm40, %v3087, 0.0
    %3144 = vadd.xlane.f32.xlu0 %v3143
    %v3145 = vpop.xlane.xlu0 %3144
    %v3146 = vsel %vm40, %v3092, 0.0
    %3147 = vadd.xlane.f32.xlu0 %v3146
    %v3148 = vpop.xlane.xlu0 %3147
    %v3149 = vsel %vm40, %v3097, 0.0
    %3150 = vadd.xlane.f32.xlu0 %v3149
    %v3151 = vpop.xlane.xlu0 %3150
    %v3152 = vsel %vm40, %v3102, 0.0
    %3153 = vadd.xlane.f32.xlu0 %v3152
    %v3154 = vpop.xlane.xlu0 %3153
    %v3155 = vsel %vm40, %v3107, 0.0
    %3156 = vadd.xlane.f32.xlu0 %v3155
    %v3157 = vpop.xlane.xlu0 %3156
    %v3158 = vmul.f32 %v3112, %v282
    %v3159 = vmul.f32 %v3115, %v282
    %v3160 = vmul.f32 %v3118, %v282
    %v3161 = vmul.f32 %v3121, %v282
    %v3162 = vmul.f32 %v3124, %v282
    %v3163 = vmul.f32 %v3127, %v282
    %v3164 = vmul.f32 %v3130, %v282
    %v3165 = vmul.f32 %v3133, %v282
    %v3166 = vmul.f32 %v3136, %v282
    %v3167 = vmul.f32 %v3139, %v282
    %v3168 = vmul.f32 %v3142, %v282
    %v3169 = vmul.f32 %v3145, %v282
    %v3170 = vmul.f32 %v3148, %v282
    %v3171 = vmul.f32 %v3151, %v282
    %v3172 = vmul.f32 %v3154, %v282
    %v3173 = vmul.f32 %v3157, %v282
    %v3174 = vsub.f32 %v3032, %v3158
    %v3175 = vsub.f32 %v3037, %v3159
    %v3176 = vsub.f32 %v3042, %v3160
    %v3177 = vsub.f32 %v3047, %v3161
    %v3178 = vsub.f32 %v3052, %v3162
    %v3179 = vsub.f32 %v3057, %v3163
    %v3180 = vsub.f32 %v3062, %v3164
    %v3181 = vsub.f32 %v3067, %v3165
    %v3182 = vsub.f32 %v3072, %v3166
    %v3183 = vsub.f32 %v3077, %v3167
    %v3184 = vsub.f32 %v3082, %v3168
    %v3185 = vsub.f32 %v3087, %v3169
    %v3186 = vsub.f32 %v3092, %v3170
    %v3187 = vsub.f32 %v3097, %v3171
    %v3188 = vsub.f32 %v3102, %v3172
    %v3189 = vsub.f32 %v3107, %v3173
    %v3190 = vmul.f32 %v3174, %v3174
    %v3191 = vmul.f32 %v3175, %v3175
    %v3192 = vmul.f32 %v3176, %v3176
    %v3193 = vmul.f32 %v3177, %v3177
    %v3194 = vmul.f32 %v3178, %v3178
    %v3195 = vmul.f32 %v3179, %v3179
    %v3196 = vmul.f32 %v3180, %v3180
    %v3197 = vmul.f32 %v3181, %v3181
    %v3198 = vmul.f32 %v3182, %v3182
    %v3199 = vmul.f32 %v3183, %v3183
    %v3200 = vmul.f32 %v3184, %v3184
    %v3201 = vmul.f32 %v3185, %v3185
    %v3202 = vmul.f32 %v3186, %v3186
    %v3203 = vmul.f32 %v3187, %v3187
    %v3204 = vmul.f32 %v3188, %v3188
    %v3205 = vmul.f32 %v3189, %v3189
    %v3206 = vsel %vm40, %v3190, 0.0
    %3207 = vadd.xlane.f32.xlu0 %v3206
    %v3208 = vpop.xlane.xlu0 %3207
    %v3209 = vsel %vm40, %v3191, 0.0
    %3210 = vadd.xlane.f32.xlu0 %v3209
    %v3211 = vpop.xlane.xlu0 %3210
    %v3212 = vsel %vm40, %v3192, 0.0
    %3213 = vadd.xlane.f32.xlu0 %v3212
    %v3214 = vpop.xlane.xlu0 %3213
    %v3215 = vsel %vm40, %v3193, 0.0
    %3216 = vadd.xlane.f32.xlu0 %v3215
    %v3217 = vpop.xlane.xlu0 %3216
    %v3218 = vsel %vm40, %v3194, 0.0
    %3219 = vadd.xlane.f32.xlu0 %v3218
    %v3220 = vpop.xlane.xlu0 %3219
    %v3221 = vsel %vm40, %v3195, 0.0
    %3222 = vadd.xlane.f32.xlu0 %v3221
    %v3223 = vpop.xlane.xlu0 %3222
    %v3224 = vsel %vm40, %v3196, 0.0
    %3225 = vadd.xlane.f32.xlu0 %v3224
    %v3226 = vpop.xlane.xlu0 %3225
    %v3227 = vsel %vm40, %v3197, 0.0
    %3228 = vadd.xlane.f32.xlu0 %v3227
    %v3229 = vpop.xlane.xlu0 %3228
    %v3230 = vsel %vm40, %v3198, 0.0
    %3231 = vadd.xlane.f32.xlu0 %v3230
    %v3232 = vpop.xlane.xlu0 %3231
    %v3233 = vsel %vm40, %v3199, 0.0
    %3234 = vadd.xlane.f32.xlu0 %v3233
    %v3235 = vpop.xlane.xlu0 %3234
    %v3236 = vsel %vm40, %v3200, 0.0
    %3237 = vadd.xlane.f32.xlu0 %v3236
    %v3238 = vpop.xlane.xlu0 %3237
    %v3239 = vsel %vm40, %v3201, 0.0
    %3240 = vadd.xlane.f32.xlu0 %v3239
    %v3241 = vpop.xlane.xlu0 %3240
    %v3242 = vsel %vm40, %v3202, 0.0
    %3243 = vadd.xlane.f32.xlu0 %v3242
    %v3244 = vpop.xlane.xlu0 %3243
    %v3245 = vsel %vm40, %v3203, 0.0
    %3246 = vadd.xlane.f32.xlu0 %v3245
    %v3247 = vpop.xlane.xlu0 %3246
    %v3248 = vsel %vm40, %v3204, 0.0
    %3249 = vadd.xlane.f32.xlu0 %v3248
    %v3250 = vpop.xlane.xlu0 %3249
    %v3251 = vsel %vm40, %v3205, 0.0
    %3252 = vadd.xlane.f32.xlu0 %v3251
    %v3253 = vpop.xlane.xlu0 %3252
    %v3254 = vmul.f32 %v3208, %v282
    %v3255 = vmul.f32 %v3211, %v282
    %v3256 = vmul.f32 %v3214, %v282
    %v3257 = vmul.f32 %v3217, %v282
    %v3258 = vmul.f32 %v3220, %v282
    %v3259 = vmul.f32 %v3223, %v282
    %v3260 = vmul.f32 %v3226, %v282
    %v3261 = vmul.f32 %v3229, %v282
    %v3262 = vmul.f32 %v3232, %v282
    %v3263 = vmul.f32 %v3235, %v282
    %v3264 = vmul.f32 %v3238, %v282
    %v3265 = vmul.f32 %v3241, %v282
    %v3266 = vmul.f32 %v3244, %v282
    %v3267 = vmul.f32 %v3247, %v282
    %v3268 = vmul.f32 %v3250, %v282
    %v3269 = vmul.f32 %v3253, %v282
    %v3270 = vadd.f32 %v3254, 1e-05
    %v3271 = vadd.f32 %v3255, 1e-05
    %v3272 = vadd.f32 %v3256, 1e-05
    %v3273 = vadd.f32 %v3257, 1e-05
    %v3274 = vadd.f32 %v3258, 1e-05
    %v3275 = vadd.f32 %v3259, 1e-05
    %v3276 = vadd.f32 %v3260, 1e-05
    %v3277 = vadd.f32 %v3261, 1e-05
    %v3278 = vadd.f32 %v3262, 1e-05
    %v3279 = vadd.f32 %v3263, 1e-05
    %v3280 = vadd.f32 %v3264, 1e-05
    %v3281 = vadd.f32 %v3265, 1e-05
    %v3282 = vadd.f32 %v3266, 1e-05
    %v3283 = vadd.f32 %v3267, 1e-05
    %v3284 = vadd.f32 %v3268, 1e-05
    %v3285 = vadd.f32 %v3269, 1e-05
    %v3286 = vrsqrt.pop %v3270
    %v3287 = vrsqrt.pop %v3271
    %v3288 = vrsqrt.pop %v3272
    %v3289 = vrsqrt.pop %v3273
    %v3290 = vrsqrt.pop %v3274
    %v3291 = vrsqrt.pop %v3275
    %v3292 = vrsqrt.pop %v3276
    %v3293 = vrsqrt.pop %v3277
    %v3294 = vrsqrt.pop %v3278
    %v3295 = vrsqrt.pop %v3279
    %v3296 = vrsqrt.pop %v3280
    %v3297 = vrsqrt.pop %v3281
    %v3298 = vrsqrt.pop %v3282
    %v3299 = vrsqrt.pop %v3283
    %v3300 = vrsqrt.pop %v3284
    %v3301 = vrsqrt.pop %v3285
    %v3302 = vmul.f32 %v3174, %v3286
    %v3303 = vmul.f32 %v3175, %v3287
    %v3304 = vmul.f32 %v3176, %v3288
    %v3305 = vmul.f32 %v3177, %v3289
    %v3306 = vmul.f32 %v3178, %v3290
    %v3307 = vmul.f32 %v3179, %v3291
    %v3308 = vmul.f32 %v3180, %v3292
    %v3309 = vmul.f32 %v3181, %v3293
    %v3310 = vmul.f32 %v3182, %v3294
    %v3311 = vmul.f32 %v3183, %v3295
    %v3312 = vmul.f32 %v3184, %v3296
    %v3313 = vmul.f32 %v3185, %v3297
    %v3314 = vmul.f32 %v3186, %v3298
    %v3315 = vmul.f32 %v3187, %v3299
    %v3316 = vmul.f32 %v3188, %v3300
    %v3317 = vmul.f32 %v3189, %v3301
    %3334 = vrot.lane.b32.xlu0 %v3032, 96
    %v3335 = vpop.permute.xlu0 %3334
    %3336 = vrot.lane.b32.xlu0 %v3037, 96
    %v3337 = vpop.permute.xlu0 %3336
    %3338 = vrot.lane.b32.xlu0 %v3042, 96
    %v3339 = vpop.permute.xlu0 %3338
    %3340 = vrot.lane.b32.xlu0 %v3047, 96
    %v3341 = vpop.permute.xlu0 %3340
    %3342 = vrot.lane.b32.xlu0 %v3052, 96
    %v3343 = vpop.permute.xlu0 %3342
    %3344 = vrot.lane.b32.xlu0 %v3057, 96
    %v3345 = vpop.permute.xlu0 %3344
    %3346 = vrot.lane.b32.xlu0 %v3062, 96
    %v3347 = vpop.permute.xlu0 %3346
    %3348 = vrot.lane.b32.xlu0 %v3067, 96
    %v3349 = vpop.permute.xlu0 %3348
    %3350 = vrot.lane.b32.xlu0 %v3072, 96
    %v3351 = vpop.permute.xlu0 %3350
    %3352 = vrot.lane.b32.xlu0 %v3077, 96
    %v3353 = vpop.permute.xlu0 %3352
    %3354 = vrot.lane.b32.xlu0 %v3082, 96
    %v3355 = vpop.permute.xlu0 %3354
    %3356 = vrot.lane.b32.xlu0 %v3087, 96
    %v3357 = vpop.permute.xlu0 %3356
    %3358 = vrot.lane.b32.xlu0 %v3092, 96
    %v3359 = vpop.permute.xlu0 %3358
    %3360 = vrot.lane.b32.xlu0 %v3097, 96
    %v3361 = vpop.permute.xlu0 %3360
    %3362 = vrot.lane.b32.xlu0 %v3102, 96
    %v3363 = vpop.permute.xlu0 %3362
    %3364 = vrot.lane.b32.xlu0 %v3107, 96
    %v3365 = vpop.permute.xlu0 %3364
    %v3382 = vsel %vm40, %v3335, 0.0
    %3383 = vadd.xlane.f32.xlu0 %v3382
    %v3384 = vpop.xlane.xlu0 %3383
    %v3385 = vsel %vm40, %v3337, 0.0
    %3386 = vadd.xlane.f32.xlu0 %v3385
    %v3387 = vpop.xlane.xlu0 %3386
    %v3388 = vsel %vm40, %v3339, 0.0
    %3389 = vadd.xlane.f32.xlu0 %v3388
    %v3390 = vpop.xlane.xlu0 %3389
    %v3391 = vsel %vm40, %v3341, 0.0
    %3392 = vadd.xlane.f32.xlu0 %v3391
    %v3393 = vpop.xlane.xlu0 %3392
    %v3394 = vsel %vm40, %v3343, 0.0
    %3395 = vadd.xlane.f32.xlu0 %v3394
    %v3396 = vpop.xlane.xlu0 %3395
    %v3397 = vsel %vm40, %v3345, 0.0
    %3398 = vadd.xlane.f32.xlu0 %v3397
    %v3399 = vpop.xlane.xlu0 %3398
    %v3400 = vsel %vm40, %v3347, 0.0
    %3401 = vadd.xlane.f32.xlu0 %v3400
    %v3402 = vpop.xlane.xlu0 %3401
    %v3403 = vsel %vm40, %v3349, 0.0
    %3404 = vadd.xlane.f32.xlu0 %v3403
    %v3405 = vpop.xlane.xlu0 %3404
    %v3406 = vsel %vm40, %v3351, 0.0
    %3407 = vadd.xlane.f32.xlu0 %v3406
    %v3408 = vpop.xlane.xlu0 %3407
    %v3409 = vsel %vm40, %v3353, 0.0
    %3410 = vadd.xlane.f32.xlu0 %v3409
    %v3411 = vpop.xlane.xlu0 %3410
    %v3412 = vsel %vm40, %v3355, 0.0
    %3413 = vadd.xlane.f32.xlu0 %v3412
    %v3414 = vpop.xlane.xlu0 %3413
    %v3415 = vsel %vm40, %v3357, 0.0
    %3416 = vadd.xlane.f32.xlu0 %v3415
    %v3417 = vpop.xlane.xlu0 %3416
    %v3418 = vsel %vm40, %v3359, 0.0
    %3419 = vadd.xlane.f32.xlu0 %v3418
    %v3420 = vpop.xlane.xlu0 %3419
    %v3421 = vsel %vm40, %v3361, 0.0
    %3422 = vadd.xlane.f32.xlu0 %v3421
    %v3423 = vpop.xlane.xlu0 %3422
    %v3424 = vsel %vm40, %v3363, 0.0
    %3425 = vadd.xlane.f32.xlu0 %v3424
    %v3426 = vpop.xlane.xlu0 %3425
    %v3427 = vsel %vm40, %v3365, 0.0
    %3428 = vadd.xlane.f32.xlu0 %v3427
    %v3429 = vpop.xlane.xlu0 %3428
    %v3430 = vmul.f32 %v3384, %v282
    %v3431 = vmul.f32 %v3387, %v282
    %v3432 = vmul.f32 %v3390, %v282
    %v3433 = vmul.f32 %v3393, %v282
    %v3434 = vmul.f32 %v3396, %v282
    %v3435 = vmul.f32 %v3399, %v282
    %v3436 = vmul.f32 %v3402, %v282
    %v3437 = vmul.f32 %v3405, %v282
    %v3438 = vmul.f32 %v3408, %v282
    %v3439 = vmul.f32 %v3411, %v282
    %v3440 = vmul.f32 %v3414, %v282
    %v3441 = vmul.f32 %v3417, %v282
    %v3442 = vmul.f32 %v3420, %v282
    %v3443 = vmul.f32 %v3423, %v282
    %v3444 = vmul.f32 %v3426, %v282
    %v3445 = vmul.f32 %v3429, %v282
    %v3446 = vsub.f32 %v3032, %v3430
    %v3447 = vsub.f32 %v3037, %v3431
    %v3448 = vsub.f32 %v3042, %v3432
    %v3449 = vsub.f32 %v3047, %v3433
    %v3450 = vsub.f32 %v3052, %v3434
    %v3451 = vsub.f32 %v3057, %v3435
    %v3452 = vsub.f32 %v3062, %v3436
    %v3453 = vsub.f32 %v3067, %v3437
    %v3454 = vsub.f32 %v3072, %v3438
    %v3455 = vsub.f32 %v3077, %v3439
    %v3456 = vsub.f32 %v3082, %v3440
    %v3457 = vsub.f32 %v3087, %v3441
    %v3458 = vsub.f32 %v3092, %v3442
    %v3459 = vsub.f32 %v3097, %v3443
    %v3460 = vsub.f32 %v3102, %v3444
    %v3461 = vsub.f32 %v3107, %v3445
    %v3462 = vmul.f32 %v3446, %v3446
    %v3463 = vmul.f32 %v3447, %v3447
    %v3464 = vmul.f32 %v3448, %v3448
    %v3465 = vmul.f32 %v3449, %v3449
    %v3466 = vmul.f32 %v3450, %v3450
    %v3467 = vmul.f32 %v3451, %v3451
    %v3468 = vmul.f32 %v3452, %v3452
    %v3469 = vmul.f32 %v3453, %v3453
    %v3470 = vmul.f32 %v3454, %v3454
    %v3471 = vmul.f32 %v3455, %v3455
    %v3472 = vmul.f32 %v3456, %v3456
    %v3473 = vmul.f32 %v3457, %v3457
    %v3474 = vmul.f32 %v3458, %v3458
    %v3475 = vmul.f32 %v3459, %v3459
    %v3476 = vmul.f32 %v3460, %v3460
    %v3477 = vmul.f32 %v3461, %v3461
    %3494 = vrot.lane.b32.xlu0 %v3462, 96
    %v3495 = vpop.permute.xlu0 %3494
    %3496 = vrot.lane.b32.xlu0 %v3463, 96
    %v3497 = vpop.permute.xlu0 %3496
    %3498 = vrot.lane.b32.xlu0 %v3464, 96
    %v3499 = vpop.permute.xlu0 %3498
    %3500 = vrot.lane.b32.xlu0 %v3465, 96
    %v3501 = vpop.permute.xlu0 %3500
    %3502 = vrot.lane.b32.xlu0 %v3466, 96
    %v3503 = vpop.permute.xlu0 %3502
    %3504 = vrot.lane.b32.xlu0 %v3467, 96
    %v3505 = vpop.permute.xlu0 %3504
    %3506 = vrot.lane.b32.xlu0 %v3468, 96
    %v3507 = vpop.permute.xlu0 %3506
    %3508 = vrot.lane.b32.xlu0 %v3469, 96
    %v3509 = vpop.permute.xlu0 %3508
    %3510 = vrot.lane.b32.xlu0 %v3470, 96
    %v3511 = vpop.permute.xlu0 %3510
    %3512 = vrot.lane.b32.xlu0 %v3471, 96
    %v3513 = vpop.permute.xlu0 %3512
    %3514 = vrot.lane.b32.xlu0 %v3472, 96
    %v3515 = vpop.permute.xlu0 %3514
    %3516 = vrot.lane.b32.xlu0 %v3473, 96
    %v3517 = vpop.permute.xlu0 %3516
    %3518 = vrot.lane.b32.xlu0 %v3474, 96
    %v3519 = vpop.permute.xlu0 %3518
    %3520 = vrot.lane.b32.xlu0 %v3475, 96
    %v3521 = vpop.permute.xlu0 %3520
    %3522 = vrot.lane.b32.xlu0 %v3476, 96
    %v3523 = vpop.permute.xlu0 %3522
    %3524 = vrot.lane.b32.xlu0 %v3477, 96
    %v3525 = vpop.permute.xlu0 %3524
    %v3542 = vsel %vm40, %v3495, 0.0
    %3543 = vadd.xlane.f32.xlu0 %v3542
    %v3544 = vpop.xlane.xlu0 %3543
    %v3545 = vsel %vm40, %v3497, 0.0
    %3546 = vadd.xlane.f32.xlu0 %v3545
    %v3547 = vpop.xlane.xlu0 %3546
    %v3548 = vsel %vm40, %v3499, 0.0
    %3549 = vadd.xlane.f32.xlu0 %v3548
    %v3550 = vpop.xlane.xlu0 %3549
    %v3551 = vsel %vm40, %v3501, 0.0
    %3552 = vadd.xlane.f32.xlu0 %v3551
    %v3553 = vpop.xlane.xlu0 %3552
    %v3554 = vsel %vm40, %v3503, 0.0
    %3555 = vadd.xlane.f32.xlu0 %v3554
    %v3556 = vpop.xlane.xlu0 %3555
    %v3557 = vsel %vm40, %v3505, 0.0
    %3558 = vadd.xlane.f32.xlu0 %v3557
    %v3559 = vpop.xlane.xlu0 %3558
    %v3560 = vsel %vm40, %v3507, 0.0
    %3561 = vadd.xlane.f32.xlu0 %v3560
    %v3562 = vpop.xlane.xlu0 %3561
    %v3563 = vsel %vm40, %v3509, 0.0
    %3564 = vadd.xlane.f32.xlu0 %v3563
    %v3565 = vpop.xlane.xlu0 %3564
    %v3566 = vsel %vm40, %v3511, 0.0
    %3567 = vadd.xlane.f32.xlu0 %v3566
    %v3568 = vpop.xlane.xlu0 %3567
    %v3569 = vsel %vm40, %v3513, 0.0
    %3570 = vadd.xlane.f32.xlu0 %v3569
    %v3571 = vpop.xlane.xlu0 %3570
    %v3572 = vsel %vm40, %v3515, 0.0
    %3573 = vadd.xlane.f32.xlu0 %v3572
    %v3574 = vpop.xlane.xlu0 %3573
    %v3575 = vsel %vm40, %v3517, 0.0
    %3576 = vadd.xlane.f32.xlu0 %v3575
    %v3577 = vpop.xlane.xlu0 %3576
    %v3578 = vsel %vm40, %v3519, 0.0
    %3579 = vadd.xlane.f32.xlu0 %v3578
    %v3580 = vpop.xlane.xlu0 %3579
    %v3581 = vsel %vm40, %v3521, 0.0
    %3582 = vadd.xlane.f32.xlu0 %v3581
    %v3583 = vpop.xlane.xlu0 %3582
    %v3584 = vsel %vm40, %v3523, 0.0
    %3585 = vadd.xlane.f32.xlu0 %v3584
    %v3586 = vpop.xlane.xlu0 %3585
    %v3587 = vsel %vm40, %v3525, 0.0
    %3588 = vadd.xlane.f32.xlu0 %v3587
    %v3589 = vpop.xlane.xlu0 %3588
    %v3590 = vmul.f32 %v3544, %v282
    %v3591 = vmul.f32 %v3547, %v282
    %v3592 = vmul.f32 %v3550, %v282
    %v3593 = vmul.f32 %v3553, %v282
    %v3594 = vmul.f32 %v3556, %v282
    %v3595 = vmul.f32 %v3559, %v282
    %v3596 = vmul.f32 %v3562, %v282
    %v3597 = vmul.f32 %v3565, %v282
    %v3598 = vmul.f32 %v3568, %v282
    %v3599 = vmul.f32 %v3571, %v282
    %v3600 = vmul.f32 %v3574, %v282
    %v3601 = vmul.f32 %v3577, %v282
    %v3602 = vmul.f32 %v3580, %v282
    %v3603 = vmul.f32 %v3583, %v282
    %v3604 = vmul.f32 %v3586, %v282
    %v3605 = vmul.f32 %v3589, %v282
    %v3606 = vadd.f32 %v3590, 1e-05
    %v3607 = vadd.f32 %v3591, 1e-05
    %v3608 = vadd.f32 %v3592, 1e-05
    %v3609 = vadd.f32 %v3593, 1e-05
    %v3610 = vadd.f32 %v3594, 1e-05
    %v3611 = vadd.f32 %v3595, 1e-05
    %v3612 = vadd.f32 %v3596, 1e-05
    %v3613 = vadd.f32 %v3597, 1e-05
    %v3614 = vadd.f32 %v3598, 1e-05
    %v3615 = vadd.f32 %v3599, 1e-05
    %v3616 = vadd.f32 %v3600, 1e-05
    %v3617 = vadd.f32 %v3601, 1e-05
    %v3618 = vadd.f32 %v3602, 1e-05
    %v3619 = vadd.f32 %v3603, 1e-05
    %v3620 = vadd.f32 %v3604, 1e-05
    %v3621 = vadd.f32 %v3605, 1e-05
    %v3622 = vrsqrt.pop %v3606
    %v3623 = vrsqrt.pop %v3607
    %v3624 = vrsqrt.pop %v3608
    %v3625 = vrsqrt.pop %v3609
    %v3626 = vrsqrt.pop %v3610
    %v3627 = vrsqrt.pop %v3611
    %v3628 = vrsqrt.pop %v3612
    %v3629 = vrsqrt.pop %v3613
    %v3630 = vrsqrt.pop %v3614
    %v3631 = vrsqrt.pop %v3615
    %v3632 = vrsqrt.pop %v3616
    %v3633 = vrsqrt.pop %v3617
    %v3634 = vrsqrt.pop %v3618
    %v3635 = vrsqrt.pop %v3619
    %v3636 = vrsqrt.pop %v3620
    %v3637 = vrsqrt.pop %v3621
    %v3638 = vmul.f32 %v3446, %v3622
    %v3639 = vmul.f32 %v3447, %v3623
    %v3640 = vmul.f32 %v3448, %v3624
    %v3641 = vmul.f32 %v3449, %v3625
    %v3642 = vmul.f32 %v3450, %v3626
    %v3643 = vmul.f32 %v3451, %v3627
    %v3644 = vmul.f32 %v3452, %v3628
    %v3645 = vmul.f32 %v3453, %v3629
    %v3646 = vmul.f32 %v3454, %v3630
    %v3647 = vmul.f32 %v3455, %v3631
    %v3648 = vmul.f32 %v3456, %v3632
    %v3649 = vmul.f32 %v3457, %v3633
    %v3650 = vmul.f32 %v3458, %v3634
    %v3651 = vmul.f32 %v3459, %v3635
    %v3652 = vmul.f32 %v3460, %v3636
    %v3653 = vmul.f32 %v3461, %v3637
    %3654 = vrot.lane.b32.xlu0 %v3032, 64
    %v3655 = vpop.permute.xlu0 %3654
    %3656 = vrot.lane.b32.xlu0 %v3037, 64
    %v3657 = vpop.permute.xlu0 %3656
    %3658 = vrot.lane.b32.xlu0 %v3042, 64
    %v3659 = vpop.permute.xlu0 %3658
    %3660 = vrot.lane.b32.xlu0 %v3047, 64
    %v3661 = vpop.permute.xlu0 %3660
    %3662 = vrot.lane.b32.xlu0 %v3052, 64
    %v3663 = vpop.permute.xlu0 %3662
    %3664 = vrot.lane.b32.xlu0 %v3057, 64
    %v3665 = vpop.permute.xlu0 %3664
    %3666 = vrot.lane.b32.xlu0 %v3062, 64
    %v3667 = vpop.permute.xlu0 %3666
    %3668 = vrot.lane.b32.xlu0 %v3067, 64
    %v3669 = vpop.permute.xlu0 %3668
    %3670 = vrot.lane.b32.xlu0 %v3072, 64
    %v3671 = vpop.permute.xlu0 %3670
    %3672 = vrot.lane.b32.xlu0 %v3077, 64
    %v3673 = vpop.permute.xlu0 %3672
    %3674 = vrot.lane.b32.xlu0 %v3082, 64
    %v3675 = vpop.permute.xlu0 %3674
    %3676 = vrot.lane.b32.xlu0 %v3087, 64
    %v3677 = vpop.permute.xlu0 %3676
    %3678 = vrot.lane.b32.xlu0 %v3092, 64
    %v3679 = vpop.permute.xlu0 %3678
    %3680 = vrot.lane.b32.xlu0 %v3097, 64
    %v3681 = vpop.permute.xlu0 %3680
    %3682 = vrot.lane.b32.xlu0 %v3102, 64
    %v3683 = vpop.permute.xlu0 %3682
    %3684 = vrot.lane.b32.xlu0 %v3107, 64
    %v3685 = vpop.permute.xlu0 %3684
    %v3702 = vsel %vm40, %v3655, 0.0
    %3703 = vadd.xlane.f32.xlu0 %v3702
    %v3704 = vpop.xlane.xlu0 %3703
    %v3705 = vsel %vm40, %v3657, 0.0
    %3706 = vadd.xlane.f32.xlu0 %v3705
    %v3707 = vpop.xlane.xlu0 %3706
    %v3708 = vsel %vm40, %v3659, 0.0
    %3709 = vadd.xlane.f32.xlu0 %v3708
    %v3710 = vpop.xlane.xlu0 %3709
    %v3711 = vsel %vm40, %v3661, 0.0
    %3712 = vadd.xlane.f32.xlu0 %v3711
    %v3713 = vpop.xlane.xlu0 %3712
    %v3714 = vsel %vm40, %v3663, 0.0
    %3715 = vadd.xlane.f32.xlu0 %v3714
    %v3716 = vpop.xlane.xlu0 %3715
    %v3717 = vsel %vm40, %v3665, 0.0
    %3718 = vadd.xlane.f32.xlu0 %v3717
    %v3719 = vpop.xlane.xlu0 %3718
    %v3720 = vsel %vm40, %v3667, 0.0
    %3721 = vadd.xlane.f32.xlu0 %v3720
    %v3722 = vpop.xlane.xlu0 %3721
    %v3723 = vsel %vm40, %v3669, 0.0
    %3724 = vadd.xlane.f32.xlu0 %v3723
    %v3725 = vpop.xlane.xlu0 %3724
    %v3726 = vsel %vm40, %v3671, 0.0
    %3727 = vadd.xlane.f32.xlu0 %v3726
    %v3728 = vpop.xlane.xlu0 %3727
    %v3729 = vsel %vm40, %v3673, 0.0
    %3730 = vadd.xlane.f32.xlu0 %v3729
    %v3731 = vpop.xlane.xlu0 %3730
    %v3732 = vsel %vm40, %v3675, 0.0
    %3733 = vadd.xlane.f32.xlu0 %v3732
    %v3734 = vpop.xlane.xlu0 %3733
    %v3735 = vsel %vm40, %v3677, 0.0
    %3736 = vadd.xlane.f32.xlu0 %v3735
    %v3737 = vpop.xlane.xlu0 %3736
    %v3738 = vsel %vm40, %v3679, 0.0
    %3739 = vadd.xlane.f32.xlu0 %v3738
    %v3740 = vpop.xlane.xlu0 %3739
    %v3741 = vsel %vm40, %v3681, 0.0
    %3742 = vadd.xlane.f32.xlu0 %v3741
    %v3743 = vpop.xlane.xlu0 %3742
    %v3744 = vsel %vm40, %v3683, 0.0
    %3745 = vadd.xlane.f32.xlu0 %v3744
    %v3746 = vpop.xlane.xlu0 %3745
    %v3747 = vsel %vm40, %v3685, 0.0
    %3748 = vadd.xlane.f32.xlu0 %v3747
    %v3749 = vpop.xlane.xlu0 %3748
    %v3750 = vmul.f32 %v3704, %v282
    %v3751 = vmul.f32 %v3707, %v282
    %v3752 = vmul.f32 %v3710, %v282
    %v3753 = vmul.f32 %v3713, %v282
    %v3754 = vmul.f32 %v3716, %v282
    %v3755 = vmul.f32 %v3719, %v282
    %v3756 = vmul.f32 %v3722, %v282
    %v3757 = vmul.f32 %v3725, %v282
    %v3758 = vmul.f32 %v3728, %v282
    %v3759 = vmul.f32 %v3731, %v282
    %v3760 = vmul.f32 %v3734, %v282
    %v3761 = vmul.f32 %v3737, %v282
    %v3762 = vmul.f32 %v3740, %v282
    %v3763 = vmul.f32 %v3743, %v282
    %v3764 = vmul.f32 %v3746, %v282
    %v3765 = vmul.f32 %v3749, %v282
    %v3766 = vsub.f32 %v3032, %v3750
    %v3767 = vsub.f32 %v3037, %v3751
    %v3768 = vsub.f32 %v3042, %v3752
    %v3769 = vsub.f32 %v3047, %v3753
    %v3770 = vsub.f32 %v3052, %v3754
    %v3771 = vsub.f32 %v3057, %v3755
    %v3772 = vsub.f32 %v3062, %v3756
    %v3773 = vsub.f32 %v3067, %v3757
    %v3774 = vsub.f32 %v3072, %v3758
    %v3775 = vsub.f32 %v3077, %v3759
    %v3776 = vsub.f32 %v3082, %v3760
    %v3777 = vsub.f32 %v3087, %v3761
    %v3778 = vsub.f32 %v3092, %v3762
    %v3779 = vsub.f32 %v3097, %v3763
    %v3780 = vsub.f32 %v3102, %v3764
    %v3781 = vsub.f32 %v3107, %v3765
    %v3782 = vmul.f32 %v3766, %v3766
    %v3783 = vmul.f32 %v3767, %v3767
    %v3784 = vmul.f32 %v3768, %v3768
    %v3785 = vmul.f32 %v3769, %v3769
    %v3786 = vmul.f32 %v3770, %v3770
    %v3787 = vmul.f32 %v3771, %v3771
    %v3788 = vmul.f32 %v3772, %v3772
    %v3789 = vmul.f32 %v3773, %v3773
    %v3790 = vmul.f32 %v3774, %v3774
    %v3791 = vmul.f32 %v3775, %v3775
    %v3792 = vmul.f32 %v3776, %v3776
    %v3793 = vmul.f32 %v3777, %v3777
    %v3794 = vmul.f32 %v3778, %v3778
    %v3795 = vmul.f32 %v3779, %v3779
    %v3796 = vmul.f32 %v3780, %v3780
    %v3797 = vmul.f32 %v3781, %v3781
    %3814 = vrot.lane.b32.xlu0 %v3782, 64
    %v3815 = vpop.permute.xlu0 %3814
    %3816 = vrot.lane.b32.xlu0 %v3783, 64
    %v3817 = vpop.permute.xlu0 %3816
    %3818 = vrot.lane.b32.xlu0 %v3784, 64
    %v3819 = vpop.permute.xlu0 %3818
    %3820 = vrot.lane.b32.xlu0 %v3785, 64
    %v3821 = vpop.permute.xlu0 %3820
    %3822 = vrot.lane.b32.xlu0 %v3786, 64
    %v3823 = vpop.permute.xlu0 %3822
    %3824 = vrot.lane.b32.xlu0 %v3787, 64
    %v3825 = vpop.permute.xlu0 %3824
    %3826 = vrot.lane.b32.xlu0 %v3788, 64
    %v3827 = vpop.permute.xlu0 %3826
    %3828 = vrot.lane.b32.xlu0 %v3789, 64
    %v3829 = vpop.permute.xlu0 %3828
    %3830 = vrot.lane.b32.xlu0 %v3790, 64
    %v3831 = vpop.permute.xlu0 %3830
    %3832 = vrot.lane.b32.xlu0 %v3791, 64
    %v3833 = vpop.permute.xlu0 %3832
    %3834 = vrot.lane.b32.xlu0 %v3792, 64
    %v3835 = vpop.permute.xlu0 %3834
    %3836 = vrot.lane.b32.xlu0 %v3793, 64
    %v3837 = vpop.permute.xlu0 %3836
    %3838 = vrot.lane.b32.xlu0 %v3794, 64
    %v3839 = vpop.permute.xlu0 %3838
    %3840 = vrot.lane.b32.xlu0 %v3795, 64
    %v3841 = vpop.permute.xlu0 %3840
    %3842 = vrot.lane.b32.xlu0 %v3796, 64
    %v3843 = vpop.permute.xlu0 %3842
    %3844 = vrot.lane.b32.xlu0 %v3797, 64
    %v3845 = vpop.permute.xlu0 %3844
    %v3862 = vsel %vm40, %v3815, 0.0
    %3863 = vadd.xlane.f32.xlu0 %v3862
    %v3864 = vpop.xlane.xlu0 %3863
    %v3865 = vsel %vm40, %v3817, 0.0
    %3866 = vadd.xlane.f32.xlu0 %v3865
    %v3867 = vpop.xlane.xlu0 %3866
    %v3868 = vsel %vm40, %v3819, 0.0
    %3869 = vadd.xlane.f32.xlu0 %v3868
    %v3870 = vpop.xlane.xlu0 %3869
    %v3871 = vsel %vm40, %v3821, 0.0
    %3872 = vadd.xlane.f32.xlu0 %v3871
    %v3873 = vpop.xlane.xlu0 %3872
    %v3874 = vsel %vm40, %v3823, 0.0
    %3875 = vadd.xlane.f32.xlu0 %v3874
    %v3876 = vpop.xlane.xlu0 %3875
    %v3877 = vsel %vm40, %v3825, 0.0
    %3878 = vadd.xlane.f32.xlu0 %v3877
    %v3879 = vpop.xlane.xlu0 %3878
    %v3880 = vsel %vm40, %v3827, 0.0
    %3881 = vadd.xlane.f32.xlu0 %v3880
    %v3882 = vpop.xlane.xlu0 %3881
    %v3883 = vsel %vm40, %v3829, 0.0
    %3884 = vadd.xlane.f32.xlu0 %v3883
    %v3885 = vpop.xlane.xlu0 %3884
    %v3886 = vsel %vm40, %v3831, 0.0
    %3887 = vadd.xlane.f32.xlu0 %v3886
    %v3888 = vpop.xlane.xlu0 %3887
    %v3889 = vsel %vm40, %v3833, 0.0
    %3890 = vadd.xlane.f32.xlu0 %v3889
    %v3891 = vpop.xlane.xlu0 %3890
    %v3892 = vsel %vm40, %v3835, 0.0
    %3893 = vadd.xlane.f32.xlu0 %v3892
    %v3894 = vpop.xlane.xlu0 %3893
    %v3895 = vsel %vm40, %v3837, 0.0
    %3896 = vadd.xlane.f32.xlu0 %v3895
    %v3897 = vpop.xlane.xlu0 %3896
    %v3898 = vsel %vm40, %v3839, 0.0
    %3899 = vadd.xlane.f32.xlu0 %v3898
    %v3900 = vpop.xlane.xlu0 %3899
    %v3901 = vsel %vm40, %v3841, 0.0
    %3902 = vadd.xlane.f32.xlu0 %v3901
    %v3903 = vpop.xlane.xlu0 %3902
    %v3904 = vsel %vm40, %v3843, 0.0
    %3905 = vadd.xlane.f32.xlu0 %v3904
    %v3906 = vpop.xlane.xlu0 %3905
    %v3907 = vsel %vm40, %v3845, 0.0
    %3908 = vadd.xlane.f32.xlu0 %v3907
    %v3909 = vpop.xlane.xlu0 %3908
    %v3910 = vmul.f32 %v3864, %v282
    %v3911 = vmul.f32 %v3867, %v282
    %v3912 = vmul.f32 %v3870, %v282
    %v3913 = vmul.f32 %v3873, %v282
    %v3914 = vmul.f32 %v3876, %v282
    %v3915 = vmul.f32 %v3879, %v282
    %v3916 = vmul.f32 %v3882, %v282
    %v3917 = vmul.f32 %v3885, %v282
    %v3918 = vmul.f32 %v3888, %v282
    %v3919 = vmul.f32 %v3891, %v282
    %v3920 = vmul.f32 %v3894, %v282
    %v3921 = vmul.f32 %v3897, %v282
    %v3922 = vmul.f32 %v3900, %v282
    %v3923 = vmul.f32 %v3903, %v282
    %v3924 = vmul.f32 %v3906, %v282
    %v3925 = vmul.f32 %v3909, %v282
    %v3926 = vadd.f32 %v3910, 1e-05
    %v3927 = vadd.f32 %v3911, 1e-05
    %v3928 = vadd.f32 %v3912, 1e-05
    %v3929 = vadd.f32 %v3913, 1e-05
    %v3930 = vadd.f32 %v3914, 1e-05
    %v3931 = vadd.f32 %v3915, 1e-05
    %v3932 = vadd.f32 %v3916, 1e-05
    %v3933 = vadd.f32 %v3917, 1e-05
    %v3934 = vadd.f32 %v3918, 1e-05
    %v3935 = vadd.f32 %v3919, 1e-05
    %v3936 = vadd.f32 %v3920, 1e-05
    %v3937 = vadd.f32 %v3921, 1e-05
    %v3938 = vadd.f32 %v3922, 1e-05
    %v3939 = vadd.f32 %v3923, 1e-05
    %v3940 = vadd.f32 %v3924, 1e-05
    %v3941 = vadd.f32 %v3925, 1e-05
    %v3942 = vrsqrt.pop %v3926
    %v3943 = vrsqrt.pop %v3927
    %v3944 = vrsqrt.pop %v3928
    %v3945 = vrsqrt.pop %v3929
    %v3946 = vrsqrt.pop %v3930
    %v3947 = vrsqrt.pop %v3931
    %v3948 = vrsqrt.pop %v3932
    %v3949 = vrsqrt.pop %v3933
    %v3950 = vrsqrt.pop %v3934
    %v3951 = vrsqrt.pop %v3935
    %v3952 = vrsqrt.pop %v3936
    %v3953 = vrsqrt.pop %v3937
    %v3954 = vrsqrt.pop %v3938
    %v3955 = vrsqrt.pop %v3939
    %v3956 = vrsqrt.pop %v3940
    %v3957 = vrsqrt.pop %v3941
    %v3958 = vmul.f32 %v3766, %v3942
    %v3959 = vmul.f32 %v3767, %v3943
    %v3960 = vmul.f32 %v3768, %v3944
    %v3961 = vmul.f32 %v3769, %v3945
    %v3962 = vmul.f32 %v3770, %v3946
    %v3963 = vmul.f32 %v3771, %v3947
    %v3964 = vmul.f32 %v3772, %v3948
    %v3965 = vmul.f32 %v3773, %v3949
    %v3966 = vmul.f32 %v3774, %v3950
    %v3967 = vmul.f32 %v3775, %v3951
    %v3968 = vmul.f32 %v3776, %v3952
    %v3969 = vmul.f32 %v3777, %v3953
    %v3970 = vmul.f32 %v3778, %v3954
    %v3971 = vmul.f32 %v3779, %v3955
    %v3972 = vmul.f32 %v3780, %v3956
    %v3973 = vmul.f32 %v3781, %v3957
    %3974 = vrot.lane.b32.xlu0 %v3032, 32
    %v3975 = vpop.permute.xlu0 %3974
    %3976 = vrot.lane.b32.xlu0 %v3037, 32
    %v3977 = vpop.permute.xlu0 %3976
    %3978 = vrot.lane.b32.xlu0 %v3042, 32
    %v3979 = vpop.permute.xlu0 %3978
    %3980 = vrot.lane.b32.xlu0 %v3047, 32
    %v3981 = vpop.permute.xlu0 %3980
    %3982 = vrot.lane.b32.xlu0 %v3052, 32
    %v3983 = vpop.permute.xlu0 %3982
    %3984 = vrot.lane.b32.xlu0 %v3057, 32
    %v3985 = vpop.permute.xlu0 %3984
    %3986 = vrot.lane.b32.xlu0 %v3062, 32
    %v3987 = vpop.permute.xlu0 %3986
    %3988 = vrot.lane.b32.xlu0 %v3067, 32
    %v3989 = vpop.permute.xlu0 %3988
    %3990 = vrot.lane.b32.xlu0 %v3072, 32
    %v3991 = vpop.permute.xlu0 %3990
    %3992 = vrot.lane.b32.xlu0 %v3077, 32
    %v3993 = vpop.permute.xlu0 %3992
    %3994 = vrot.lane.b32.xlu0 %v3082, 32
    %v3995 = vpop.permute.xlu0 %3994
    %3996 = vrot.lane.b32.xlu0 %v3087, 32
    %v3997 = vpop.permute.xlu0 %3996
    %3998 = vrot.lane.b32.xlu0 %v3092, 32
    %v3999 = vpop.permute.xlu0 %3998
    %4000 = vrot.lane.b32.xlu0 %v3097, 32
    %v4001 = vpop.permute.xlu0 %4000
    %4002 = vrot.lane.b32.xlu0 %v3102, 32
    %v4003 = vpop.permute.xlu0 %4002
    %4004 = vrot.lane.b32.xlu0 %v3107, 32
    %v4005 = vpop.permute.xlu0 %4004
    %v4022 = vsel %vm40, %v3975, 0.0
    %4023 = vadd.xlane.f32.xlu0 %v4022
    %v4024 = vpop.xlane.xlu0 %4023
    %v4025 = vsel %vm40, %v3977, 0.0
    %4026 = vadd.xlane.f32.xlu0 %v4025
    %v4027 = vpop.xlane.xlu0 %4026
    %v4028 = vsel %vm40, %v3979, 0.0
    %4029 = vadd.xlane.f32.xlu0 %v4028
    %v4030 = vpop.xlane.xlu0 %4029
    %v4031 = vsel %vm40, %v3981, 0.0
    %4032 = vadd.xlane.f32.xlu0 %v4031
    %v4033 = vpop.xlane.xlu0 %4032
    %v4034 = vsel %vm40, %v3983, 0.0
    %4035 = vadd.xlane.f32.xlu0 %v4034
    %v4036 = vpop.xlane.xlu0 %4035
    %v4037 = vsel %vm40, %v3985, 0.0
    %4038 = vadd.xlane.f32.xlu0 %v4037
    %v4039 = vpop.xlane.xlu0 %4038
    %v4040 = vsel %vm40, %v3987, 0.0
    %4041 = vadd.xlane.f32.xlu0 %v4040
    %v4042 = vpop.xlane.xlu0 %4041
    %v4043 = vsel %vm40, %v3989, 0.0
    %4044 = vadd.xlane.f32.xlu0 %v4043
    %v4045 = vpop.xlane.xlu0 %4044
    %v4046 = vsel %vm40, %v3991, 0.0
    %4047 = vadd.xlane.f32.xlu0 %v4046
    %v4048 = vpop.xlane.xlu0 %4047
    %v4049 = vsel %vm40, %v3993, 0.0
    %4050 = vadd.xlane.f32.xlu0 %v4049
    %v4051 = vpop.xlane.xlu0 %4050
    %v4052 = vsel %vm40, %v3995, 0.0
    %4053 = vadd.xlane.f32.xlu0 %v4052
    %v4054 = vpop.xlane.xlu0 %4053
    %v4055 = vsel %vm40, %v3997, 0.0
    %4056 = vadd.xlane.f32.xlu0 %v4055
    %v4057 = vpop.xlane.xlu0 %4056
    %v4058 = vsel %vm40, %v3999, 0.0
    %4059 = vadd.xlane.f32.xlu0 %v4058
    %v4060 = vpop.xlane.xlu0 %4059
    %v4061 = vsel %vm40, %v4001, 0.0
    %4062 = vadd.xlane.f32.xlu0 %v4061
    %v4063 = vpop.xlane.xlu0 %4062
    %v4064 = vsel %vm40, %v4003, 0.0
    %4065 = vadd.xlane.f32.xlu0 %v4064
    %v4066 = vpop.xlane.xlu0 %4065
    %v4067 = vsel %vm40, %v4005, 0.0
    %4068 = vadd.xlane.f32.xlu0 %v4067
    %v4069 = vpop.xlane.xlu0 %4068
    %v4070 = vmul.f32 %v4024, %v282
    %v4071 = vmul.f32 %v4027, %v282
    %v4072 = vmul.f32 %v4030, %v282
    %v4073 = vmul.f32 %v4033, %v282
    %v4074 = vmul.f32 %v4036, %v282
    %v4075 = vmul.f32 %v4039, %v282
    %v4076 = vmul.f32 %v4042, %v282
    %v4077 = vmul.f32 %v4045, %v282
    %v4078 = vmul.f32 %v4048, %v282
    %v4079 = vmul.f32 %v4051, %v282
    %v4080 = vmul.f32 %v4054, %v282
    %v4081 = vmul.f32 %v4057, %v282
    %v4082 = vmul.f32 %v4060, %v282
    %v4083 = vmul.f32 %v4063, %v282
    %v4084 = vmul.f32 %v4066, %v282
    %v4085 = vmul.f32 %v4069, %v282
    %v4086 = vsub.f32 %v3032, %v4070
    %v4087 = vsub.f32 %v3037, %v4071
    %v4088 = vsub.f32 %v3042, %v4072
    %v4089 = vsub.f32 %v3047, %v4073
    %v4090 = vsub.f32 %v3052, %v4074
    %v4091 = vsub.f32 %v3057, %v4075
    %v4092 = vsub.f32 %v3062, %v4076
    %v4093 = vsub.f32 %v3067, %v4077
    %v4094 = vsub.f32 %v3072, %v4078
    %v4095 = vsub.f32 %v3077, %v4079
    %v4096 = vsub.f32 %v3082, %v4080
    %v4097 = vsub.f32 %v3087, %v4081
    %v4098 = vsub.f32 %v3092, %v4082
    %v4099 = vsub.f32 %v3097, %v4083
    %v4100 = vsub.f32 %v3102, %v4084
    %v4101 = vsub.f32 %v3107, %v4085
    %v4102 = vmul.f32 %v4086, %v4086
    %v4103 = vmul.f32 %v4087, %v4087
    %v4104 = vmul.f32 %v4088, %v4088
    %v4105 = vmul.f32 %v4089, %v4089
    %v4106 = vmul.f32 %v4090, %v4090
    %v4107 = vmul.f32 %v4091, %v4091
    %v4108 = vmul.f32 %v4092, %v4092
    %v4109 = vmul.f32 %v4093, %v4093
    %v4110 = vmul.f32 %v4094, %v4094
    %v4111 = vmul.f32 %v4095, %v4095
    %v4112 = vmul.f32 %v4096, %v4096
    %v4113 = vmul.f32 %v4097, %v4097
    %v4114 = vmul.f32 %v4098, %v4098
    %v4115 = vmul.f32 %v4099, %v4099
    %v4116 = vmul.f32 %v4100, %v4100
    %v4117 = vmul.f32 %v4101, %v4101
    %4134 = vrot.lane.b32.xlu0 %v4102, 32
    %v4135 = vpop.permute.xlu0 %4134
    %4136 = vrot.lane.b32.xlu0 %v4103, 32
    %v4137 = vpop.permute.xlu0 %4136
    %4138 = vrot.lane.b32.xlu0 %v4104, 32
    %v4139 = vpop.permute.xlu0 %4138
    %4140 = vrot.lane.b32.xlu0 %v4105, 32
    %v4141 = vpop.permute.xlu0 %4140
    %4142 = vrot.lane.b32.xlu0 %v4106, 32
    %v4143 = vpop.permute.xlu0 %4142
    %4144 = vrot.lane.b32.xlu0 %v4107, 32
    %v4145 = vpop.permute.xlu0 %4144
    %4146 = vrot.lane.b32.xlu0 %v4108, 32
    %v4147 = vpop.permute.xlu0 %4146
    %4148 = vrot.lane.b32.xlu0 %v4109, 32
    %v4149 = vpop.permute.xlu0 %4148
    %4150 = vrot.lane.b32.xlu0 %v4110, 32
    %v4151 = vpop.permute.xlu0 %4150
    %4152 = vrot.lane.b32.xlu0 %v4111, 32
    %v4153 = vpop.permute.xlu0 %4152
    %4154 = vrot.lane.b32.xlu0 %v4112, 32
    %v4155 = vpop.permute.xlu0 %4154
    %4156 = vrot.lane.b32.xlu0 %v4113, 32
    %v4157 = vpop.permute.xlu0 %4156
    %4158 = vrot.lane.b32.xlu0 %v4114, 32
    %v4159 = vpop.permute.xlu0 %4158
    %4160 = vrot.lane.b32.xlu0 %v4115, 32
    %v4161 = vpop.permute.xlu0 %4160
    %4162 = vrot.lane.b32.xlu0 %v4116, 32
    %v4163 = vpop.permute.xlu0 %4162
    %4164 = vrot.lane.b32.xlu0 %v4117, 32
    %v4165 = vpop.permute.xlu0 %4164
    %v4182 = vsel %vm40, %v4135, 0.0
    %4183 = vadd.xlane.f32.xlu0 %v4182
    %v4184 = vpop.xlane.xlu0 %4183
    %v4185 = vsel %vm40, %v4137, 0.0
    %4186 = vadd.xlane.f32.xlu0 %v4185
    %v4187 = vpop.xlane.xlu0 %4186
    %v4188 = vsel %vm40, %v4139, 0.0
    %4189 = vadd.xlane.f32.xlu0 %v4188
    %v4190 = vpop.xlane.xlu0 %4189
    %v4191 = vsel %vm40, %v4141, 0.0
    %4192 = vadd.xlane.f32.xlu0 %v4191
    %v4193 = vpop.xlane.xlu0 %4192
    %v4194 = vsel %vm40, %v4143, 0.0
    %4195 = vadd.xlane.f32.xlu0 %v4194
    %v4196 = vpop.xlane.xlu0 %4195
    %v4197 = vsel %vm40, %v4145, 0.0
    %4198 = vadd.xlane.f32.xlu0 %v4197
    %v4199 = vpop.xlane.xlu0 %4198
    %v4200 = vsel %vm40, %v4147, 0.0
    %4201 = vadd.xlane.f32.xlu0 %v4200
    %v4202 = vpop.xlane.xlu0 %4201
    %v4203 = vsel %vm40, %v4149, 0.0
    %4204 = vadd.xlane.f32.xlu0 %v4203
    %v4205 = vpop.xlane.xlu0 %4204
    %v4206 = vsel %vm40, %v4151, 0.0
    %4207 = vadd.xlane.f32.xlu0 %v4206
    %v4208 = vpop.xlane.xlu0 %4207
    %v4209 = vsel %vm40, %v4153, 0.0
    %4210 = vadd.xlane.f32.xlu0 %v4209
    %v4211 = vpop.xlane.xlu0 %4210
    %v4212 = vsel %vm40, %v4155, 0.0
    %4213 = vadd.xlane.f32.xlu0 %v4212
    %v4214 = vpop.xlane.xlu0 %4213
    %v4215 = vsel %vm40, %v4157, 0.0
    %4216 = vadd.xlane.f32.xlu0 %v4215
    %v4217 = vpop.xlane.xlu0 %4216
    %v4218 = vsel %vm40, %v4159, 0.0
    %4219 = vadd.xlane.f32.xlu0 %v4218
    %v4220 = vpop.xlane.xlu0 %4219
    %v4221 = vsel %vm40, %v4161, 0.0
    %4222 = vadd.xlane.f32.xlu0 %v4221
    %v4223 = vpop.xlane.xlu0 %4222
    %v4224 = vsel %vm40, %v4163, 0.0
    %4225 = vadd.xlane.f32.xlu0 %v4224
    %v4226 = vpop.xlane.xlu0 %4225
    %v4227 = vsel %vm40, %v4165, 0.0
    %4228 = vadd.xlane.f32.xlu0 %v4227
    %v4229 = vpop.xlane.xlu0 %4228
    %v4230 = vmul.f32 %v4184, %v282
    %v4231 = vmul.f32 %v4187, %v282
    %v4232 = vmul.f32 %v4190, %v282
    %v4233 = vmul.f32 %v4193, %v282
    %v4234 = vmul.f32 %v4196, %v282
    %v4235 = vmul.f32 %v4199, %v282
    %v4236 = vmul.f32 %v4202, %v282
    %v4237 = vmul.f32 %v4205, %v282
    %v4238 = vmul.f32 %v4208, %v282
    %v4239 = vmul.f32 %v4211, %v282
    %v4240 = vmul.f32 %v4214, %v282
    %v4241 = vmul.f32 %v4217, %v282
    %v4242 = vmul.f32 %v4220, %v282
    %v4243 = vmul.f32 %v4223, %v282
    %v4244 = vmul.f32 %v4226, %v282
    %v4245 = vmul.f32 %v4229, %v282
    %v4246 = vadd.f32 %v4230, 1e-05
    %v4247 = vadd.f32 %v4231, 1e-05
    %v4248 = vadd.f32 %v4232, 1e-05
    %v4249 = vadd.f32 %v4233, 1e-05
    %v4250 = vadd.f32 %v4234, 1e-05
    %v4251 = vadd.f32 %v4235, 1e-05
    %v4252 = vadd.f32 %v4236, 1e-05
    %v4253 = vadd.f32 %v4237, 1e-05
    %v4254 = vadd.f32 %v4238, 1e-05
    %v4255 = vadd.f32 %v4239, 1e-05
    %v4256 = vadd.f32 %v4240, 1e-05
    %v4257 = vadd.f32 %v4241, 1e-05
    %v4258 = vadd.f32 %v4242, 1e-05
    %v4259 = vadd.f32 %v4243, 1e-05
    %v4260 = vadd.f32 %v4244, 1e-05
    %v4261 = vadd.f32 %v4245, 1e-05
    %v4262 = vrsqrt.pop %v4246
    %v4263 = vrsqrt.pop %v4247
    %v4264 = vrsqrt.pop %v4248
    %v4265 = vrsqrt.pop %v4249
    %v4266 = vrsqrt.pop %v4250
    %v4267 = vrsqrt.pop %v4251
    %v4268 = vrsqrt.pop %v4252
    %v4269 = vrsqrt.pop %v4253
    %v4270 = vrsqrt.pop %v4254
    %v4271 = vrsqrt.pop %v4255
    %v4272 = vrsqrt.pop %v4256
    %v4273 = vrsqrt.pop %v4257
    %v4274 = vrsqrt.pop %v4258
    %v4275 = vrsqrt.pop %v4259
    %v4276 = vrsqrt.pop %v4260
    %v4277 = vrsqrt.pop %v4261
    %v4278 = vmul.f32 %v4086, %v4262
    %v4279 = vmul.f32 %v4087, %v4263
    %v4280 = vmul.f32 %v4088, %v4264
    %v4281 = vmul.f32 %v4089, %v4265
    %v4282 = vmul.f32 %v4090, %v4266
    %v4283 = vmul.f32 %v4091, %v4267
    %v4284 = vmul.f32 %v4092, %v4268
    %v4285 = vmul.f32 %v4093, %v4269
    %v4286 = vmul.f32 %v4094, %v4270
    %v4287 = vmul.f32 %v4095, %v4271
    %v4288 = vmul.f32 %v4096, %v4272
    %v4289 = vmul.f32 %v4097, %v4273
    %v4290 = vmul.f32 %v4098, %v4274
    %v4291 = vmul.f32 %v4099, %v4275
    %v4292 = vmul.f32 %v4100, %v4276
    %v4293 = vmul.f32 %v4101, %v4277
    %v4294 = vsel %vm40, %v3302, %v3638
    %v4295 = vsel %vm40, %v3303, %v3639
    %v4296 = vsel %vm40, %v3304, %v3640
    %v4297 = vsel %vm40, %v3305, %v3641
    %v4298 = vsel %vm40, %v3306, %v3642
    %v4299 = vsel %vm40, %v3307, %v3643
    %v4300 = vsel %vm40, %v3308, %v3644
    %v4301 = vsel %vm40, %v3309, %v3645
    %v4302 = vsel %vm40, %v3310, %v3646
    %v4303 = vsel %vm40, %v3311, %v3647
    %v4304 = vsel %vm40, %v3312, %v3648
    %v4305 = vsel %vm40, %v3313, %v3649
    %v4306 = vsel %vm40, %v3314, %v3650
    %v4307 = vsel %vm40, %v3315, %v3651
    %v4308 = vsel %vm40, %v3316, %v3652
    %v4309 = vsel %vm40, %v3317, %v3653
    %v4310 = vsel %vm1435, %v4294, %v3958
    %v4311 = vsel %vm1435, %v4295, %v3959
    %v4312 = vsel %vm1435, %v4296, %v3960
    %v4313 = vsel %vm1435, %v4297, %v3961
    %v4314 = vsel %vm1435, %v4298, %v3962
    %v4315 = vsel %vm1435, %v4299, %v3963
    %v4316 = vsel %vm1435, %v4300, %v3964
    %v4317 = vsel %vm1435, %v4301, %v3965
    %v4318 = vsel %vm1435, %v4302, %v3966
    %v4319 = vsel %vm1435, %v4303, %v3967
    %v4320 = vsel %vm1435, %v4304, %v3968
    %v4321 = vsel %vm1435, %v4305, %v3969
    %v4322 = vsel %vm1435, %v4306, %v3970
    %v4323 = vsel %vm1435, %v4307, %v3971
    %v4324 = vsel %vm1435, %v4308, %v3972
    %v4325 = vsel %vm1435, %v4309, %v3973
    %v4326 = vsel %vm1452, %v4310, %v4278
    %v4327 = vsel %vm1452, %v4311, %v4279
    %v4328 = vsel %vm1452, %v4312, %v4280
    %v4329 = vsel %vm1452, %v4313, %v4281
    %v4330 = vsel %vm1452, %v4314, %v4282
    %v4331 = vsel %vm1452, %v4315, %v4283
    %v4332 = vsel %vm1452, %v4316, %v4284
    %v4333 = vsel %vm1452, %v4317, %v4285
    %v4334 = vsel %vm1452, %v4318, %v4286
    %v4335 = vsel %vm1452, %v4319, %v4287
    %v4336 = vsel %vm1452, %v4320, %v4288
    %v4337 = vsel %vm1452, %v4321, %v4289
    %v4338 = vsel %vm1452, %v4322, %v4290
    %v4339 = vsel %vm1452, %v4323, %v4291
    %v4340 = vsel %vm1452, %v4324, %v4292
    %v4341 = vsel %vm1452, %v4325, %v4293
    %v4342 = vmul.f32 %v4326, %v1473
    %v4343 = vmul.f32 %v4327, %v1473
    %v4344 = vmul.f32 %v4328, %v1473
    %v4345 = vmul.f32 %v4329, %v1473
    %v4346 = vmul.f32 %v4330, %v1473
    %v4347 = vmul.f32 %v4331, %v1473
    %v4348 = vmul.f32 %v4332, %v1473
    %v4349 = vmul.f32 %v4333, %v1473
    %v4350 = vmul.f32 %v4334, %v1473
    %v4351 = vmul.f32 %v4335, %v1473
    %v4352 = vmul.f32 %v4336, %v1473
    %v4353 = vmul.f32 %v4337, %v1473
    %v4354 = vmul.f32 %v4338, %v1473
    %v4355 = vmul.f32 %v4339, %v1473
    %v4356 = vmul.f32 %v4340, %v1473
    %v4357 = vmul.f32 %v4341, %v1473
    %v4358 = vadd.f32 %v4342, %v1495
    %v4359 = vadd.f32 %v4343, %v1495
    %v4360 = vadd.f32 %v4344, %v1495
    %v4361 = vadd.f32 %v4345, %v1495
    %v4362 = vadd.f32 %v4346, %v1495
    %v4363 = vadd.f32 %v4347, %v1495
    %v4364 = vadd.f32 %v4348, %v1495
    %v4365 = vadd.f32 %v4349, %v1495
    %v4366 = vadd.f32 %v4350, %v1495
    %v4367 = vadd.f32 %v4351, %v1495
    %v4368 = vadd.f32 %v4352, %v1495
    %v4369 = vadd.f32 %v4353, %v1495
    %v4370 = vadd.f32 %v4354, %v1495
    %v4371 = vadd.f32 %v4355, %v1495
    %v4372 = vadd.f32 %v4356, %v1495
    %v4373 = vadd.f32 %v4357, %v1495
    %s4374 = scalar_lea.vmem [#allocation2], 16
    %4375 = vst [vmem:[%s4374] sm:$0xff] %v4358
    %4376 = vst [vmem:[%s4374 + $0x20] sm:$0xff] %v4359
    %4377 = vst [vmem:[%s4374 + $0x40] sm:$0xff] %v4360
    %4378 = vst [vmem:[%s4374 + $0x60] sm:$0xff] %v4361
    %4379 = vst [vmem:[%s4374 + $0x80] sm:$0xff] %v4362
    %4380 = vst [vmem:[%s4374 + $0xa0] sm:$0xff] %v4363
    %4381 = vst [vmem:[%s4374 + $0xc0] sm:$0xff] %v4364
    %4382 = vst [vmem:[%s4374 + $0xe0] sm:$0xff] %v4365
    %4383 = vst [vmem:[%s4374 + $0x100] sm:$0xff] %v4366
    %4384 = vst [vmem:[%s4374 + $0x120] sm:$0xff] %v4367
    %4385 = vst [vmem:[%s4374 + $0x140] sm:$0xff] %v4368
    %4386 = vst [vmem:[%s4374 + $0x160] sm:$0xff] %v4369
    %4387 = vst [vmem:[%s4374 + $0x180] sm:$0xff] %v4370
    %4388 = vst [vmem:[%s4374 + $0x1a0] sm:$0xff] %v4371
    %4389 = vst [vmem:[%s4374 + $0x1c0] sm:$0xff] %v4372
    %4390 = vst [vmem:[%s4374 + $0x1e0] sm:$0xff] %v4373
    %s4391 = scalar_lea.vmem %s1, 96
    %v4392 = vld [vmem:[%s4391] sm:$0xff]
    %v4393 = vld [vmem:[%s4391 + $0x8] sm:$0xff]
    %v4394 = vld [vmem:[%s4391 + $0x10] sm:$0xff]
    %v4395 = vld [vmem:[%s4391 + $0x18] sm:$0xff]
    %4396 = vmatprep.subr.mxu0 0.0
    %4397 = vmatpush1.msra.mxu0 %v4392
    %4398 = vmatprep.subr.mxu0 0.0
    %4399 = vmatpush1.msra.mxu0 %v4393
    %4400 = vmatprep.subr.mxu0 0.0
    %4401 = vmatpush1.msra.mxu0 %v4394
    %4402 = vmatprep.subr.mxu0 0.0
    %4403 = vmatpush1.msra.mxu0 %v4395
    %4404 = vmatprep.subr.mxu0 0.0
    %4405 = vmatpush1.msra.mxu0 0.0
    %4406 = vmatprep.subr.mxu0 0.0
    %4407 = vmatpush1.msra.mxu0 0.0
    %4408 = vmatprep.subr.mxu0 0.0
    %4409 = vmatpush1.msra.mxu0 0.0
    %4410 = vmatprep.subr.mxu0 0.0
    %4411 = vmatpush1.msra.mxu0 0.0
    %4412 = vmatprep.subr.mxu0 0.0
    %4413 = vmatpush1.msra.mxu0 0.0
    %4414 = vmatprep.subr.mxu0 0.0
    %4415 = vmatpush1.msra.mxu0 0.0
    %4416 = vmatprep.subr.mxu0 0.0
    %4417 = vmatpush1.msra.mxu0 0.0
    %4418 = vmatprep.subr.mxu0 0.0
    %4419 = vmatpush1.msra.mxu0 0.0
    %4420 = vmatprep.subr.mxu0 0.0
    %4421 = vmatpush1.msra.mxu0 0.0
    %4422 = vmatprep.subr.mxu0 0.0
    %4423 = vmatpush1.msra.mxu0 0.0
    %4424 = vmatprep.subr.mxu0 0.0
    %4425 = vmatpush1.msra.mxu0 0.0
    %4426 = vmatprep.subr.mxu0 0.0
    %4427 = vmatpush1.msra.mxu0 0.0
    %4428 = vmatprep.subr.mxu0 0.0
    %4429 = vmatpush1.msra.mxu0 0.0
    %4430 = vmatprep.subr.mxu0 0.0
    %4431 = vmatpush1.msra.mxu0 0.0
    %4432 = vmatprep.subr.mxu0 0.0
    %4433 = vmatpush1.msra.mxu0 0.0
    %4434 = vmatprep.subr.mxu0 0.0
    %4435 = vmatpush1.msra.mxu0 0.0
    %4436 = vmatprep.subr.mxu0 0.0
    %4437 = vmatpush1.msra.mxu0 0.0
    %4438 = vmatprep.subr.mxu0 0.0
    %4439 = vmatpush1.msra.mxu0 0.0
    %4440 = vmatprep.subr.mxu0 0.0
    %4441 = vmatpush1.msra.mxu0 0.0
    %4442 = vmatprep.subr.mxu0 0.0
    %4443 = vmatpush1.msra.mxu0 0.0
    %4444 = vmatprep.subr.mxu0 0.0
    %4445 = vmatpush1.msra.mxu0 0.0
    %4446 = vmatprep.subr.mxu0 0.0
    %4447 = vmatpush1.msra.mxu0 0.0
    %4448 = vmatprep.subr.mxu0 0.0
    %4449 = vmatpush1.msra.mxu0 0.0
    %4450 = vmatprep.subr.mxu0 0.0
    %4451 = vmatpush1.msra.mxu0 0.0
    %4452 = vmatprep.subr.mxu0 0.0
    %4453 = vmatpush1.msra.mxu0 0.0
    %4454 = vmatprep.subr.mxu0 0.0
    %4455 = vmatpush1.msra.mxu0 0.0
    %4456 = vmatprep.subr.mxu0 0.0
    %4457 = vmatpush1.msra.mxu0 0.0
    %4458 = vmatprep.subr.mxu0 0.0
    %4459 = vmatpush1.msra.mxu0 0.0
    %4460 = vmatprep.mubr.f32.mxu0 0.0
    %4461 = vmatmul.mubr.f32.gmra.mrb[0].mxu0 %v42
    %v4462 = vpop.f32.mrb[0].mxu0
    %v4463 = vadd.f32 0.0, %v4462
    %v4464 = vpop.f32.mrb[0].mxu0
    %4465 = vmatprep.mubr.f32.mxu0 0.0
    %4466 = vmatmul.mubr.f32.gmra.mrb[0].mxu0 %v45
    %v4467 = vpop.f32.mrb[0].mxu0
    %v4468 = vadd.f32 0.0, %v4467
    %v4469 = vpop.f32.mrb[0].mxu0
    %4470 = vmatprep.mubr.f32.mxu0 0.0
    %4471 = vmatmul.mubr.f32.gmra.mrb[0].mxu0 %v48
    %v4472 = vpop.f32.mrb[0].mxu0
    %v4473 = vadd.f32 0.0, %v4472
    %v4474 = vpop.f32.mrb[0].mxu0
    %4475 = vmatprep.mubr.f32.mxu0 0.0
    %4476 = vmatmul.mubr.f32.gmra.mrb[0].mxu0 %v51
    %v4477 = vpop.f32.mrb[0].mxu0
    %v4478 = vadd.f32 0.0, %v4477
    %v4479 = vpop.f32.mrb[0].mxu0
    %4480 = vmatprep.mubr.f32.mxu0 0.0
    %4481 = vmatmul.mubr.f32.gmra.mrb[0].mxu0 %v54
    %v4482 = vpop.f32.mrb[0].mxu0
    %v4483 = vadd.f32 0.0, %v4482
    %v4484 = vpop.f32.mrb[0].mxu0
    %4485 = vmatprep.mubr.f32.mxu0 0.0
    %4486 = vmatmul.mubr.f32.gmra.mrb[0].mxu0 %v57
    %v4487 = vpop.f32.mrb[0].mxu0
    %v4488 = vadd.f32 0.0, %v4487
    %v4489 = vpop.f32.mrb[0].mxu0
    %4490 = vmatprep.mubr.f32.mxu0 0.0
    %4491 = vmatmul.mubr.f32.gmra.mrb[0].mxu0 %v60
    %v4492 = vpop.f32.mrb[0].mxu0
    %v4493 = vadd.f32 0.0, %v4492
    %v4494 = vpop.f32.mrb[0].mxu0
    %4495 = vmatprep.mubr.f32.mxu0 0.0
    %4496 = vmatmul.mubr.f32.gmra.mrb[0].mxu0 %v63
    %v4497 = vpop.f32.mrb[0].mxu0
    %v4498 = vadd.f32 0.0, %v4497
    %v4499 = vpop.f32.mrb[0].mxu0
    %4500 = vmatprep.mubr.f32.mxu0 0.0
    %4501 = vmatmul.mubr.f32.gmra.mrb[0].mxu0 %v66
    %v4502 = vpop.f32.mrb[0].mxu0
    %v4503 = vadd.f32 0.0, %v4502
    %v4504 = vpop.f32.mrb[0].mxu0
    %4505 = vmatprep.mubr.f32.mxu0 0.0
    %4506 = vmatmul.mubr.f32.gmra.mrb[0].mxu0 %v69
    %v4507 = vpop.f32.mrb[0].mxu0
    %v4508 = vadd.f32 0.0, %v4507
    %v4509 = vpop.f32.mrb[0].mxu0
    %4510 = vmatprep.mubr.f32.mxu0 0.0
    %4511 = vmatmul.mubr.f32.gmra.mrb[0].mxu0 %v72
    %v4512 = vpop.f32.mrb[0].mxu0
    %v4513 = vadd.f32 0.0, %v4512
    %v4514 = vpop.f32.mrb[0].mxu0
    %4515 = vmatprep.mubr.f32.mxu0 0.0
    %4516 = vmatmul.mubr.f32.gmra.mrb[0].mxu0 %v75
    %v4517 = vpop.f32.mrb[0].mxu0
    %v4518 = vadd.f32 0.0, %v4517
    %v4519 = vpop.f32.mrb[0].mxu0
    %4520 = vmatprep.mubr.f32.mxu0 0.0
    %4521 = vmatmul.mubr.f32.gmra.mrb[0].mxu0 %v78
    %v4522 = vpop.f32.mrb[0].mxu0
    %v4523 = vadd.f32 0.0, %v4522
    %v4524 = vpop.f32.mrb[0].mxu0
    %4525 = vmatprep.mubr.f32.mxu0 0.0
    %4526 = vmatmul.mubr.f32.gmra.mrb[0].mxu0 %v81
    %v4527 = vpop.f32.mrb[0].mxu0
    %v4528 = vadd.f32 0.0, %v4527
    %v4529 = vpop.f32.mrb[0].mxu0
    %4530 = vmatprep.mubr.f32.mxu0 0.0
    %4531 = vmatmul.mubr.f32.gmra.mrb[0].mxu0 %v84
    %v4532 = vpop.f32.mrb[0].mxu0
    %v4533 = vadd.f32 0.0, %v4532
    %v4534 = vpop.f32.mrb[0].mxu0
    %4535 = vmatprep.mubr.f32.mxu0 0.0
    %4536 = vmatmul.mubr.f32.gmra.mrb[0].mxu0 %v87
    %v4537 = vpop.f32.mrb[0].mxu0
    %v4538 = vadd.f32 0.0, %v4537
    %v4539 = vpop.f32.mrb[0].mxu0
    %4540 = vdwg.mxu0
    %v4541 = vsel %vm40, %v4463, 0.0
    %4542 = vadd.xlane.f32.xlu0 %v4541
    %v4543 = vpop.xlane.xlu0 %4542
    %v4544 = vsel %vm40, %v4468, 0.0
    %4545 = vadd.xlane.f32.xlu0 %v4544
    %v4546 = vpop.xlane.xlu0 %4545
    %v4547 = vsel %vm40, %v4473, 0.0
    %4548 = vadd.xlane.f32.xlu0 %v4547
    %v4549 = vpop.xlane.xlu0 %4548
    %v4550 = vsel %vm40, %v4478, 0.0
    %4551 = vadd.xlane.f32.xlu0 %v4550
    %v4552 = vpop.xlane.xlu0 %4551
    %v4553 = vsel %vm40, %v4483, 0.0
    %4554 = vadd.xlane.f32.xlu0 %v4553
    %v4555 = vpop.xlane.xlu0 %4554
    %v4556 = vsel %vm40, %v4488, 0.0
    %4557 = vadd.xlane.f32.xlu0 %v4556
    %v4558 = vpop.xlane.xlu0 %4557
    %v4559 = vsel %vm40, %v4493, 0.0
    %4560 = vadd.xlane.f32.xlu0 %v4559
    %v4561 = vpop.xlane.xlu0 %4560
    %v4562 = vsel %vm40, %v4498, 0.0
    %4563 = vadd.xlane.f32.xlu0 %v4562
    %v4564 = vpop.xlane.xlu0 %4563
    %v4565 = vsel %vm40, %v4503, 0.0
    %4566 = vadd.xlane.f32.xlu0 %v4565
    %v4567 = vpop.xlane.xlu0 %4566
    %v4568 = vsel %vm40, %v4508, 0.0
    %4569 = vadd.xlane.f32.xlu0 %v4568
    %v4570 = vpop.xlane.xlu0 %4569
    %v4571 = vsel %vm40, %v4513, 0.0
    %4572 = vadd.xlane.f32.xlu0 %v4571
    %v4573 = vpop.xlane.xlu0 %4572
    %v4574 = vsel %vm40, %v4518, 0.0
    %4575 = vadd.xlane.f32.xlu0 %v4574
    %v4576 = vpop.xlane.xlu0 %4575
    %v4577 = vsel %vm40, %v4523, 0.0
    %4578 = vadd.xlane.f32.xlu0 %v4577
    %v4579 = vpop.xlane.xlu0 %4578
    %v4580 = vsel %vm40, %v4528, 0.0
    %4581 = vadd.xlane.f32.xlu0 %v4580
    %v4582 = vpop.xlane.xlu0 %4581
    %v4583 = vsel %vm40, %v4533, 0.0
    %4584 = vadd.xlane.f32.xlu0 %v4583
    %v4585 = vpop.xlane.xlu0 %4584
    %v4586 = vsel %vm40, %v4538, 0.0
    %4587 = vadd.xlane.f32.xlu0 %v4586
    %v4588 = vpop.xlane.xlu0 %4587
    %v4589 = vmul.f32 %v4543, %v282
    %v4590 = vmul.f32 %v4546, %v282
    %v4591 = vmul.f32 %v4549, %v282
    %v4592 = vmul.f32 %v4552, %v282
    %v4593 = vmul.f32 %v4555, %v282
    %v4594 = vmul.f32 %v4558, %v282
    %v4595 = vmul.f32 %v4561, %v282
    %v4596 = vmul.f32 %v4564, %v282
    %v4597 = vmul.f32 %v4567, %v282
    %v4598 = vmul.f32 %v4570, %v282
    %v4599 = vmul.f32 %v4573, %v282
    %v4600 = vmul.f32 %v4576, %v282
    %v4601 = vmul.f32 %v4579, %v282
    %v4602 = vmul.f32 %v4582, %v282
    %v4603 = vmul.f32 %v4585, %v282
    %v4604 = vmul.f32 %v4588, %v282
    %v4605 = vsub.f32 %v4463, %v4589
    %v4606 = vsub.f32 %v4468, %v4590
    %v4607 = vsub.f32 %v4473, %v4591
    %v4608 = vsub.f32 %v4478, %v4592
    %v4609 = vsub.f32 %v4483, %v4593
    %v4610 = vsub.f32 %v4488, %v4594
    %v4611 = vsub.f32 %v4493, %v4595
    %v4612 = vsub.f32 %v4498, %v4596
    %v4613 = vsub.f32 %v4503, %v4597
    %v4614 = vsub.f32 %v4508, %v4598
    %v4615 = vsub.f32 %v4513, %v4599
    %v4616 = vsub.f32 %v4518, %v4600
    %v4617 = vsub.f32 %v4523, %v4601
    %v4618 = vsub.f32 %v4528, %v4602
    %v4619 = vsub.f32 %v4533, %v4603
    %v4620 = vsub.f32 %v4538, %v4604
    %v4621 = vmul.f32 %v4605, %v4605
    %v4622 = vmul.f32 %v4606, %v4606
    %v4623 = vmul.f32 %v4607, %v4607
    %v4624 = vmul.f32 %v4608, %v4608
    %v4625 = vmul.f32 %v4609, %v4609
    %v4626 = vmul.f32 %v4610, %v4610
    %v4627 = vmul.f32 %v4611, %v4611
    %v4628 = vmul.f32 %v4612, %v4612
    %v4629 = vmul.f32 %v4613, %v4613
    %v4630 = vmul.f32 %v4614, %v4614
    %v4631 = vmul.f32 %v4615, %v4615
    %v4632 = vmul.f32 %v4616, %v4616
    %v4633 = vmul.f32 %v4617, %v4617
    %v4634 = vmul.f32 %v4618, %v4618
    %v4635 = vmul.f32 %v4619, %v4619
    %v4636 = vmul.f32 %v4620, %v4620
    %v4637 = vsel %vm40, %v4621, 0.0
    %4638 = vadd.xlane.f32.xlu0 %v4637
    %v4639 = vpop.xlane.xlu0 %4638
    %v4640 = vsel %vm40, %v4622, 0.0
    %4641 = vadd.xlane.f32.xlu0 %v4640
    %v4642 = vpop.xlane.xlu0 %4641
    %v4643 = vsel %vm40, %v4623, 0.0
    %4644 = vadd.xlane.f32.xlu0 %v4643
    %v4645 = vpop.xlane.xlu0 %4644
    %v4646 = vsel %vm40, %v4624, 0.0
    %4647 = vadd.xlane.f32.xlu0 %v4646
    %v4648 = vpop.xlane.xlu0 %4647
    %v4649 = vsel %vm40, %v4625, 0.0
    %4650 = vadd.xlane.f32.xlu0 %v4649
    %v4651 = vpop.xlane.xlu0 %4650
    %v4652 = vsel %vm40, %v4626, 0.0
    %4653 = vadd.xlane.f32.xlu0 %v4652
    %v4654 = vpop.xlane.xlu0 %4653
    %v4655 = vsel %vm40, %v4627, 0.0
    %4656 = vadd.xlane.f32.xlu0 %v4655
    %v4657 = vpop.xlane.xlu0 %4656
    %v4658 = vsel %vm40, %v4628, 0.0
    %4659 = vadd.xlane.f32.xlu0 %v4658
    %v4660 = vpop.xlane.xlu0 %4659
    %v4661 = vsel %vm40, %v4629, 0.0
    %4662 = vadd.xlane.f32.xlu0 %v4661
    %v4663 = vpop.xlane.xlu0 %4662
    %v4664 = vsel %vm40, %v4630, 0.0
    %4665 = vadd.xlane.f32.xlu0 %v4664
    %v4666 = vpop.xlane.xlu0 %4665
    %v4667 = vsel %vm40, %v4631, 0.0
    %4668 = vadd.xlane.f32.xlu0 %v4667
    %v4669 = vpop.xlane.xlu0 %4668
    %v4670 = vsel %vm40, %v4632, 0.0
    %4671 = vadd.xlane.f32.xlu0 %v4670
    %v4672 = vpop.xlane.xlu0 %4671
    %v4673 = vsel %vm40, %v4633, 0.0
    %4674 = vadd.xlane.f32.xlu0 %v4673
    %v4675 = vpop.xlane.xlu0 %4674
    %v4676 = vsel %vm40, %v4634, 0.0
    %4677 = vadd.xlane.f32.xlu0 %v4676
    %v4678 = vpop.xlane.xlu0 %4677
    %v4679 = vsel %vm40, %v4635, 0.0
    %4680 = vadd.xlane.f32.xlu0 %v4679
    %v4681 = vpop.xlane.xlu0 %4680
    %v4682 = vsel %vm40, %v4636, 0.0
    %4683 = vadd.xlane.f32.xlu0 %v4682
    %v4684 = vpop.xlane.xlu0 %4683
    %v4685 = vmul.f32 %v4639, %v282
    %v4686 = vmul.f32 %v4642, %v282
    %v4687 = vmul.f32 %v4645, %v282
    %v4688 = vmul.f32 %v4648, %v282
    %v4689 = vmul.f32 %v4651, %v282
    %v4690 = vmul.f32 %v4654, %v282
    %v4691 = vmul.f32 %v4657, %v282
    %v4692 = vmul.f32 %v4660, %v282
    %v4693 = vmul.f32 %v4663, %v282
    %v4694 = vmul.f32 %v4666, %v282
    %v4695 = vmul.f32 %v4669, %v282
    %v4696 = vmul.f32 %v4672, %v282
    %v4697 = vmul.f32 %v4675, %v282
    %v4698 = vmul.f32 %v4678, %v282
    %v4699 = vmul.f32 %v4681, %v282
    %v4700 = vmul.f32 %v4684, %v282
    %v4701 = vadd.f32 %v4685, 1e-05
    %v4702 = vadd.f32 %v4686, 1e-05
    %v4703 = vadd.f32 %v4687, 1e-05
    %v4704 = vadd.f32 %v4688, 1e-05
    %v4705 = vadd.f32 %v4689, 1e-05
    %v4706 = vadd.f32 %v4690, 1e-05
    %v4707 = vadd.f32 %v4691, 1e-05
    %v4708 = vadd.f32 %v4692, 1e-05
    %v4709 = vadd.f32 %v4693, 1e-05
    %v4710 = vadd.f32 %v4694, 1e-05
    %v4711 = vadd.f32 %v4695, 1e-05
    %v4712 = vadd.f32 %v4696, 1e-05
    %v4713 = vadd.f32 %v4697, 1e-05
    %v4714 = vadd.f32 %v4698, 1e-05
    %v4715 = vadd.f32 %v4699, 1e-05
    %v4716 = vadd.f32 %v4700, 1e-05
    %v4717 = vrsqrt.pop %v4701
    %v4718 = vrsqrt.pop %v4702
    %v4719 = vrsqrt.pop %v4703
    %v4720 = vrsqrt.pop %v4704
    %v4721 = vrsqrt.pop %v4705
    %v4722 = vrsqrt.pop %v4706
    %v4723 = vrsqrt.pop %v4707
    %v4724 = vrsqrt.pop %v4708
    %v4725 = vrsqrt.pop %v4709
    %v4726 = vrsqrt.pop %v4710
    %v4727 = vrsqrt.pop %v4711
    %v4728 = vrsqrt.pop %v4712
    %v4729 = vrsqrt.pop %v4713
    %v4730 = vrsqrt.pop %v4714
    %v4731 = vrsqrt.pop %v4715
    %v4732 = vrsqrt.pop %v4716
    %v4733 = vmul.f32 %v4605, %v4717
    %v4734 = vmul.f32 %v4606, %v4718
    %v4735 = vmul.f32 %v4607, %v4719
    %v4736 = vmul.f32 %v4608, %v4720
    %v4737 = vmul.f32 %v4609, %v4721
    %v4738 = vmul.f32 %v4610, %v4722
    %v4739 = vmul.f32 %v4611, %v4723
    %v4740 = vmul.f32 %v4612, %v4724
    %v4741 = vmul.f32 %v4613, %v4725
    %v4742 = vmul.f32 %v4614, %v4726
    %v4743 = vmul.f32 %v4615, %v4727
    %v4744 = vmul.f32 %v4616, %v4728
    %v4745 = vmul.f32 %v4617, %v4729
    %v4746 = vmul.f32 %v4618, %v4730
    %v4747 = vmul.f32 %v4619, %v4731
    %v4748 = vmul.f32 %v4620, %v4732
    %4765 = vrot.lane.b32.xlu0 %v4463, 96
    %v4766 = vpop.permute.xlu0 %4765
    %4767 = vrot.lane.b32.xlu0 %v4468, 96
    %v4768 = vpop.permute.xlu0 %4767
    %4769 = vrot.lane.b32.xlu0 %v4473, 96
    %v4770 = vpop.permute.xlu0 %4769
    %4771 = vrot.lane.b32.xlu0 %v4478, 96
    %v4772 = vpop.permute.xlu0 %4771
    %4773 = vrot.lane.b32.xlu0 %v4483, 96
    %v4774 = vpop.permute.xlu0 %4773
    %4775 = vrot.lane.b32.xlu0 %v4488, 96
    %v4776 = vpop.permute.xlu0 %4775
    %4777 = vrot.lane.b32.xlu0 %v4493, 96
    %v4778 = vpop.permute.xlu0 %4777
    %4779 = vrot.lane.b32.xlu0 %v4498, 96
    %v4780 = vpop.permute.xlu0 %4779
    %4781 = vrot.lane.b32.xlu0 %v4503, 96
    %v4782 = vpop.permute.xlu0 %4781
    %4783 = vrot.lane.b32.xlu0 %v4508, 96
    %v4784 = vpop.permute.xlu0 %4783
    %4785 = vrot.lane.b32.xlu0 %v4513, 96
    %v4786 = vpop.permute.xlu0 %4785
    %4787 = vrot.lane.b32.xlu0 %v4518, 96
    %v4788 = vpop.permute.xlu0 %4787
    %4789 = vrot.lane.b32.xlu0 %v4523, 96
    %v4790 = vpop.permute.xlu0 %4789
    %4791 = vrot.lane.b32.xlu0 %v4528, 96
    %v4792 = vpop.permute.xlu0 %4791
    %4793 = vrot.lane.b32.xlu0 %v4533, 96
    %v4794 = vpop.permute.xlu0 %4793
    %4795 = vrot.lane.b32.xlu0 %v4538, 96
    %v4796 = vpop.permute.xlu0 %4795
    %v4813 = vsel %vm40, %v4766, 0.0
    %4814 = vadd.xlane.f32.xlu0 %v4813
    %v4815 = vpop.xlane.xlu0 %4814
    %v4816 = vsel %vm40, %v4768, 0.0
    %4817 = vadd.xlane.f32.xlu0 %v4816
    %v4818 = vpop.xlane.xlu0 %4817
    %v4819 = vsel %vm40, %v4770, 0.0
    %4820 = vadd.xlane.f32.xlu0 %v4819
    %v4821 = vpop.xlane.xlu0 %4820
    %v4822 = vsel %vm40, %v4772, 0.0
    %4823 = vadd.xlane.f32.xlu0 %v4822
    %v4824 = vpop.xlane.xlu0 %4823
    %v4825 = vsel %vm40, %v4774, 0.0
    %4826 = vadd.xlane.f32.xlu0 %v4825
    %v4827 = vpop.xlane.xlu0 %4826
    %v4828 = vsel %vm40, %v4776, 0.0
    %4829 = vadd.xlane.f32.xlu0 %v4828
    %v4830 = vpop.xlane.xlu0 %4829
    %v4831 = vsel %vm40, %v4778, 0.0
    %4832 = vadd.xlane.f32.xlu0 %v4831
    %v4833 = vpop.xlane.xlu0 %4832
    %v4834 = vsel %vm40, %v4780, 0.0
    %4835 = vadd.xlane.f32.xlu0 %v4834
    %v4836 = vpop.xlane.xlu0 %4835
    %v4837 = vsel %vm40, %v4782, 0.0
    %4838 = vadd.xlane.f32.xlu0 %v4837
    %v4839 = vpop.xlane.xlu0 %4838
    %v4840 = vsel %vm40, %v4784, 0.0
    %4841 = vadd.xlane.f32.xlu0 %v4840
    %v4842 = vpop.xlane.xlu0 %4841
    %v4843 = vsel %vm40, %v4786, 0.0
    %4844 = vadd.xlane.f32.xlu0 %v4843
    %v4845 = vpop.xlane.xlu0 %4844
    %v4846 = vsel %vm40, %v4788, 0.0
    %4847 = vadd.xlane.f32.xlu0 %v4846
    %v4848 = vpop.xlane.xlu0 %4847
    %v4849 = vsel %vm40, %v4790, 0.0
    %4850 = vadd.xlane.f32.xlu0 %v4849
    %v4851 = vpop.xlane.xlu0 %4850
    %v4852 = vsel %vm40, %v4792, 0.0
    %4853 = vadd.xlane.f32.xlu0 %v4852
    %v4854 = vpop.xlane.xlu0 %4853
    %v4855 = vsel %vm40, %v4794, 0.0
    %4856 = vadd.xlane.f32.xlu0 %v4855
    %v4857 = vpop.xlane.xlu0 %4856
    %v4858 = vsel %vm40, %v4796, 0.0
    %4859 = vadd.xlane.f32.xlu0 %v4858
    %v4860 = vpop.xlane.xlu0 %4859
    %v4861 = vmul.f32 %v4815, %v282
    %v4862 = vmul.f32 %v4818, %v282
    %v4863 = vmul.f32 %v4821, %v282
    %v4864 = vmul.f32 %v4824, %v282
    %v4865 = vmul.f32 %v4827, %v282
    %v4866 = vmul.f32 %v4830, %v282
    %v4867 = vmul.f32 %v4833, %v282
    %v4868 = vmul.f32 %v4836, %v282
    %v4869 = vmul.f32 %v4839, %v282
    %v4870 = vmul.f32 %v4842, %v282
    %v4871 = vmul.f32 %v4845, %v282
    %v4872 = vmul.f32 %v4848, %v282
    %v4873 = vmul.f32 %v4851, %v282
    %v4874 = vmul.f32 %v4854, %v282
    %v4875 = vmul.f32 %v4857, %v282
    %v4876 = vmul.f32 %v4860, %v282
    %v4877 = vsub.f32 %v4463, %v4861
    %v4878 = vsub.f32 %v4468, %v4862
    %v4879 = vsub.f32 %v4473, %v4863
    %v4880 = vsub.f32 %v4478, %v4864
    %v4881 = vsub.f32 %v4483, %v4865
    %v4882 = vsub.f32 %v4488, %v4866
    %v4883 = vsub.f32 %v4493, %v4867
    %v4884 = vsub.f32 %v4498, %v4868
    %v4885 = vsub.f32 %v4503, %v4869
    %v4886 = vsub.f32 %v4508, %v4870
    %v4887 = vsub.f32 %v4513, %v4871
    %v4888 = vsub.f32 %v4518, %v4872
    %v4889 = vsub.f32 %v4523, %v4873
    %v4890 = vsub.f32 %v4528, %v4874
    %v4891 = vsub.f32 %v4533, %v4875
    %v4892 = vsub.f32 %v4538, %v4876
    %v4893 = vmul.f32 %v4877, %v4877
    %v4894 = vmul.f32 %v4878, %v4878
    %v4895 = vmul.f32 %v4879, %v4879
    %v4896 = vmul.f32 %v4880, %v4880
    %v4897 = vmul.f32 %v4881, %v4881
    %v4898 = vmul.f32 %v4882, %v4882
    %v4899 = vmul.f32 %v4883, %v4883
    %v4900 = vmul.f32 %v4884, %v4884
    %v4901 = vmul.f32 %v4885, %v4885
    %v4902 = vmul.f32 %v4886, %v4886
    %v4903 = vmul.f32 %v4887, %v4887
    %v4904 = vmul.f32 %v4888, %v4888
    %v4905 = vmul.f32 %v4889, %v4889
    %v4906 = vmul.f32 %v4890, %v4890
    %v4907 = vmul.f32 %v4891, %v4891
    %v4908 = vmul.f32 %v4892, %v4892
    %4925 = vrot.lane.b32.xlu0 %v4893, 96
    %v4926 = vpop.permute.xlu0 %4925
    %4927 = vrot.lane.b32.xlu0 %v4894, 96
    %v4928 = vpop.permute.xlu0 %4927
    %4929 = vrot.lane.b32.xlu0 %v4895, 96
    %v4930 = vpop.permute.xlu0 %4929
    %4931 = vrot.lane.b32.xlu0 %v4896, 96
    %v4932 = vpop.permute.xlu0 %4931
    %4933 = vrot.lane.b32.xlu0 %v4897, 96
    %v4934 = vpop.permute.xlu0 %4933
    %4935 = vrot.lane.b32.xlu0 %v4898, 96
    %v4936 = vpop.permute.xlu0 %4935
    %4937 = vrot.lane.b32.xlu0 %v4899, 96
    %v4938 = vpop.permute.xlu0 %4937
    %4939 = vrot.lane.b32.xlu0 %v4900, 96
    %v4940 = vpop.permute.xlu0 %4939
    %4941 = vrot.lane.b32.xlu0 %v4901, 96
    %v4942 = vpop.permute.xlu0 %4941
    %4943 = vrot.lane.b32.xlu0 %v4902, 96
    %v4944 = vpop.permute.xlu0 %4943
    %4945 = vrot.lane.b32.xlu0 %v4903, 96
    %v4946 = vpop.permute.xlu0 %4945
    %4947 = vrot.lane.b32.xlu0 %v4904, 96
    %v4948 = vpop.permute.xlu0 %4947
    %4949 = vrot.lane.b32.xlu0 %v4905, 96
    %v4950 = vpop.permute.xlu0 %4949
    %4951 = vrot.lane.b32.xlu0 %v4906, 96
    %v4952 = vpop.permute.xlu0 %4951
    %4953 = vrot.lane.b32.xlu0 %v4907, 96
    %v4954 = vpop.permute.xlu0 %4953
    %4955 = vrot.lane.b32.xlu0 %v4908, 96
    %v4956 = vpop.permute.xlu0 %4955
    %v4973 = vsel %vm40, %v4926, 0.0
    %4974 = vadd.xlane.f32.xlu0 %v4973
    %v4975 = vpop.xlane.xlu0 %4974
    %v4976 = vsel %vm40, %v4928, 0.0
    %4977 = vadd.xlane.f32.xlu0 %v4976
    %v4978 = vpop.xlane.xlu0 %4977
    %v4979 = vsel %vm40, %v4930, 0.0
    %4980 = vadd.xlane.f32.xlu0 %v4979
    %v4981 = vpop.xlane.xlu0 %4980
    %v4982 = vsel %vm40, %v4932, 0.0
    %4983 = vadd.xlane.f32.xlu0 %v4982
    %v4984 = vpop.xlane.xlu0 %4983
    %v4985 = vsel %vm40, %v4934, 0.0
    %4986 = vadd.xlane.f32.xlu0 %v4985
    %v4987 = vpop.xlane.xlu0 %4986
    %v4988 = vsel %vm40, %v4936, 0.0
    %4989 = vadd.xlane.f32.xlu0 %v4988
    %v4990 = vpop.xlane.xlu0 %4989
    %v4991 = vsel %vm40, %v4938, 0.0
    %4992 = vadd.xlane.f32.xlu0 %v4991
    %v4993 = vpop.xlane.xlu0 %4992
    %v4994 = vsel %vm40, %v4940, 0.0
    %4995 = vadd.xlane.f32.xlu0 %v4994
    %v4996 = vpop.xlane.xlu0 %4995
    %v4997 = vsel %vm40, %v4942, 0.0
    %4998 = vadd.xlane.f32.xlu0 %v4997
    %v4999 = vpop.xlane.xlu0 %4998
    %v5000 = vsel %vm40, %v4944, 0.0
    %5001 = vadd.xlane.f32.xlu0 %v5000
    %v5002 = vpop.xlane.xlu0 %5001
    %v5003 = vsel %vm40, %v4946, 0.0
    %5004 = vadd.xlane.f32.xlu0 %v5003
    %v5005 = vpop.xlane.xlu0 %5004
    %v5006 = vsel %vm40, %v4948, 0.0
    %5007 = vadd.xlane.f32.xlu0 %v5006
    %v5008 = vpop.xlane.xlu0 %5007
    %v5009 = vsel %vm40, %v4950, 0.0
    %5010 = vadd.xlane.f32.xlu0 %v5009
    %v5011 = vpop.xlane.xlu0 %5010
    %v5012 = vsel %vm40, %v4952, 0.0
    %5013 = vadd.xlane.f32.xlu0 %v5012
    %v5014 = vpop.xlane.xlu0 %5013
    %v5015 = vsel %vm40, %v4954, 0.0
    %5016 = vadd.xlane.f32.xlu0 %v5015
    %v5017 = vpop.xlane.xlu0 %5016
    %v5018 = vsel %vm40, %v4956, 0.0
    %5019 = vadd.xlane.f32.xlu0 %v5018
    %v5020 = vpop.xlane.xlu0 %5019
    %v5021 = vmul.f32 %v4975, %v282
    %v5022 = vmul.f32 %v4978, %v282
    %v5023 = vmul.f32 %v4981, %v282
    %v5024 = vmul.f32 %v4984, %v282
    %v5025 = vmul.f32 %v4987, %v282
    %v5026 = vmul.f32 %v4990, %v282
    %v5027 = vmul.f32 %v4993, %v282
    %v5028 = vmul.f32 %v4996, %v282
    %v5029 = vmul.f32 %v4999, %v282
    %v5030 = vmul.f32 %v5002, %v282
    %v5031 = vmul.f32 %v5005, %v282
    %v5032 = vmul.f32 %v5008, %v282
    %v5033 = vmul.f32 %v5011, %v282
    %v5034 = vmul.f32 %v5014, %v282
    %v5035 = vmul.f32 %v5017, %v282
    %v5036 = vmul.f32 %v5020, %v282
    %v5037 = vadd.f32 %v5021, 1e-05
    %v5038 = vadd.f32 %v5022, 1e-05
    %v5039 = vadd.f32 %v5023, 1e-05
    %v5040 = vadd.f32 %v5024, 1e-05
    %v5041 = vadd.f32 %v5025, 1e-05
    %v5042 = vadd.f32 %v5026, 1e-05
    %v5043 = vadd.f32 %v5027, 1e-05
    %v5044 = vadd.f32 %v5028, 1e-05
    %v5045 = vadd.f32 %v5029, 1e-05
    %v5046 = vadd.f32 %v5030, 1e-05
    %v5047 = vadd.f32 %v5031, 1e-05
    %v5048 = vadd.f32 %v5032, 1e-05
    %v5049 = vadd.f32 %v5033, 1e-05
    %v5050 = vadd.f32 %v5034, 1e-05
    %v5051 = vadd.f32 %v5035, 1e-05
    %v5052 = vadd.f32 %v5036, 1e-05
    %v5053 = vrsqrt.pop %v5037
    %v5054 = vrsqrt.pop %v5038
    %v5055 = vrsqrt.pop %v5039
    %v5056 = vrsqrt.pop %v5040
    %v5057 = vrsqrt.pop %v5041
    %v5058 = vrsqrt.pop %v5042
    %v5059 = vrsqrt.pop %v5043
    %v5060 = vrsqrt.pop %v5044
    %v5061 = vrsqrt.pop %v5045
    %v5062 = vrsqrt.pop %v5046
    %v5063 = vrsqrt.pop %v5047
    %v5064 = vrsqrt.pop %v5048
    %v5065 = vrsqrt.pop %v5049
    %v5066 = vrsqrt.pop %v5050
    %v5067 = vrsqrt.pop %v5051
    %v5068 = vrsqrt.pop %v5052
    %v5069 = vmul.f32 %v4877, %v5053
    %v5070 = vmul.f32 %v4878, %v5054
    %v5071 = vmul.f32 %v4879, %v5055
    %v5072 = vmul.f32 %v4880, %v5056
    %v5073 = vmul.f32 %v4881, %v5057
    %v5074 = vmul.f32 %v4882, %v5058
    %v5075 = vmul.f32 %v4883, %v5059
    %v5076 = vmul.f32 %v4884, %v5060
    %v5077 = vmul.f32 %v4885, %v5061
    %v5078 = vmul.f32 %v4886, %v5062
    %v5079 = vmul.f32 %v4887, %v5063
    %v5080 = vmul.f32 %v4888, %v5064
    %v5081 = vmul.f32 %v4889, %v5065
    %v5082 = vmul.f32 %v4890, %v5066
    %v5083 = vmul.f32 %v4891, %v5067
    %v5084 = vmul.f32 %v4892, %v5068
    %5085 = vrot.lane.b32.xlu0 %v4463, 64
    %v5086 = vpop.permute.xlu0 %5085
    %5087 = vrot.lane.b32.xlu0 %v4468, 64
    %v5088 = vpop.permute.xlu0 %5087
    %5089 = vrot.lane.b32.xlu0 %v4473, 64
    %v5090 = vpop.permute.xlu0 %5089
    %5091 = vrot.lane.b32.xlu0 %v4478, 64
    %v5092 = vpop.permute.xlu0 %5091
    %5093 = vrot.lane.b32.xlu0 %v4483, 64
    %v5094 = vpop.permute.xlu0 %5093
    %5095 = vrot.lane.b32.xlu0 %v4488, 64
    %v5096 = vpop.permute.xlu0 %5095
    %5097 = vrot.lane.b32.xlu0 %v4493, 64
    %v5098 = vpop.permute.xlu0 %5097
    %5099 = vrot.lane.b32.xlu0 %v4498, 64
    %v5100 = vpop.permute.xlu0 %5099
    %5101 = vrot.lane.b32.xlu0 %v4503, 64
    %v5102 = vpop.permute.xlu0 %5101
    %5103 = vrot.lane.b32.xlu0 %v4508, 64
    %v5104 = vpop.permute.xlu0 %5103
    %5105 = vrot.lane.b32.xlu0 %v4513, 64
    %v5106 = vpop.permute.xlu0 %5105
    %5107 = vrot.lane.b32.xlu0 %v4518, 64
    %v5108 = vpop.permute.xlu0 %5107
    %5109 = vrot.lane.b32.xlu0 %v4523, 64
    %v5110 = vpop.permute.xlu0 %5109
    %5111 = vrot.lane.b32.xlu0 %v4528, 64
    %v5112 = vpop.permute.xlu0 %5111
    %5113 = vrot.lane.b32.xlu0 %v4533, 64
    %v5114 = vpop.permute.xlu0 %5113
    %5115 = vrot.lane.b32.xlu0 %v4538, 64
    %v5116 = vpop.permute.xlu0 %5115
    %v5133 = vsel %vm40, %v5086, 0.0
    %5134 = vadd.xlane.f32.xlu0 %v5133
    %v5135 = vpop.xlane.xlu0 %5134
    %v5136 = vsel %vm40, %v5088, 0.0
    %5137 = vadd.xlane.f32.xlu0 %v5136
    %v5138 = vpop.xlane.xlu0 %5137
    %v5139 = vsel %vm40, %v5090, 0.0
    %5140 = vadd.xlane.f32.xlu0 %v5139
    %v5141 = vpop.xlane.xlu0 %5140
    %v5142 = vsel %vm40, %v5092, 0.0
    %5143 = vadd.xlane.f32.xlu0 %v5142
    %v5144 = vpop.xlane.xlu0 %5143
    %v5145 = vsel %vm40, %v5094, 0.0
    %5146 = vadd.xlane.f32.xlu0 %v5145
    %v5147 = vpop.xlane.xlu0 %5146
    %v5148 = vsel %vm40, %v5096, 0.0
    %5149 = vadd.xlane.f32.xlu0 %v5148
    %v5150 = vpop.xlane.xlu0 %5149
    %v5151 = vsel %vm40, %v5098, 0.0
    %5152 = vadd.xlane.f32.xlu0 %v5151
    %v5153 = vpop.xlane.xlu0 %5152
    %v5154 = vsel %vm40, %v5100, 0.0
    %5155 = vadd.xlane.f32.xlu0 %v5154
    %v5156 = vpop.xlane.xlu0 %5155
    %v5157 = vsel %vm40, %v5102, 0.0
    %5158 = vadd.xlane.f32.xlu0 %v5157
    %v5159 = vpop.xlane.xlu0 %5158
    %v5160 = vsel %vm40, %v5104, 0.0
    %5161 = vadd.xlane.f32.xlu0 %v5160
    %v5162 = vpop.xlane.xlu0 %5161
    %v5163 = vsel %vm40, %v5106, 0.0
    %5164 = vadd.xlane.f32.xlu0 %v5163
    %v5165 = vpop.xlane.xlu0 %5164
    %v5166 = vsel %vm40, %v5108, 0.0
    %5167 = vadd.xlane.f32.xlu0 %v5166
    %v5168 = vpop.xlane.xlu0 %5167
    %v5169 = vsel %vm40, %v5110, 0.0
    %5170 = vadd.xlane.f32.xlu0 %v5169
    %v5171 = vpop.xlane.xlu0 %5170
    %v5172 = vsel %vm40, %v5112, 0.0
    %5173 = vadd.xlane.f32.xlu0 %v5172
    %v5174 = vpop.xlane.xlu0 %5173
    %v5175 = vsel %vm40, %v5114, 0.0
    %5176 = vadd.xlane.f32.xlu0 %v5175
    %v5177 = vpop.xlane.xlu0 %5176
    %v5178 = vsel %vm40, %v5116, 0.0
    %5179 = vadd.xlane.f32.xlu0 %v5178
    %v5180 = vpop.xlane.xlu0 %5179
    %v5181 = vmul.f32 %v5135, %v282
    %v5182 = vmul.f32 %v5138, %v282
    %v5183 = vmul.f32 %v5141, %v282
    %v5184 = vmul.f32 %v5144, %v282
    %v5185 = vmul.f32 %v5147, %v282
    %v5186 = vmul.f32 %v5150, %v282
    %v5187 = vmul.f32 %v5153, %v282
    %v5188 = vmul.f32 %v5156, %v282
    %v5189 = vmul.f32 %v5159, %v282
    %v5190 = vmul.f32 %v5162, %v282
    %v5191 = vmul.f32 %v5165, %v282
    %v5192 = vmul.f32 %v5168, %v282
    %v5193 = vmul.f32 %v5171, %v282
    %v5194 = vmul.f32 %v5174, %v282
    %v5195 = vmul.f32 %v5177, %v282
    %v5196 = vmul.f32 %v5180, %v282
    %v5197 = vsub.f32 %v4463, %v5181
    %v5198 = vsub.f32 %v4468, %v5182
    %v5199 = vsub.f32 %v4473, %v5183
    %v5200 = vsub.f32 %v4478, %v5184
    %v5201 = vsub.f32 %v4483, %v5185
    %v5202 = vsub.f32 %v4488, %v5186
    %v5203 = vsub.f32 %v4493, %v5187
    %v5204 = vsub.f32 %v4498, %v5188
    %v5205 = vsub.f32 %v4503, %v5189
    %v5206 = vsub.f32 %v4508, %v5190
    %v5207 = vsub.f32 %v4513, %v5191
    %v5208 = vsub.f32 %v4518, %v5192
    %v5209 = vsub.f32 %v4523, %v5193
    %v5210 = vsub.f32 %v4528, %v5194
    %v5211 = vsub.f32 %v4533, %v5195
    %v5212 = vsub.f32 %v4538, %v5196
    %v5213 = vmul.f32 %v5197, %v5197
    %v5214 = vmul.f32 %v5198, %v5198
    %v5215 = vmul.f32 %v5199, %v5199
    %v5216 = vmul.f32 %v5200, %v5200
    %v5217 = vmul.f32 %v5201, %v5201
    %v5218 = vmul.f32 %v5202, %v5202
    %v5219 = vmul.f32 %v5203, %v5203
    %v5220 = vmul.f32 %v5204, %v5204
    %v5221 = vmul.f32 %v5205, %v5205
    %v5222 = vmul.f32 %v5206, %v5206
    %v5223 = vmul.f32 %v5207, %v5207
    %v5224 = vmul.f32 %v5208, %v5208
    %v5225 = vmul.f32 %v5209, %v5209
    %v5226 = vmul.f32 %v5210, %v5210
    %v5227 = vmul.f32 %v5211, %v5211
    %v5228 = vmul.f32 %v5212, %v5212
    %5245 = vrot.lane.b32.xlu0 %v5213, 64
    %v5246 = vpop.permute.xlu0 %5245
    %5247 = vrot.lane.b32.xlu0 %v5214, 64
    %v5248 = vpop.permute.xlu0 %5247
    %5249 = vrot.lane.b32.xlu0 %v5215, 64
    %v5250 = vpop.permute.xlu0 %5249
    %5251 = vrot.lane.b32.xlu0 %v5216, 64
    %v5252 = vpop.permute.xlu0 %5251
    %5253 = vrot.lane.b32.xlu0 %v5217, 64
    %v5254 = vpop.permute.xlu0 %5253
    %5255 = vrot.lane.b32.xlu0 %v5218, 64
    %v5256 = vpop.permute.xlu0 %5255
    %5257 = vrot.lane.b32.xlu0 %v5219, 64
    %v5258 = vpop.permute.xlu0 %5257
    %5259 = vrot.lane.b32.xlu0 %v5220, 64
    %v5260 = vpop.permute.xlu0 %5259
    %5261 = vrot.lane.b32.xlu0 %v5221, 64
    %v5262 = vpop.permute.xlu0 %5261
    %5263 = vrot.lane.b32.xlu0 %v5222, 64
    %v5264 = vpop.permute.xlu0 %5263
    %5265 = vrot.lane.b32.xlu0 %v5223, 64
    %v5266 = vpop.permute.xlu0 %5265
    %5267 = vrot.lane.b32.xlu0 %v5224, 64
    %v5268 = vpop.permute.xlu0 %5267
    %5269 = vrot.lane.b32.xlu0 %v5225, 64
    %v5270 = vpop.permute.xlu0 %5269
    %5271 = vrot.lane.b32.xlu0 %v5226, 64
    %v5272 = vpop.permute.xlu0 %5271
    %5273 = vrot.lane.b32.xlu0 %v5227, 64
    %v5274 = vpop.permute.xlu0 %5273
    %5275 = vrot.lane.b32.xlu0 %v5228, 64
    %v5276 = vpop.permute.xlu0 %5275
    %v5293 = vsel %vm40, %v5246, 0.0
    %5294 = vadd.xlane.f32.xlu0 %v5293
    %v5295 = vpop.xlane.xlu0 %5294
    %v5296 = vsel %vm40, %v5248, 0.0
    %5297 = vadd.xlane.f32.xlu0 %v5296
    %v5298 = vpop.xlane.xlu0 %5297
    %v5299 = vsel %vm40, %v5250, 0.0
    %5300 = vadd.xlane.f32.xlu0 %v5299
    %v5301 = vpop.xlane.xlu0 %5300
    %v5302 = vsel %vm40, %v5252, 0.0
    %5303 = vadd.xlane.f32.xlu0 %v5302
    %v5304 = vpop.xlane.xlu0 %5303
    %v5305 = vsel %vm40, %v5254, 0.0
    %5306 = vadd.xlane.f32.xlu0 %v5305
    %v5307 = vpop.xlane.xlu0 %5306
    %v5308 = vsel %vm40, %v5256, 0.0
    %5309 = vadd.xlane.f32.xlu0 %v5308
    %v5310 = vpop.xlane.xlu0 %5309
    %v5311 = vsel %vm40, %v5258, 0.0
    %5312 = vadd.xlane.f32.xlu0 %v5311
    %v5313 = vpop.xlane.xlu0 %5312
    %v5314 = vsel %vm40, %v5260, 0.0
    %5315 = vadd.xlane.f32.xlu0 %v5314
    %v5316 = vpop.xlane.xlu0 %5315
    %v5317 = vsel %vm40, %v5262, 0.0
    %5318 = vadd.xlane.f32.xlu0 %v5317
    %v5319 = vpop.xlane.xlu0 %5318
    %v5320 = vsel %vm40, %v5264, 0.0
    %5321 = vadd.xlane.f32.xlu0 %v5320
    %v5322 = vpop.xlane.xlu0 %5321
    %v5323 = vsel %vm40, %v5266, 0.0
    %5324 = vadd.xlane.f32.xlu0 %v5323
    %v5325 = vpop.xlane.xlu0 %5324
    %v5326 = vsel %vm40, %v5268, 0.0
    %5327 = vadd.xlane.f32.xlu0 %v5326
    %v5328 = vpop.xlane.xlu0 %5327
    %v5329 = vsel %vm40, %v5270, 0.0
    %5330 = vadd.xlane.f32.xlu0 %v5329
    %v5331 = vpop.xlane.xlu0 %5330
    %v5332 = vsel %vm40, %v5272, 0.0
    %5333 = vadd.xlane.f32.xlu0 %v5332
    %v5334 = vpop.xlane.xlu0 %5333
    %v5335 = vsel %vm40, %v5274, 0.0
    %5336 = vadd.xlane.f32.xlu0 %v5335
    %v5337 = vpop.xlane.xlu0 %5336
    %v5338 = vsel %vm40, %v5276, 0.0
    %5339 = vadd.xlane.f32.xlu0 %v5338
    %v5340 = vpop.xlane.xlu0 %5339
    %v5341 = vmul.f32 %v5295, %v282
    %v5342 = vmul.f32 %v5298, %v282
    %v5343 = vmul.f32 %v5301, %v282
    %v5344 = vmul.f32 %v5304, %v282
    %v5345 = vmul.f32 %v5307, %v282
    %v5346 = vmul.f32 %v5310, %v282
    %v5347 = vmul.f32 %v5313, %v282
    %v5348 = vmul.f32 %v5316, %v282
    %v5349 = vmul.f32 %v5319, %v282
    %v5350 = vmul.f32 %v5322, %v282
    %v5351 = vmul.f32 %v5325, %v282
    %v5352 = vmul.f32 %v5328, %v282
    %v5353 = vmul.f32 %v5331, %v282
    %v5354 = vmul.f32 %v5334, %v282
    %v5355 = vmul.f32 %v5337, %v282
    %v5356 = vmul.f32 %v5340, %v282
    %v5357 = vadd.f32 %v5341, 1e-05
    %v5358 = vadd.f32 %v5342, 1e-05
    %v5359 = vadd.f32 %v5343, 1e-05
    %v5360 = vadd.f32 %v5344, 1e-05
    %v5361 = vadd.f32 %v5345, 1e-05
    %v5362 = vadd.f32 %v5346, 1e-05
    %v5363 = vadd.f32 %v5347, 1e-05
    %v5364 = vadd.f32 %v5348, 1e-05
    %v5365 = vadd.f32 %v5349, 1e-05
    %v5366 = vadd.f32 %v5350, 1e-05
    %v5367 = vadd.f32 %v5351, 1e-05
    %v5368 = vadd.f32 %v5352, 1e-05
    %v5369 = vadd.f32 %v5353, 1e-05
    %v5370 = vadd.f32 %v5354, 1e-05
    %v5371 = vadd.f32 %v5355, 1e-05
    %v5372 = vadd.f32 %v5356, 1e-05
    %v5373 = vrsqrt.pop %v5357
    %v5374 = vrsqrt.pop %v5358
    %v5375 = vrsqrt.pop %v5359
    %v5376 = vrsqrt.pop %v5360
    %v5377 = vrsqrt.pop %v5361
    %v5378 = vrsqrt.pop %v5362
    %v5379 = vrsqrt.pop %v5363
    %v5380 = vrsqrt.pop %v5364
    %v5381 = vrsqrt.pop %v5365
    %v5382 = vrsqrt.pop %v5366
    %v5383 = vrsqrt.pop %v5367
    %v5384 = vrsqrt.pop %v5368
    %v5385 = vrsqrt.pop %v5369
    %v5386 = vrsqrt.pop %v5370
    %v5387 = vrsqrt.pop %v5371
    %v5388 = vrsqrt.pop %v5372
    %v5389 = vmul.f32 %v5197, %v5373
    %v5390 = vmul.f32 %v5198, %v5374
    %v5391 = vmul.f32 %v5199, %v5375
    %v5392 = vmul.f32 %v5200, %v5376
    %v5393 = vmul.f32 %v5201, %v5377
    %v5394 = vmul.f32 %v5202, %v5378
    %v5395 = vmul.f32 %v5203, %v5379
    %v5396 = vmul.f32 %v5204, %v5380
    %v5397 = vmul.f32 %v5205, %v5381
    %v5398 = vmul.f32 %v5206, %v5382
    %v5399 = vmul.f32 %v5207, %v5383
    %v5400 = vmul.f32 %v5208, %v5384
    %v5401 = vmul.f32 %v5209, %v5385
    %v5402 = vmul.f32 %v5210, %v5386
    %v5403 = vmul.f32 %v5211, %v5387
    %v5404 = vmul.f32 %v5212, %v5388
    %5405 = vrot.lane.b32.xlu0 %v4463, 32
    %v5406 = vpop.permute.xlu0 %5405
    %5407 = vrot.lane.b32.xlu0 %v4468, 32
    %v5408 = vpop.permute.xlu0 %5407
    %5409 = vrot.lane.b32.xlu0 %v4473, 32
    %v5410 = vpop.permute.xlu0 %5409
    %5411 = vrot.lane.b32.xlu0 %v4478, 32
    %v5412 = vpop.permute.xlu0 %5411
    %5413 = vrot.lane.b32.xlu0 %v4483, 32
    %v5414 = vpop.permute.xlu0 %5413
    %5415 = vrot.lane.b32.xlu0 %v4488, 32
    %v5416 = vpop.permute.xlu0 %5415
    %5417 = vrot.lane.b32.xlu0 %v4493, 32
    %v5418 = vpop.permute.xlu0 %5417
    %5419 = vrot.lane.b32.xlu0 %v4498, 32
    %v5420 = vpop.permute.xlu0 %5419
    %5421 = vrot.lane.b32.xlu0 %v4503, 32
    %v5422 = vpop.permute.xlu0 %5421
    %5423 = vrot.lane.b32.xlu0 %v4508, 32
    %v5424 = vpop.permute.xlu0 %5423
    %5425 = vrot.lane.b32.xlu0 %v4513, 32
    %v5426 = vpop.permute.xlu0 %5425
    %5427 = vrot.lane.b32.xlu0 %v4518, 32
    %v5428 = vpop.permute.xlu0 %5427
    %5429 = vrot.lane.b32.xlu0 %v4523, 32
    %v5430 = vpop.permute.xlu0 %5429
    %5431 = vrot.lane.b32.xlu0 %v4528, 32
    %v5432 = vpop.permute.xlu0 %5431
    %5433 = vrot.lane.b32.xlu0 %v4533, 32
    %v5434 = vpop.permute.xlu0 %5433
    %5435 = vrot.lane.b32.xlu0 %v4538, 32
    %v5436 = vpop.permute.xlu0 %5435
    %v5453 = vsel %vm40, %v5406, 0.0
    %5454 = vadd.xlane.f32.xlu0 %v5453
    %v5455 = vpop.xlane.xlu0 %5454
    %v5456 = vsel %vm40, %v5408, 0.0
    %5457 = vadd.xlane.f32.xlu0 %v5456
    %v5458 = vpop.xlane.xlu0 %5457
    %v5459 = vsel %vm40, %v5410, 0.0
    %5460 = vadd.xlane.f32.xlu0 %v5459
    %v5461 = vpop.xlane.xlu0 %5460
    %v5462 = vsel %vm40, %v5412, 0.0
    %5463 = vadd.xlane.f32.xlu0 %v5462
    %v5464 = vpop.xlane.xlu0 %5463
    %v5465 = vsel %vm40, %v5414, 0.0
    %5466 = vadd.xlane.f32.xlu0 %v5465
    %v5467 = vpop.xlane.xlu0 %5466
    %v5468 = vsel %vm40, %v5416, 0.0
    %5469 = vadd.xlane.f32.xlu0 %v5468
    %v5470 = vpop.xlane.xlu0 %5469
    %v5471 = vsel %vm40, %v5418, 0.0
    %5472 = vadd.xlane.f32.xlu0 %v5471
    %v5473 = vpop.xlane.xlu0 %5472
    %v5474 = vsel %vm40, %v5420, 0.0
    %5475 = vadd.xlane.f32.xlu0 %v5474
    %v5476 = vpop.xlane.xlu0 %5475
    %v5477 = vsel %vm40, %v5422, 0.0
    %5478 = vadd.xlane.f32.xlu0 %v5477
    %v5479 = vpop.xlane.xlu0 %5478
    %v5480 = vsel %vm40, %v5424, 0.0
    %5481 = vadd.xlane.f32.xlu0 %v5480
    %v5482 = vpop.xlane.xlu0 %5481
    %v5483 = vsel %vm40, %v5426, 0.0
    %5484 = vadd.xlane.f32.xlu0 %v5483
    %v5485 = vpop.xlane.xlu0 %5484
    %v5486 = vsel %vm40, %v5428, 0.0
    %5487 = vadd.xlane.f32.xlu0 %v5486
    %v5488 = vpop.xlane.xlu0 %5487
    %v5489 = vsel %vm40, %v5430, 0.0
    %5490 = vadd.xlane.f32.xlu0 %v5489
    %v5491 = vpop.xlane.xlu0 %5490
    %v5492 = vsel %vm40, %v5432, 0.0
    %5493 = vadd.xlane.f32.xlu0 %v5492
    %v5494 = vpop.xlane.xlu0 %5493
    %v5495 = vsel %vm40, %v5434, 0.0
    %5496 = vadd.xlane.f32.xlu0 %v5495
    %v5497 = vpop.xlane.xlu0 %5496
    %v5498 = vsel %vm40, %v5436, 0.0
    %5499 = vadd.xlane.f32.xlu0 %v5498
    %v5500 = vpop.xlane.xlu0 %5499
    %v5501 = vmul.f32 %v5455, %v282
    %v5502 = vmul.f32 %v5458, %v282
    %v5503 = vmul.f32 %v5461, %v282
    %v5504 = vmul.f32 %v5464, %v282
    %v5505 = vmul.f32 %v5467, %v282
    %v5506 = vmul.f32 %v5470, %v282
    %v5507 = vmul.f32 %v5473, %v282
    %v5508 = vmul.f32 %v5476, %v282
    %v5509 = vmul.f32 %v5479, %v282
    %v5510 = vmul.f32 %v5482, %v282
    %v5511 = vmul.f32 %v5485, %v282
    %v5512 = vmul.f32 %v5488, %v282
    %v5513 = vmul.f32 %v5491, %v282
    %v5514 = vmul.f32 %v5494, %v282
    %v5515 = vmul.f32 %v5497, %v282
    %v5516 = vmul.f32 %v5500, %v282
    %v5517 = vsub.f32 %v4463, %v5501
    %v5518 = vsub.f32 %v4468, %v5502
    %v5519 = vsub.f32 %v4473, %v5503
    %v5520 = vsub.f32 %v4478, %v5504
    %v5521 = vsub.f32 %v4483, %v5505
    %v5522 = vsub.f32 %v4488, %v5506
    %v5523 = vsub.f32 %v4493, %v5507
    %v5524 = vsub.f32 %v4498, %v5508
    %v5525 = vsub.f32 %v4503, %v5509
    %v5526 = vsub.f32 %v4508, %v5510
    %v5527 = vsub.f32 %v4513, %v5511
    %v5528 = vsub.f32 %v4518, %v5512
    %v5529 = vsub.f32 %v4523, %v5513
    %v5530 = vsub.f32 %v4528, %v5514
    %v5531 = vsub.f32 %v4533, %v5515
    %v5532 = vsub.f32 %v4538, %v5516
    %v5533 = vmul.f32 %v5517, %v5517
    %v5534 = vmul.f32 %v5518, %v5518
    %v5535 = vmul.f32 %v5519, %v5519
    %v5536 = vmul.f32 %v5520, %v5520
    %v5537 = vmul.f32 %v5521, %v5521
    %v5538 = vmul.f32 %v5522, %v5522
    %v5539 = vmul.f32 %v5523, %v5523
    %v5540 = vmul.f32 %v5524, %v5524
    %v5541 = vmul.f32 %v5525, %v5525
    %v5542 = vmul.f32 %v5526, %v5526
    %v5543 = vmul.f32 %v5527, %v5527
    %v5544 = vmul.f32 %v5528, %v5528
    %v5545 = vmul.f32 %v5529, %v5529
    %v5546 = vmul.f32 %v5530, %v5530
    %v5547 = vmul.f32 %v5531, %v5531
    %v5548 = vmul.f32 %v5532, %v5532
    %5565 = vrot.lane.b32.xlu0 %v5533, 32
    %v5566 = vpop.permute.xlu0 %5565
    %5567 = vrot.lane.b32.xlu0 %v5534, 32
    %v5568 = vpop.permute.xlu0 %5567
    %5569 = vrot.lane.b32.xlu0 %v5535, 32
    %v5570 = vpop.permute.xlu0 %5569
    %5571 = vrot.lane.b32.xlu0 %v5536, 32
    %v5572 = vpop.permute.xlu0 %5571
    %5573 = vrot.lane.b32.xlu0 %v5537, 32
    %v5574 = vpop.permute.xlu0 %5573
    %5575 = vrot.lane.b32.xlu0 %v5538, 32
    %v5576 = vpop.permute.xlu0 %5575
    %5577 = vrot.lane.b32.xlu0 %v5539, 32
    %v5578 = vpop.permute.xlu0 %5577
    %5579 = vrot.lane.b32.xlu0 %v5540, 32
    %v5580 = vpop.permute.xlu0 %5579
    %5581 = vrot.lane.b32.xlu0 %v5541, 32
    %v5582 = vpop.permute.xlu0 %5581
    %5583 = vrot.lane.b32.xlu0 %v5542, 32
    %v5584 = vpop.permute.xlu0 %5583
    %5585 = vrot.lane.b32.xlu0 %v5543, 32
    %v5586 = vpop.permute.xlu0 %5585
    %5587 = vrot.lane.b32.xlu0 %v5544, 32
    %v5588 = vpop.permute.xlu0 %5587
    %5589 = vrot.lane.b32.xlu0 %v5545, 32
    %v5590 = vpop.permute.xlu0 %5589
    %5591 = vrot.lane.b32.xlu0 %v5546, 32
    %v5592 = vpop.permute.xlu0 %5591
    %5593 = vrot.lane.b32.xlu0 %v5547, 32
    %v5594 = vpop.permute.xlu0 %5593
    %5595 = vrot.lane.b32.xlu0 %v5548, 32
    %v5596 = vpop.permute.xlu0 %5595
    %v5613 = vsel %vm40, %v5566, 0.0
    %5614 = vadd.xlane.f32.xlu0 %v5613
    %v5615 = vpop.xlane.xlu0 %5614
    %v5616 = vsel %vm40, %v5568, 0.0
    %5617 = vadd.xlane.f32.xlu0 %v5616
    %v5618 = vpop.xlane.xlu0 %5617
    %v5619 = vsel %vm40, %v5570, 0.0
    %5620 = vadd.xlane.f32.xlu0 %v5619
    %v5621 = vpop.xlane.xlu0 %5620
    %v5622 = vsel %vm40, %v5572, 0.0
    %5623 = vadd.xlane.f32.xlu0 %v5622
    %v5624 = vpop.xlane.xlu0 %5623
    %v5625 = vsel %vm40, %v5574, 0.0
    %5626 = vadd.xlane.f32.xlu0 %v5625
    %v5627 = vpop.xlane.xlu0 %5626
    %v5628 = vsel %vm40, %v5576, 0.0
    %5629 = vadd.xlane.f32.xlu0 %v5628
    %v5630 = vpop.xlane.xlu0 %5629
    %v5631 = vsel %vm40, %v5578, 0.0
    %5632 = vadd.xlane.f32.xlu0 %v5631
    %v5633 = vpop.xlane.xlu0 %5632
    %v5634 = vsel %vm40, %v5580, 0.0
    %5635 = vadd.xlane.f32.xlu0 %v5634
    %v5636 = vpop.xlane.xlu0 %5635
    %v5637 = vsel %vm40, %v5582, 0.0
    %5638 = vadd.xlane.f32.xlu0 %v5637
    %v5639 = vpop.xlane.xlu0 %5638
    %v5640 = vsel %vm40, %v5584, 0.0
    %5641 = vadd.xlane.f32.xlu0 %v5640
    %v5642 = vpop.xlane.xlu0 %5641
    %v5643 = vsel %vm40, %v5586, 0.0
    %5644 = vadd.xlane.f32.xlu0 %v5643
    %v5645 = vpop.xlane.xlu0 %5644
    %v5646 = vsel %vm40, %v5588, 0.0
    %5647 = vadd.xlane.f32.xlu0 %v5646
    %v5648 = vpop.xlane.xlu0 %5647
    %v5649 = vsel %vm40, %v5590, 0.0
    %5650 = vadd.xlane.f32.xlu0 %v5649
    %v5651 = vpop.xlane.xlu0 %5650
    %v5652 = vsel %vm40, %v5592, 0.0
    %5653 = vadd.xlane.f32.xlu0 %v5652
    %v5654 = vpop.xlane.xlu0 %5653
    %v5655 = vsel %vm40, %v5594, 0.0
    %5656 = vadd.xlane.f32.xlu0 %v5655
    %v5657 = vpop.xlane.xlu0 %5656
    %v5658 = vsel %vm40, %v5596, 0.0
    %5659 = vadd.xlane.f32.xlu0 %v5658
    %v5660 = vpop.xlane.xlu0 %5659
    %v5661 = vmul.f32 %v5615, %v282
    %v5662 = vmul.f32 %v5618, %v282
    %v5663 = vmul.f32 %v5621, %v282
    %v5664 = vmul.f32 %v5624, %v282
    %v5665 = vmul.f32 %v5627, %v282
    %v5666 = vmul.f32 %v5630, %v282
    %v5667 = vmul.f32 %v5633, %v282
    %v5668 = vmul.f32 %v5636, %v282
    %v5669 = vmul.f32 %v5639, %v282
    %v5670 = vmul.f32 %v5642, %v282
    %v5671 = vmul.f32 %v5645, %v282
    %v5672 = vmul.f32 %v5648, %v282
    %v5673 = vmul.f32 %v5651, %v282
    %v5674 = vmul.f32 %v5654, %v282
    %v5675 = vmul.f32 %v5657, %v282
    %v5676 = vmul.f32 %v5660, %v282
    %v5677 = vadd.f32 %v5661, 1e-05
    %v5678 = vadd.f32 %v5662, 1e-05
    %v5679 = vadd.f32 %v5663, 1e-05
    %v5680 = vadd.f32 %v5664, 1e-05
    %v5681 = vadd.f32 %v5665, 1e-05
    %v5682 = vadd.f32 %v5666, 1e-05
    %v5683 = vadd.f32 %v5667, 1e-05
    %v5684 = vadd.f32 %v5668, 1e-05
    %v5685 = vadd.f32 %v5669, 1e-05
    %v5686 = vadd.f32 %v5670, 1e-05
    %v5687 = vadd.f32 %v5671, 1e-05
    %v5688 = vadd.f32 %v5672, 1e-05
    %v5689 = vadd.f32 %v5673, 1e-05
    %v5690 = vadd.f32 %v5674, 1e-05
    %v5691 = vadd.f32 %v5675, 1e-05
    %v5692 = vadd.f32 %v5676, 1e-05
    %v5693 = vrsqrt.pop %v5677
    %v5694 = vrsqrt.pop %v5678
    %v5695 = vrsqrt.pop %v5679
    %v5696 = vrsqrt.pop %v5680
    %v5697 = vrsqrt.pop %v5681
    %v5698 = vrsqrt.pop %v5682
    %v5699 = vrsqrt.pop %v5683
    %v5700 = vrsqrt.pop %v5684
    %v5701 = vrsqrt.pop %v5685
    %v5702 = vrsqrt.pop %v5686
    %v5703 = vrsqrt.pop %v5687
    %v5704 = vrsqrt.pop %v5688
    %v5705 = vrsqrt.pop %v5689
    %v5706 = vrsqrt.pop %v5690
    %v5707 = vrsqrt.pop %v5691
    %v5708 = vrsqrt.pop %v5692
    %v5709 = vmul.f32 %v5517, %v5693
    %v5710 = vmul.f32 %v5518, %v5694
    %v5711 = vmul.f32 %v5519, %v5695
    %v5712 = vmul.f32 %v5520, %v5696
    %v5713 = vmul.f32 %v5521, %v5697
    %v5714 = vmul.f32 %v5522, %v5698
    %v5715 = vmul.f32 %v5523, %v5699
    %v5716 = vmul.f32 %v5524, %v5700
    %v5717 = vmul.f32 %v5525, %v5701
    %v5718 = vmul.f32 %v5526, %v5702
    %v5719 = vmul.f32 %v5527, %v5703
    %v5720 = vmul.f32 %v5528, %v5704
    %v5721 = vmul.f32 %v5529, %v5705
    %v5722 = vmul.f32 %v5530, %v5706
    %v5723 = vmul.f32 %v5531, %v5707
    %v5724 = vmul.f32 %v5532, %v5708
    %v5725 = vsel %vm40, %v4733, %v5069
    %v5726 = vsel %vm40, %v4734, %v5070
    %v5727 = vsel %vm40, %v4735, %v5071
    %v5728 = vsel %vm40, %v4736, %v5072
    %v5729 = vsel %vm40, %v4737, %v5073
    %v5730 = vsel %vm40, %v4738, %v5074
    %v5731 = vsel %vm40, %v4739, %v5075
    %v5732 = vsel %vm40, %v4740, %v5076
    %v5733 = vsel %vm40, %v4741, %v5077
    %v5734 = vsel %vm40, %v4742, %v5078
    %v5735 = vsel %vm40, %v4743, %v5079
    %v5736 = vsel %vm40, %v4744, %v5080
    %v5737 = vsel %vm40, %v4745, %v5081
    %v5738 = vsel %vm40, %v4746, %v5082
    %v5739 = vsel %vm40, %v4747, %v5083
    %v5740 = vsel %vm40, %v4748, %v5084
    %v5741 = vsel %vm1435, %v5725, %v5389
    %v5742 = vsel %vm1435, %v5726, %v5390
    %v5743 = vsel %vm1435, %v5727, %v5391
    %v5744 = vsel %vm1435, %v5728, %v5392
    %v5745 = vsel %vm1435, %v5729, %v5393
    %v5746 = vsel %vm1435, %v5730, %v5394
    %v5747 = vsel %vm1435, %v5731, %v5395
    %v5748 = vsel %vm1435, %v5732, %v5396
    %v5749 = vsel %vm1435, %v5733, %v5397
    %v5750 = vsel %vm1435, %v5734, %v5398
    %v5751 = vsel %vm1435, %v5735, %v5399
    %v5752 = vsel %vm1435, %v5736, %v5400
    %v5753 = vsel %vm1435, %v5737, %v5401
    %v5754 = vsel %vm1435, %v5738, %v5402
    %v5755 = vsel %vm1435, %v5739, %v5403
    %v5756 = vsel %vm1435, %v5740, %v5404
    %v5757 = vsel %vm1452, %v5741, %v5709
    %v5758 = vsel %vm1452, %v5742, %v5710
    %v5759 = vsel %vm1452, %v5743, %v5711
    %v5760 = vsel %vm1452, %v5744, %v5712
    %v5761 = vsel %vm1452, %v5745, %v5713
    %v5762 = vsel %vm1452, %v5746, %v5714
    %v5763 = vsel %vm1452, %v5747, %v5715
    %v5764 = vsel %vm1452, %v5748, %v5716
    %v5765 = vsel %vm1452, %v5749, %v5717
    %v5766 = vsel %vm1452, %v5750, %v5718
    %v5767 = vsel %vm1452, %v5751, %v5719
    %v5768 = vsel %vm1452, %v5752, %v5720
    %v5769 = vsel %vm1452, %v5753, %v5721
    %v5770 = vsel %vm1452, %v5754, %v5722
    %v5771 = vsel %vm1452, %v5755, %v5723
    %v5772 = vsel %vm1452, %v5756, %v5724
    %v5773 = vmul.f32 %v5757, %v1473
    %v5774 = vmul.f32 %v5758, %v1473
    %v5775 = vmul.f32 %v5759, %v1473
    %v5776 = vmul.f32 %v5760, %v1473
    %v5777 = vmul.f32 %v5761, %v1473
    %v5778 = vmul.f32 %v5762, %v1473
    %v5779 = vmul.f32 %v5763, %v1473
    %v5780 = vmul.f32 %v5764, %v1473
    %v5781 = vmul.f32 %v5765, %v1473
    %v5782 = vmul.f32 %v5766, %v1473
    %v5783 = vmul.f32 %v5767, %v1473
    %v5784 = vmul.f32 %v5768, %v1473
    %v5785 = vmul.f32 %v5769, %v1473
    %v5786 = vmul.f32 %v5770, %v1473
    %v5787 = vmul.f32 %v5771, %v1473
    %v5788 = vmul.f32 %v5772, %v1473
    %v5789 = vadd.f32 %v5773, %v1495
    %v5790 = vadd.f32 %v5774, %v1495
    %v5791 = vadd.f32 %v5775, %v1495
    %v5792 = vadd.f32 %v5776, %v1495
    %v5793 = vadd.f32 %v5777, %v1495
    %v5794 = vadd.f32 %v5778, %v1495
    %v5795 = vadd.f32 %v5779, %v1495
    %v5796 = vadd.f32 %v5780, %v1495
    %v5797 = vadd.f32 %v5781, %v1495
    %v5798 = vadd.f32 %v5782, %v1495
    %v5799 = vadd.f32 %v5783, %v1495
    %v5800 = vadd.f32 %v5784, %v1495
    %v5801 = vadd.f32 %v5785, %v1495
    %v5802 = vadd.f32 %v5786, %v1495
    %v5803 = vadd.f32 %v5787, %v1495
    %v5804 = vadd.f32 %v5788, %v1495
    %s5805 = scalar_lea.vmem [#allocation2], 24
    %5806 = vst [vmem:[%s5805] sm:$0xff] %v5789
    %5807 = vst [vmem:[%s5805 + $0x20] sm:$0xff] %v5790
    %5808 = vst [vmem:[%s5805 + $0x40] sm:$0xff] %v5791
    %5809 = vst [vmem:[%s5805 + $0x60] sm:$0xff] %v5792
    %5810 = vst [vmem:[%s5805 + $0x80] sm:$0xff] %v5793
    %5811 = vst [vmem:[%s5805 + $0xa0] sm:$0xff] %v5794
    %5812 = vst [vmem:[%s5805 + $0xc0] sm:$0xff] %v5795
    %5813 = vst [vmem:[%s5805 + $0xe0] sm:$0xff] %v5796
    %5814 = vst [vmem:[%s5805 + $0x100] sm:$0xff] %v5797
    %5815 = vst [vmem:[%s5805 + $0x120] sm:$0xff] %v5798
    %5816 = vst [vmem:[%s5805 + $0x140] sm:$0xff] %v5799
    %5817 = vst [vmem:[%s5805 + $0x160] sm:$0xff] %v5800
    %5818 = vst [vmem:[%s5805 + $0x180] sm:$0xff] %v5801
    %5819 = vst [vmem:[%s5805 + $0x1a0] sm:$0xff] %v5802
    %5820 = vst [vmem:[%s5805 + $0x1c0] sm:$0xff] %v5803
    %5821 = vst [vmem:[%s5805 + $0x1e0] sm:$0xff] %v5804
    // Predicated region
    $region18: #{tpu_custom_call.1} parent=1 // pred_check
      _
    $region19: #{tpu_custom_call.1} parent=1 // pred_check_branch
      %5823 = sbr.rel (0) target = $region21
    $region20: #{tpu_custom_call.1} parent=1 // pred_region
      %s5825 = ssub.s32 8192, 8192
      %5826 = vsyncadd [#allocation3], %s5825
      %s5827 = sshll.u32 [#allocation2], 4
      %s5828 = int_to_ptr.vmem [resolvable:$true] %s5827
      %5833 = dma.vmem_to_hbm [thread:$0]  %s5828, 8192, %s4, [#allocation3], 128, 128, 8
    $region21: #{tpu_custom_call.1} parent=1 // pred_fallthru
      _
    // Predicated region
    $region22: #{tpu_custom_call.1} parent=1 // pred_check
      _
    $region23: #{tpu_custom_call.1} parent=1 // pred_check_branch
      %5835 = sbr.rel (0) target = $region25
    $region24: #{tpu_custom_call.1} parent=1 // pred_region
      %5836 = dma.done [#allocation3], 8192
    $region25: #{tpu_custom_call.1} parent=1 // pred_fallthru
      _
    %5837 = vsyncpa [#allocation3], 1

</llo_original>
